<compile_context>
chip_gen: v6e
topology: v6e:2x2x1
jax: 0.10.0
libtpu: 0.0.40
codegen_flags: <defaults>
</compile_context>

<pallas_src>
from functools import partial

import jax
import jax.numpy as jnp
from jax.experimental import pallas as pl
from jax.experimental.pallas import tpu as pltpu


def _round_up(x, m):
    return ((x + m - 1) // m) * m


# ----------------------------------------------------------------------------- kernels
def _linear_kernel(x_ref, w_ref, b_ref, o_ref, *, relu):
    # x_ref: (tm, Din) f32, w_ref: (Din, Dout) bf16, b_ref: (1, Dout) f32
    y = jnp.dot(x_ref[...].astype(jnp.bfloat16), w_ref[...],
                preferred_element_type=jnp.float32) + b_ref[...]
    if relu:
        y = jnp.maximum(y, 0.0)
    o_ref[...] = y.astype(o_ref.dtype)


def _ff_residual_kernel(x_ref, xf_ref, w0_ref, b0_ref, w1_ref, b1_ref, ox_ref, ob_ref):
    # Fused backcast FeedForward (Linear -> ReLU -> Linear) + residual add.
    # x_ref/xf_ref: (tm, W) f32; w0: (W, H) bf16; w1: (H, W) bf16; biases f32.
    xf = xf_ref[...].astype(jnp.bfloat16)
    h = jnp.dot(xf, w0_ref[...], preferred_element_type=jnp.float32) + b0_ref[...]
    h = jnp.maximum(h, 0.0)
    b = jnp.dot(h.astype(jnp.bfloat16), w1_ref[...],
                preferred_element_type=jnp.float32) + b1_ref[...]
    ob_ref[...] = b.astype(ob_ref.dtype)                 # backcast output
    ox_ref[...] = (x_ref[...] + b).astype(ox_ref.dtype)  # residual update


def _spectral_kernel(x_ref, w_ref, o_ref):
    # x_ref: (modes, tr, 2I) bf16 = [xr | xi];  w_ref: (modes, 2I, 2O) bf16 block weight.
    # One MXU matmul per mode yields [out_re | out_im] directly (no VPU add/sub).
    o_ref[...] = jnp.einsum("mri,mio->mro", x_ref[...], w_ref[...],
                            preferred_element_type=jnp.float32).astype(o_ref.dtype)


# ----------------------------------------------------------------------------- wrappers
def linear_pallas(x, w, b, relu=False, tm=256):
    """y = x @ w + b (optional ReLU). x: (..., Din), w: (Din, Dout), b: (Dout,)."""
    orig_shape = x.shape
    din, dout = w.shape
    x2d = x.reshape(-1, din)
    rows = x2d.shape[0]
    tm = min(tm, _round_up(rows, 8))
    rows_p = _round_up(rows, tm)
    if rows_p != rows:
        x2d = jnp.pad(x2d, ((0, rows_p - rows), (0, 0)))

    out = pl.pallas_call(
        partial(_linear_kernel, relu=relu),
        out_shape=jax.ShapeDtypeStruct((rows_p, dout), jnp.float32),
        grid=(rows_p // tm,),
        in_specs=[
            pl.BlockSpec((tm, din), lambda i: (i, 0)),
            pl.BlockSpec((din, dout), lambda i: (0, 0)),
            pl.BlockSpec((1, dout), lambda i: (0, 0)),
        ],
        out_specs=pl.BlockSpec((tm, dout), lambda i: (i, 0)),
        compiler_params=pltpu.CompilerParams(dimension_semantics=("parallel",)),
        cost_estimate=pl.CostEstimate(
            flops=2 * rows_p * din * dout,
            transcendentals=0,
            bytes_accessed=4 * (rows_p * din + rows_p * dout) + 2 * din * dout),
    )(x2d, w.astype(jnp.bfloat16), b.reshape(1, dout))
    if rows_p != rows:
        out = out[:rows]
    return out.reshape(orig_shape[:-1] + (dout,))


def ff_residual_pallas(x, xf, w0, b0, w1, b1, tm=256):
    """Fused backcast FF + residual: returns (x + b, b) where b = ff1(relu(ff0(xf)))."""
    shape = x.shape
    width = shape[-1]
    hidden = w0.shape[1]
    x2d = x.reshape(-1, width)
    xf2d = xf.reshape(-1, width)
    rows = x2d.shape[0]
    tm = min(tm, _round_up(rows, 8))
    rows_p = _round_up(rows, tm)
    if rows_p != rows:
        x2d = jnp.pad(x2d, ((0, rows_p - rows), (0, 0)))
        xf2d = jnp.pad(xf2d, ((0, rows_p - rows), (0, 0)))

    new_x, back = pl.pallas_call(
        _ff_residual_kernel,
        out_shape=(jax.ShapeDtypeStruct((rows_p, width), jnp.float32),
                   jax.ShapeDtypeStruct((rows_p, width), jnp.float32)),
        grid=(rows_p // tm,),
        in_specs=[
            pl.BlockSpec((tm, width), lambda i: (i, 0)),
            pl.BlockSpec((tm, width), lambda i: (i, 0)),
            pl.BlockSpec((width, hidden), lambda i: (0, 0)),
            pl.BlockSpec((1, hidden), lambda i: (0, 0)),
            pl.BlockSpec((hidden, width), lambda i: (0, 0)),
            pl.BlockSpec((1, width), lambda i: (0, 0)),
        ],
        out_specs=(pl.BlockSpec((tm, width), lambda i: (i, 0)),
                   pl.BlockSpec((tm, width), lambda i: (i, 0))),
        compiler_params=pltpu.CompilerParams(dimension_semantics=("parallel",)),
        cost_estimate=pl.CostEstimate(
            flops=4 * rows_p * width * hidden,
            transcendentals=0,
            bytes_accessed=4 * (4 * rows_p * width) + 2 * (2 * width * hidden)),
    )(x2d, xf2d, w0.astype(jnp.bfloat16), b0.reshape(1, hidden),
      w1.astype(jnp.bfloat16), b1.reshape(1, width))
    if rows_p != rows:
        new_x = new_x[:rows]
        back = back[:rows]
    return new_x.reshape(shape), back.reshape(shape)


def spectral_mul_pallas(x_stacked, w_blk, tr=512):
    """Batched per-mode complex matmul on stacked real operands.

    x_stacked: (modes, R, 2I) bf16 = [re | im] of the truncated spectrum.
    w_blk:     (modes, 2I, 2O) bf16 block weight [[wr, wi], [-wi, wr]].
    returns:   (modes, R, 2O) f32 = [out_re | out_im].
    """
    modes, R, I2 = x_stacked.shape
    O2 = w_blk.shape[-1]
    tr = min(tr, _round_up(R, 8))
    Rp = _round_up(R, tr)
    if Rp != R:
        x_stacked = jnp.pad(x_stacked, ((0, 0), (0, Rp - R), (0, 0)))

    out = pl.pallas_call(
        _spectral_kernel,
        out_shape=jax.ShapeDtypeStruct((modes, Rp, O2), jnp.float32),
        grid=(Rp // tr,),
        in_specs=[
            pl.BlockSpec((modes, tr, I2), lambda r: (0, r, 0)),
            pl.BlockSpec((modes, I2, O2), lambda r: (0, 0, 0)),
        ],
        out_specs=pl.BlockSpec((modes, tr, O2), lambda r: (0, r, 0)),
        compiler_params=pltpu.CompilerParams(dimension_semantics=("parallel",)),
        cost_estimate=pl.CostEstimate(
            flops=2 * modes * Rp * I2 * O2,
            transcendentals=0,
            bytes_accessed=2 * (modes * Rp * I2 + modes * I2 * O2) + 4 * modes * Rp * O2),
    )(x_stacked, w_blk)
    if Rp != R:
        out = out[:, :R]
    return out


# ----------------------------------------------------------------------------- model
def _block_weight(w):
    """(I, O, modes, 2) torch-format complex weight -> (modes, 2I, 2O) real block weight."""
    wr = jnp.transpose(w[..., 0], (2, 0, 1))                 # (modes, I, O)
    wi = jnp.transpose(w[..., 1], (2, 0, 1))
    top = jnp.concatenate([wr, wi], axis=-1)                 # (modes, I, 2O)
    bot = jnp.concatenate([-wi, wr], axis=-1)                # (modes, I, 2O)
    return jnp.concatenate([top, bot], axis=1).astype(jnp.bfloat16)  # (modes, 2I, 2O)


def forward_fourier(x, w_y, w_x, modes):
    """SpectralConv2d.forward_fourier, mode='full'.  x: (B, M, N, I) -> (B, M, N, O)."""
    xt = jnp.transpose(x, (0, 3, 1, 2))                      # (B, I, M, N)
    B, I, M, N = xt.shape
    O = w_y.shape[1]
    wy_blk = _block_weight(w_y)
    wx_blk = _block_weight(w_x)

    # ---- dim=-1 (y) transform -------------------------------------------------
    xm = jnp.fft.rfft(xt, axis=-1, norm="ortho")[..., :modes]        # (B,I,M,modes) c64
    xr = jnp.real(xm)                                                 # split BEFORE transpose
    xi = jnp.imag(xm)
    xr_t = jnp.transpose(xr, (3, 0, 2, 1)).reshape(modes, B * M, I)
    xi_t = jnp.transpose(xi, (3, 0, 2, 1)).reshape(modes, B * M, I)
    xs = jnp.concatenate([xr_t, xi_t], axis=-1).astype(jnp.bfloat16)  # (modes, B*M, 2I)
    o = spectral_mul_pallas(xs, wy_blk).reshape(modes, B, M, 2 * O)
    o_c = jax.lax.complex(o[..., :O], o[..., O:])                     # (modes,B,M,O)
    o_c = jnp.transpose(o_c, (1, 3, 2, 0))                            # (B, O, M, modes)
    out_ft = jnp.pad(o_c, ((0, 0), (0, 0), (0, 0), (0, N // 2 + 1 - modes)))
    xy = jnp.fft.irfft(out_ft, n=N, axis=-1, norm="ortho")            # (B, O, M, N)

    # ---- dim=-2 (x) transform -------------------------------------------------
    xm = jnp.fft.rfft(xt, axis=-2, norm="ortho")[:, :, :modes, :]     # (B,I,modes,N)
    xr = jnp.real(xm)
    xi = jnp.imag(xm)
    xr_t = jnp.transpose(xr, (2, 0, 3, 1)).reshape(modes, B * N, I)
    xi_t = jnp.transpose(xi, (2, 0, 3, 1)).reshape(modes, B * N, I)
    xs = jnp.concatenate([xr_t, xi_t], axis=-1).astype(jnp.bfloat16)  # (modes, B*N, 2I)
    o = spectral_mul_pallas(xs, wx_blk).reshape(modes, B, N, 2 * O)
    o_c = jax.lax.complex(o[..., :O], o[..., O:])                     # (modes,B,N,O)
    o_c = jnp.transpose(o_c, (1, 3, 0, 2))                            # (B, O, modes, N)
    out_ft = jnp.pad(o_c, ((0, 0), (0, 0), (0, M // 2 + 1 - modes), (0, 0)))
    xx = jnp.fft.irfft(out_ft, n=M, axis=-2, norm="ortho")            # (B, O, M, N)

    return jnp.transpose(xx + xy, (0, 2, 3, 1))                       # (B, M, N, O)


def fno_forward(x, params, modes, n_layers):
    """FNOFactorized2DBlock.forward (use_fork=False, mode='full', dropout=0)."""
    x = linear_pallas(x, params["in_w"], params["in_b"])              # in_proj
    b = x
    for i in range(n_layers):
        lp = params["layers"][i]
        xf = forward_fourier(x, lp["fw_y"], lp["fw_x"], modes)        # spectral conv
        # fused backcast FF (Linear->ReLU->Linear) + residual; also returns b.
        x, b = ff_residual_pallas(x, xf, lp["ff0_w"], lp["ff0_b"],
                                  lp["ff1_w"], lp["ff1_b"])
    # Output head out[1](out[0](b)): no nonlinearity between, so compose exactly
    # into a single linear (removes a kernel launch + the (rows,128) HBM round-trip).
    w_head = params["out0_w"] @ params["out1_w"]                      # (width, 1)
    b_head = params["out0_b"] @ params["out1_w"] + params["out1_b"]   # (1,)
    f = linear_pallas(b, w_head, b_head)
    return {"forecast": f, "forecast_list": []}


# ----------------------------------------------------------------------------- params
def _dense_init(key, din, dout):
    k1, k2 = jax.random.split(key)
    bound = 1.0 / (din ** 0.5)
    w = jax.random.uniform(k1, (din, dout), minval=-bound, maxval=bound, dtype=jnp.float32)
    b = jax.random.uniform(k2, (dout,), minval=-bound, maxval=bound, dtype=jnp.float32)
    return w, b


def _fourier_init(key, width, modes, gain=1.0):
    # torch xavier_normal_ on tensor (in, out, modes, 2)
    fan_in = width * modes * 2
    fan_out = width * modes * 2
    std = gain * (2.0 / (fan_in + fan_out)) ** 0.5
    return (std * jax.random.normal(key, (width, width, modes, 2))).astype(jnp.float32)


def make_params(key, input_dim, width, modes, n_layers, factor=2):
    keys = jax.random.split(key, 3 + 5 * n_layers)
    params = {}
    params["in_w"], params["in_b"] = _dense_init(keys[0], input_dim, width)
    params["out0_w"], params["out0_b"] = _dense_init(keys[1], width, 128)
    params["out1_w"], params["out1_b"] = _dense_init(keys[2], 128, 1)
    layers = []
    for i in range(n_layers):
        k = keys[3 + 5 * i: 3 + 5 * (i + 1)]
        lp = {}
        lp["fw_y"] = _fourier_init(k[0], width, modes)
        lp["fw_x"] = _fourier_init(k[1], width, modes)
        lp["ff0_w"], lp["ff0_b"] = _dense_init(k[2], width, width * factor)
        lp["ff1_w"], lp["ff1_b"] = _dense_init(k[3], width * factor, width)
        layers.append(lp)
    params["layers"] = layers
    return params


# ----------------------------------------------------------------------------- main
if __name__ == "__main__":
    B, M, N = 2, 16, 16
    input_dim, width, modes, n_layers = 12, 32, 8, 4

    key = jax.random.PRNGKey(0)
    kp, kx = jax.random.split(key)
    params = make_params(kp, input_dim, width, modes, n_layers)
    x = jax.random.normal(kx, (B, M, N, input_dim), dtype=jnp.float32)

    fwd = jax.jit(partial(fno_forward, modes=modes, n_layers=n_layers))
    out = fwd(x, params)
    jax.block_until_ready(out["forecast"])

    assert out["forecast"].shape == (B, M, N, 1)
    assert bool(jnp.all(jnp.isfinite(out["forecast"])))
    print("KERNEL_OK")
</pallas_src>

<mosaic_0001>
module attributes {stable_mosaic.version = 11 : i64} {
  func.func @_linear_kernel(%arg0: i32, %arg1: memref<256x12xf32, #tpu.memory_space<vmem>>, %arg2: memref<12x32xbf16, #tpu.memory_space<vmem>>, %arg3: memref<1x32xf32, #tpu.memory_space<vmem>>, %arg4: memref<256x32xf32, #tpu.memory_space<vmem>>) attributes {dimension_semantics = [#tpu.dimension_semantics<parallel>], iteration_bounds = array<i64: 2>, scalar_prefetch = 0 : i64, scratch_operands = 0 : i64, tpu.core_type = #tpu.core_type<tc>, window_params = [{transform_indices = @transform_0, window_bounds = array<i64: 256, 12>}, {pipeline_mode = #tpu.pipeline_mode<synchronous>, transform_indices = @transform_1, window_bounds = array<i64: 12, 32>}, {pipeline_mode = #tpu.pipeline_mode<synchronous>, transform_indices = @transform_2, window_bounds = array<i64: 1, 32>}, {transform_indices = @transform_3, window_bounds = array<i64: 256, 32>}]} {
    %c0 = arith.constant 0 : index
    %c0_0 = arith.constant 0 : index
    %0 = vector.load %arg1[%c0, %c0_0] : memref<256x12xf32, #tpu.memory_space<vmem>>, vector<256x12xf32>
    %1 = arith.truncf %0 : vector<256x12xf32> to vector<256x12xbf16>
    %c0_1 = arith.constant 0 : index
    %c0_2 = arith.constant 0 : index
    %2 = vector.load %arg2[%c0_1, %c0_2] : memref<12x32xbf16, #tpu.memory_space<vmem>>, vector<12x32xbf16>
    %cst = arith.constant dense<0.000000e+00> : vector<256x32xf32>
    %3 = tpu.matmul %1, %2, %cst {dimension_numbers = #tpu.dot_dimension_numbers<[1], [0], [0], [1], [0, 0, 1, 1], [], []>} : vector<256x12xbf16>, vector<12x32xbf16>, vector<256x32xf32> -> vector<256x32xf32>
    %c0_3 = arith.constant 0 : index
    %c0_4 = arith.constant 0 : index
    %4 = vector.load %arg3[%c0_3, %c0_4] : memref<1x32xf32, #tpu.memory_space<vmem>>, vector<1x32xf32>
    %5 = vector.broadcast %4 : vector<1x32xf32> to vector<256x32xf32>
    %6 = arith.addf %3, %5 : vector<256x32xf32>
    %c0_5 = arith.constant 0 : index
    %c0_6 = arith.constant 0 : index
    %7 = vector.load %arg4[%c0_5, %c0_6] : memref<256x32xf32, #tpu.memory_space<vmem>>, vector<256x32xf32>
    tpu.vector_store %arg4[%c0_5, %c0_6], %6 {strides = array<i32>} : memref<256x32xf32, #tpu.memory_space<vmem>>, vector<256x32xf32>,
    return
  }
  func.func @transform_0(%arg0: i32) -> (i32, i32) {
    %c0_i32 = arith.constant 0 : i32
    %c0_i32_0 = arith.constant 0 : i32
    return %arg0, %c0_i32 : i32, i32
  }
  func.func @transform_1(%arg0: i32) -> (i32, i32) {
    %c0_i32 = arith.constant 0 : i32
    %c0_i32_0 = arith.constant 0 : i32
    %c0_i32_1 = arith.constant 0 : i32
    return %c0_i32, %c0_i32_0 : i32, i32
  }
  func.func @transform_2(%arg0: i32) -> (i32, i32) {
    %c0_i32 = arith.constant 0 : i32
    %c0_i32_0 = arith.constant 0 : i32
    %c0_i32_1 = arith.constant 0 : i32
    return %c0_i32, %c0_i32_0 : i32, i32
  }
  func.func @transform_3(%arg0: i32) -> (i32, i32) {
    %c0_i32 = arith.constant 0 : i32
    %c0_i32_0 = arith.constant 0 : i32
    return %arg0, %c0_i32 : i32, i32
  }
}

module attributes {stable_mosaic.version = 11 : i64} {
  func.func @_spectral_kernel(%arg0: i32, %arg1: memref<8x32x64xbf16, #tpu.memory_space<vmem>>, %arg2: memref<8x64x64xbf16, #tpu.memory_space<vmem>>, %arg3: memref<8x32x64xf32, #tpu.memory_space<vmem>>) attributes {dimension_semantics = [#tpu.dimension_semantics<parallel>], iteration_bounds = array<i64: 1>, scalar_prefetch = 0 : i64, scratch_operands = 0 : i64, tpu.core_type = #tpu.core_type<tc>, window_params = [{transform_indices = @transform_0, window_bounds = array<i64: 8, 32, 64>}, {pipeline_mode = #tpu.pipeline_mode<synchronous>, transform_indices = @transform_1, window_bounds = array<i64: 8, 64, 64>}, {transform_indices = @transform_2, window_bounds = array<i64: 8, 32, 64>}]} {
    %c0 = arith.constant 0 : index
    %c0_0 = arith.constant 0 : index
    %c0_1 = arith.constant 0 : index
    %0 = vector.load %arg1[%c0, %c0_0, %c0_1] : memref<8x32x64xbf16, #tpu.memory_space<vmem>>, vector<8x32x64xbf16>
    %c0_2 = arith.constant 0 : index
    %c0_3 = arith.constant 0 : index
    %c0_4 = arith.constant 0 : index
    %1 = vector.load %arg2[%c0_2, %c0_3, %c0_4] : memref<8x64x64xbf16, #tpu.memory_space<vmem>>, vector<8x64x64xbf16>
    "tpu.trace_start"() <{level = 10 : i32, message = "mri,mio->mro"}> : () -> ()
    %cst = arith.constant dense<0.000000e+00> : vector<8x32x64xf32>
    %2 = tpu.matmul %0, %1, %cst {dimension_numbers = #tpu.dot_dimension_numbers<[2], [1], [1], [2], [0, 0, 0, 1, 1, 2], [0], [0]>} : vector<8x32x64xbf16>, vector<8x64x64xbf16>, vector<8x32x64xf32> -> vector<8x32x64xf32>
    "tpu.trace_stop"() : () -> ()
    %c0_5 = arith.constant 0 : index
    %c0_6 = arith.constant 0 : index
    %c0_7 = arith.constant 0 : index
    %3 = vector.load %arg3[%c0_5, %c0_6, %c0_7] : memref<8x32x64xf32, #tpu.memory_space<vmem>>, vector<8x32x64xf32>
    tpu.vector_store %arg3[%c0_5, %c0_6, %c0_7], %2 {strides = array<i32>} : memref<8x32x64xf32, #tpu.memory_space<vmem>>, vector<8x32x64xf32>,
    return
  }
  func.func @transform_0(%arg0: i32) -> (i32, i32, i32) {
    %c0_i32 = arith.constant 0 : i32
    %c0_i32_0 = arith.constant 0 : i32
    %c0_i32_1 = arith.constant 0 : i32
    return %c0_i32, %arg0, %c0_i32_0 : i32, i32, i32
  }
  func.func @transform_1(%arg0: i32) -> (i32, i32, i32) {
    %c0_i32 = arith.constant 0 : i32
    %c0_i32_0 = arith.constant 0 : i32
    %c0_i32_1 = arith.constant 0 : i32
    %c0_i32_2 = arith.constant 0 : i32
    return %c0_i32, %c0_i32_0, %c0_i32_1 : i32, i32, i32
  }
  func.func @transform_2(%arg0: i32) -> (i32, i32, i32) {
    %c0_i32 = arith.constant 0 : i32
    %c0_i32_0 = arith.constant 0 : i32
    %c0_i32_1 = arith.constant 0 : i32
    return %c0_i32, %arg0, %c0_i32_0 : i32, i32, i32
  }
}

module attributes {stable_mosaic.version = 11 : i64} {
  func.func @_ff_residual_kernel(%arg0: i32, %arg1: memref<256x32xf32, #tpu.memory_space<vmem>>, %arg2: memref<256x32xf32, #tpu.memory_space<vmem>>, %arg3: memref<32x64xbf16, #tpu.memory_space<vmem>>, %arg4: memref<1x64xf32, #tpu.memory_space<vmem>>, %arg5: memref<64x32xbf16, #tpu.memory_space<vmem>>, %arg6: memref<1x32xf32, #tpu.memory_space<vmem>>, %arg7: memref<256x32xf32, #tpu.memory_space<vmem>>, %arg8: memref<256x32xf32, #tpu.memory_space<vmem>>) attributes {dimension_semantics = [#tpu.dimension_semantics<parallel>], iteration_bounds = array<i64: 2>, scalar_prefetch = 0 : i64, scratch_operands = 0 : i64, tpu.core_type = #tpu.core_type<tc>, window_params = [{transform_indices = @transform_0, window_bounds = array<i64: 256, 32>}, {transform_indices = @transform_1, window_bounds = array<i64: 256, 32>}, {pipeline_mode = #tpu.pipeline_mode<synchronous>, transform_indices = @transform_2, window_bounds = array<i64: 32, 64>}, {pipeline_mode = #tpu.pipeline_mode<synchronous>, transform_indices = @transform_3, window_bounds = array<i64: 1, 64>}, {pipeline_mode = #tpu.pipeline_mode<synchronous>, transform_indices = @transform_4, window_bounds = array<i64: 64, 32>}, {pipeline_mode = #tpu.pipeline_mode<synchronous>, transform_indices = @transform_5, window_bounds = array<i64: 1, 32>}, {transform_indices = @transform_6, window_bounds = array<i64: 256, 32>}, {transform_indices = @transform_7, window_bounds = array<i64: 256, 32>}]} {
    %c0 = arith.constant 0 : index
    %c0_0 = arith.constant 0 : index
    %0 = vector.load %arg2[%c0, %c0_0] : memref<256x32xf32, #tpu.memory_space<vmem>>, vector<256x32xf32>
    %1 = arith.truncf %0 : vector<256x32xf32> to vector<256x32xbf16>
    %c0_1 = arith.constant 0 : index
    %c0_2 = arith.constant 0 : index
    %2 = vector.load %arg3[%c0_1, %c0_2] : memref<32x64xbf16, #tpu.memory_space<vmem>>, vector<32x64xbf16>
    %cst = arith.constant dense<0.000000e+00> : vector<256x64xf32>
    %3 = tpu.matmul %1, %2, %cst {dimension_numbers = #tpu.dot_dimension_numbers<[1], [0], [0], [1], [0, 0, 1, 1], [], []>} : vector<256x32xbf16>, vector<32x64xbf16>, vector<256x64xf32> -> vector<256x64xf32>
    %c0_3 = arith.constant 0 : index
    %c0_4 = arith.constant 0 : index
    %4 = vector.load %arg4[%c0_3, %c0_4] : memref<1x64xf32, #tpu.memory_space<vmem>>, vector<1x64xf32>
    %5 = vector.broadcast %4 : vector<1x64xf32> to vector<256x64xf32>
    %6 = arith.addf %3, %5 : vector<256x64xf32>
    %cst_5 = arith.constant 0.000000e+00 : f32
    %7 = vector.broadcast %cst_5 : f32 to vector<256x64xf32>
    %8 = arith.maximumf %6, %7 : vector<256x64xf32>
    %9 = arith.truncf %8 : vector<256x64xf32> to vector<256x64xbf16>
    %c0_6 = arith.constant 0 : index
    %c0_7 = arith.constant 0 : index
    %10 = vector.load %arg5[%c0_6, %c0_7] : memref<64x32xbf16, #tpu.memory_space<vmem>>, vector<64x32xbf16>
    %cst_8 = arith.constant dense<0.000000e+00> : vector<256x32xf32>
    %11 = tpu.matmul %9, %10, %cst_8 {dimension_numbers = #tpu.dot_dimension_numbers<[1], [0], [0], [1], [0, 0, 1, 1], [], []>} : vector<256x64xbf16>, vector<64x32xbf16>, vector<256x32xf32> -> vector<256x32xf32>
    %c0_9 = arith.constant 0 : index
    %c0_10 = arith.constant 0 : index
    %12 = vector.load %arg6[%c0_9, %c0_10] : memref<1x32xf32, #tpu.memory_space<vmem>>, vector<1x32xf32>
    %13 = vector.broadcast %12 : vector<1x32xf32> to vector<256x32xf32>
    %14 = arith.addf %11, %13 : vector<256x32xf32>
    %c0_11 = arith.constant 0 : index
    %c0_12 = arith.constant 0 : index
    %15 = vector.load %arg8[%c0_11, %c0_12] : memref<256x32xf32, #tpu.memory_space<vmem>>, vector<256x32xf32>
    tpu.vector_store %arg8[%c0_11, %c0_12], %14 {strides = array<i32>} : memref<256x32xf32, #tpu.memory_space<vmem>>, vector<256x32xf32>,
    %c0_13 = arith.constant 0 : index
    %c0_14 = arith.constant 0 : index
    %16 = vector.load %arg1[%c0_13, %c0_14] : memref<256x32xf32, #tpu.memory_space<vmem>>, vector<256x32xf32>
    %17 = arith.addf %16, %14 : vector<256x32xf32>
    %c0_15 = arith.constant 0 : index
    %c0_16 = arith.constant 0 : index
    %18 = vector.load %arg7[%c0_15, %c0_16] : memref<256x32xf32, #tpu.memory_space<vmem>>, vector<256x32xf32>
    tpu.vector_store %arg7[%c0_15, %c0_16], %17 {strides = array<i32>} : memref<256x32xf32, #tpu.memory_space<vmem>>, vector<256x32xf32>,
    return
  }
  func.func @transform_0(%arg0: i32) -> (i32, i32) {
    %c0_i32 = arith.constant 0 : i32
    %c0_i32_0 = arith.constant 0 : i32
    return %arg0, %c0_i32 : i32, i32
  }
  func.func @transform_1(%arg0: i32) -> (i32, i32) {
    %c0_i32 = arith.constant 0 : i32
    %c0_i32_0 = arith.constant 0 : i32
    return %arg0, %c0_i32 : i32, i32
  }
  func.func @transform_2(%arg0: i32) -> (i32, i32) {
    %c0_i32 = arith.constant 0 : i32
    %c0_i32_0 = arith.constant 0 : i32
    %c0_i32_1 = arith.constant 0 : i32
    return %c0_i32, %c0_i32_0 : i32, i32
  }
  func.func @transform_3(%arg0: i32) -> (i32, i32) {
    %c0_i32 = arith.constant 0 : i32
    %c0_i32_0 = arith.constant 0 : i32
    %c0_i32_1 = arith.constant 0 : i32
    return %c0_i32, %c0_i32_0 : i32, i32
  }
  func.func @transform_4(%arg0: i32) -> (i32, i32) {
    %c0_i32 = arith.constant 0 : i32
    %c0_i32_0 = arith.constant 0 : i32
    %c0_i32_1 = arith.constant 0 : i32
    return %c0_i32, %c0_i32_0 : i32, i32
  }
  func.func @transform_5(%arg0: i32) -> (i32, i32) {
    %c0_i32 = arith.constant 0 : i32
    %c0_i32_0 = arith.constant 0 : i32
    %c0_i32_1 = arith.constant 0 : i32
    return %c0_i32, %c0_i32_0 : i32, i32
  }
  func.func @transform_6(%arg0: i32) -> (i32, i32) {
    %c0_i32 = arith.constant 0 : i32
    %c0_i32_0 = arith.constant 0 : i32
    return %arg0, %c0_i32 : i32, i32
  }
  func.func @transform_7(%arg0: i32) -> (i32, i32) {
    %c0_i32 = arith.constant 0 : i32
    %c0_i32_0 = arith.constant 0 : i32
    return %arg0, %c0_i32 : i32, i32
  }
}

module attributes {stable_mosaic.version = 11 : i64} {
  func.func @_ff_residual_kernel(%arg0: i32, %arg1: memref<256x32xf32, #tpu.memory_space<vmem>>, %arg2: memref<256x32xf32, #tpu.memory_space<vmem>>, %arg3: memref<32x64xbf16, #tpu.memory_space<vmem>>, %arg4: memref<1x64xf32, #tpu.memory_space<vmem>>, %arg5: memref<64x32xbf16, #tpu.memory_space<vmem>>, %arg6: memref<1x32xf32, #tpu.memory_space<vmem>>, %arg7: memref<256x32xf32, #tpu.memory_space<vmem>>, %arg8: memref<256x32xf32, #tpu.memory_space<vmem>>) attributes {dimension_semantics = [#tpu.dimension_semantics<parallel>], iteration_bounds = array<i64: 2>, scalar_prefetch = 0 : i64, scratch_operands = 0 : i64, tpu.core_type = #tpu.core_type<tc>, window_params = [{transform_indices = @transform_0, window_bounds = array<i64: 256, 32>}, {transform_indices = @transform_1, window_bounds = array<i64: 256, 32>}, {pipeline_mode = #tpu.pipeline_mode<synchronous>, transform_indices = @transform_2, window_bounds = array<i64: 32, 64>}, {pipeline_mode = #tpu.pipeline_mode<synchronous>, transform_indices = @transform_3, window_bounds = array<i64: 1, 64>}, {pipeline_mode = #tpu.pipeline_mode<synchronous>, transform_indices = @transform_4, window_bounds = array<i64: 64, 32>}, {pipeline_mode = #tpu.pipeline_mode<synchronous>, transform_indices = @transform_5, window_bounds = array<i64: 1, 32>}, {transform_indices = @transform_6, window_bounds = array<i64: 256, 32>}, {transform_indices = @transform_7, window_bounds = array<i64: 256, 32>}]} {
    %c0 = arith.constant 0 : index
    %c0_0 = arith.constant 0 : index
    %0 = vector.load %arg2[%c0, %c0_0] : memref<256x32xf32, #tpu.memory_space<vmem>>, vector<256x32xf32>
    %1 = arith.truncf %0 : vector<256x32xf32> to vector<256x32xbf16>
    %c0_1 = arith.constant 0 : index
    %c0_2 = arith.constant 0 : index
    %2 = vector.load %arg3[%c0_1, %c0_2] : memref<32x64xbf16, #tpu.memory_space<vmem>>, vector<32x64xbf16>
    %cst = arith.constant dense<0.000000e+00> : vector<256x64xf32>
    %3 = tpu.matmul %1, %2, %cst {dimension_numbers = #tpu.dot_dimension_numbers<[1], [0], [0], [1], [0, 0, 1, 1], [], []>} : vector<256x32xbf16>, vector<32x64xbf16>, vector<256x64xf32> -> vector<256x64xf32>
    %c0_3 = arith.constant 0 : index
    %c0_4 = arith.constant 0 : index
    %4 = vector.load %arg4[%c0_3, %c0_4] : memref<1x64xf32, #tpu.memory_space<vmem>>, vector<1x64xf32>
    %5 = vector.broadcast %4 : vector<1x64xf32> to vector<256x64xf32>
    %6 = arith.addf %3, %5 : vector<256x64xf32>
    %cst_5 = arith.constant 0.000000e+00 : f32
    %7 = vector.broadcast %cst_5 : f32 to vector<256x64xf32>
    %8 = arith.maximumf %6, %7 : vector<256x64xf32>
    %9 = arith.truncf %8 : vector<256x64xf32> to vector<256x64xbf16>
    %c0_6 = arith.constant 0 : index
    %c0_7 = arith.constant 0 : index
    %10 = vector.load %arg5[%c0_6, %c0_7] : memref<64x32xbf16, #tpu.memory_space<vmem>>, vector<64x32xbf16>
    %cst_8 = arith.constant dense<0.000000e+00> : vector<256x32xf32>
    %11 = tpu.matmul %9, %10, %cst_8 {dimension_numbers = #tpu.dot_dimension_numbers<[1], [0], [0], [1], [0, 0, 1, 1], [], []>} : vector<256x64xbf16>, vector<64x32xbf16>, vector<256x32xf32> -> vector<256x32xf32>
    %c0_9 = arith.constant 0 : index
    %c0_10 = arith.constant 0 : index
    %12 = vector.load %arg6[%c0_9, %c0_10] : memref<1x32xf32, #tpu.memory_space<vmem>>, vector<1x32xf32>
    %13 = vector.broadcast %12 : vector<1x32xf32> to vector<256x32xf32>
    %14 = arith.addf %11, %13 : vector<256x32xf32>
    %c0_11 = arith.constant 0 : index
    %c0_12 = arith.constant 0 : index
    %15 = vector.load %arg8[%c0_11, %c0_12] : memref<256x32xf32, #tpu.memory_space<vmem>>, vector<256x32xf32>
    tpu.vector_store %arg8[%c0_11, %c0_12], %14 {strides = array<i32>} : memref<256x32xf32, #tpu.memory_space<vmem>>, vector<256x32xf32>,
    %c0_13 = arith.constant 0 : index
    %c0_14 = arith.constant 0 : index
    %16 = vector.load %arg1[%c0_13, %c0_14] : memref<256x32xf32, #tpu.memory_space<vmem>>, vector<256x32xf32>
    %17 = arith.addf %16, %14 : vector<256x32xf32>
    %c0_15 = arith.constant 0 : index
    %c0_16 = arith.constant 0 : index
    %18 = vector.load %arg7[%c0_15, %c0_16] : memref<256x32xf32, #tpu.memory_space<vmem>>, vector<256x32xf32>
    tpu.vector_store %arg7[%c0_15, %c0_16], %17 {strides = array<i32>} : memref<256x32xf32, #tpu.memory_space<vmem>>, vector<256x32xf32>,
    return
  }
  func.func @transform_0(%arg0: i32) -> (i32, i32) {
    %c0_i32 = arith.constant 0 : i32
    %c0_i32_0 = arith.constant 0 : i32
    return %arg0, %c0_i32 : i32, i32
  }
  func.func @transform_1(%arg0: i32) -> (i32, i32) {
    %c0_i32 = arith.constant 0 : i32
    %c0_i32_0 = arith.constant 0 : i32
    return %arg0, %c0_i32 : i32, i32
  }
  func.func @transform_2(%arg0: i32) -> (i32, i32) {
    %c0_i32 = arith.constant 0 : i32
    %c0_i32_0 = arith.constant 0 : i32
    %c0_i32_1 = arith.constant 0 : i32
    return %c0_i32, %c0_i32_0 : i32, i32
  }
  func.func @transform_3(%arg0: i32) -> (i32, i32) {
    %c0_i32 = arith.constant 0 : i32
    %c0_i32_0 = arith.constant 0 : i32
    %c0_i32_1 = arith.constant 0 : i32
    return %c0_i32, %c0_i32_0 : i32, i32
  }
  func.func @transform_4(%arg0: i32) -> (i32, i32) {
    %c0_i32 = arith.constant 0 : i32
    %c0_i32_0 = arith.constant 0 : i32
    %c0_i32_1 = arith.constant 0 : i32
    return %c0_i32, %c0_i32_0 : i32, i32
  }
  func.func @transform_5(%arg0: i32) -> (i32, i32) {
    %c0_i32 = arith.constant 0 : i32
    %c0_i32_0 = arith.constant 0 : i32
    %c0_i32_1 = arith.constant 0 : i32
    return %c0_i32, %c0_i32_0 : i32, i32
  }
  func.func @transform_6(%arg0: i32) -> (i32, i32) {
    %c0_i32 = arith.constant 0 : i32
    %c0_i32_0 = arith.constant 0 : i32
    return %arg0, %c0_i32 : i32, i32
  }
  func.func @transform_7(%arg0: i32) -> (i32, i32) {
    %c0_i32 = arith.constant 0 : i32
    %c0_i32_0 = arith.constant 0 : i32
    return %arg0, %c0_i32 : i32, i32
  }
}

module attributes {stable_mosaic.version = 11 : i64} {
  func.func @_linear_kernel(%arg0: i32, %arg1: memref<256x32xf32, #tpu.memory_space<vmem>>, %arg2: memref<32x1xbf16, #tpu.memory_space<vmem>>, %arg3: memref<1x1xf32, #tpu.memory_space<vmem>>, %arg4: memref<256x1xf32, #tpu.memory_space<vmem>>) attributes {dimension_semantics = [#tpu.dimension_semantics<parallel>], iteration_bounds = array<i64: 2>, scalar_prefetch = 0 : i64, scratch_operands = 0 : i64, tpu.core_type = #tpu.core_type<tc>, window_params = [{transform_indices = @transform_0, window_bounds = array<i64: 256, 32>}, {pipeline_mode = #tpu.pipeline_mode<synchronous>, transform_indices = @transform_1, window_bounds = array<i64: 32, 1>}, {pipeline_mode = #tpu.pipeline_mode<synchronous>, transform_indices = @transform_2, window_bounds = array<i64: 1, 1>}, {transform_indices = @transform_3, window_bounds = array<i64: 256, 1>}]} {
    %c0 = arith.constant 0 : index
    %c0_0 = arith.constant 0 : index
    %0 = vector.load %arg1[%c0, %c0_0] : memref<256x32xf32, #tpu.memory_space<vmem>>, vector<256x32xf32>
    %1 = arith.truncf %0 : vector<256x32xf32> to vector<256x32xbf16>
    %c0_1 = arith.constant 0 : index
    %c0_2 = arith.constant 0 : index
    %2 = vector.load %arg2[%c0_1, %c0_2] : memref<32x1xbf16, #tpu.memory_space<vmem>>, vector<32x1xbf16>
    %cst = arith.constant dense<0.000000e+00> : vector<256x1xf32>
    %3 = tpu.matmul %1, %2, %cst {dimension_numbers = #tpu.dot_dimension_numbers<[1], [0], [0], [1], [0, 0, 1, 1], [], []>} : vector<256x32xbf16>, vector<32x1xbf16>, vector<256x1xf32> -> vector<256x1xf32>
    %c0_3 = arith.constant 0 : index
    %c0_4 = arith.constant 0 : index
    %4 = vector.load %arg3[%c0_3, %c0_4] : memref<1x1xf32, #tpu.memory_space<vmem>>, vector<1x1xf32>
    %5 = vector.broadcast %4 : vector<1x1xf32> to vector<256x1xf32>
    %6 = arith.addf %3, %5 : vector<256x1xf32>
    %c0_5 = arith.constant 0 : index
    %c0_6 = arith.constant 0 : index
    %7 = vector.load %arg4[%c0_5, %c0_6] : memref<256x1xf32, #tpu.memory_space<vmem>>, vector<256x1xf32>
    tpu.vector_store %arg4[%c0_5, %c0_6], %6 {strides = array<i32>} : memref<256x1xf32, #tpu.memory_space<vmem>>, vector<256x1xf32>,
    return
  }
  func.func @transform_0(%arg0: i32) -> (i32, i32) {
    %c0_i32 = arith.constant 0 : i32
    %c0_i32_0 = arith.constant 0 : i32
    return %arg0, %c0_i32 : i32, i32
  }
  func.func @transform_1(%arg0: i32) -> (i32, i32) {
    %c0_i32 = arith.constant 0 : i32
    %c0_i32_0 = arith.constant 0 : i32
    %c0_i32_1 = arith.constant 0 : i32
    return %c0_i32, %c0_i32_0 : i32, i32
  }
  func.func @transform_2(%arg0: i32) -> (i32, i32) {
    %c0_i32 = arith.constant 0 : i32
    %c0_i32_0 = arith.constant 0 : i32
    %c0_i32_1 = arith.constant 0 : i32
    return %c0_i32, %c0_i32_0 : i32, i32
  }
  func.func @transform_3(%arg0: i32) -> (i32, i32) {
    %c0_i32 = arith.constant 0 : i32
    %c0_i32_0 = arith.constant 0 : i32
    return %arg0, %c0_i32 : i32, i32
  }
}

</mosaic_0001>

<llo_original>
// kernel: fno_forward.14
$region0: #{fno_forward.14}
  #allocation0 [shape = 'u32[]', space=smem, size = 0x4, offset = 0x4, fixed_abs, tag = 'smem constant byte address 0x4 - core index']
  #allocation1 [shape = 'u32[144,128]{1,0:T(1,128)}', space=vmem, size = 0x12000, scoped, tag = 'internal scratch']
  %s0 = inlined_call_operand.vmem [shape: f32[512,12], index: 0, kind: input, shape index: {}]
  %s1 = inlined_call_operand.vmem [shape: bf16[12,32], index: 1, kind: input, shape index: {}]
  %s2 = inlined_call_operand.vmem [shape: f32[1,32], index: 2, kind: input, shape index: {}]
  %s3 = inlined_call_operand.vmem [shape: f32[512,32], index: 3, kind: output, shape index: {}]
  %s4 = sld [smem:[#allocation0]]
  $region45: #{fno_forward.14} parent=0
    _
  %s6 = ssub.s32 1, %s4
  %s7 = scalar_select 0, %s6, %s4
  loop: start=0, step=1, limit=4
  $region2: #{fno_forward.14} parent=0 // loop_pre_header
    _
  $region3: #{fno_forward.14} parent=0 // loop_header
    %s9 = sphi 0, %s13
    %p10 = scmp.ge.s32.totalorder %s9, 4
    %s19 = sphi 0, %s21
    %s22 = sphi 0, %s19
    %s23 = sphi 0, %s22
    %s39 = sphi 0, %s23
    %s43 = sphi 0, %s43
    %s45 = sphi 0, %s43
    %s46 = sphi 0, %s45
    %s60 = sphi 0, %s46
    %s64 = sphi 0, %s64
    %s66 = sphi 0, %s64
    %s67 = sphi 0, %s66
    %s81 = sphi 0, %s67
    %s87 = sphi 0, %s89
    %s90 = sphi 0, %s87
    %s91 = sphi 0, %s90
    %s107 = sphi 0, %s91
  $region4: #{fno_forward.14} parent=0 // loop_header_branch
    %12 = sbr.rel (%p10) target = $region8
  $region5: #{fno_forward.14} parent=0 // loop_body
    %s14 = ssub.s32 %s9, 1
    %s15 = ssub.s32 %s9, 2
    %s16 = sadd.s32 %s9, 1
    %s17 = ssub.s32 %s9, %s16
    %p18 = scmp.eq.s32.totalorder %s17, 0
    %s20 = sadd.s32 %s19, 1
    %s21 = scalar_select %p18, %s19, %s20
    %p24 = pneg %p18
    %p25 = scmp.eq.s32.totalorder %s9, 1
    %p26 = por %p24, %p25
    %p27 = scmp.ne.s32.totalorder %s19, %s22
    %p28 = scmp.eq.s32.totalorder %s9, 0
    %p29 = por %p27, %p28
    %p30 = scmp.ne.s32.totalorder %s19, %s22
    %p31 = scmp.eq.s32.totalorder %s14, 1
    %p32 = por %p30, %p31
    %p33 = scmp.ne.s32.totalorder %s22, %s23
    %p34 = scmp.eq.s32.totalorder %s14, 0
    %p35 = por %p33, %p34
    %p36 = scmp.ne.s32.totalorder %s22, %s23
    %p37 = scmp.eq.s32.totalorder %s15, 1
    %p38 = por %p36, %p37
    %p40 = scmp.ne.s32.totalorder %s23, %s39
    %p41 = scmp.eq.s32.totalorder %s15, 0
    %p42 = por %p40, %p41
    %s44 = sadd.s32 %s43, 1
    %p47 = scmp.eq.s32.totalorder %s9, 1
    %p48 = scmp.ne.s32.totalorder %s43, %s45
    %p49 = scmp.eq.s32.totalorder %s9, 0
    %p50 = por %p48, %p49
    %p51 = scmp.ne.s32.totalorder %s43, %s45
    %p52 = scmp.eq.s32.totalorder %s14, 1
    %p53 = por %p51, %p52
    %p54 = scmp.ne.s32.totalorder %s45, %s46
    %p55 = scmp.eq.s32.totalorder %s14, 0
    %p56 = por %p54, %p55
    %p57 = scmp.ne.s32.totalorder %s45, %s46
    %p58 = scmp.eq.s32.totalorder %s15, 1
    %p59 = por %p57, %p58
    %p61 = scmp.ne.s32.totalorder %s46, %s60
    %p62 = scmp.eq.s32.totalorder %s15, 0
    %p63 = por %p61, %p62
    %s65 = sadd.s32 %s64, 1
    %p68 = scmp.eq.s32.totalorder %s9, 1
    %p69 = scmp.ne.s32.totalorder %s64, %s66
    %p70 = scmp.eq.s32.totalorder %s9, 0
    %p71 = por %p69, %p70
    %p72 = scmp.ne.s32.totalorder %s64, %s66
    %p73 = scmp.eq.s32.totalorder %s14, 1
    %p74 = por %p72, %p73
    %p75 = scmp.ne.s32.totalorder %s66, %s67
    %p76 = scmp.eq.s32.totalorder %s14, 0
    %p77 = por %p75, %p76
    %p78 = scmp.ne.s32.totalorder %s66, %s67
    %p79 = scmp.eq.s32.totalorder %s15, 1
    %p80 = por %p78, %p79
    %p82 = scmp.ne.s32.totalorder %s67, %s81
    %p83 = scmp.eq.s32.totalorder %s15, 0
    %p84 = por %p82, %p83
    %s85 = ssub.s32 %s9, %s16
    %p86 = scmp.eq.s32.totalorder %s85, 0
    %s88 = sadd.s32 %s87, 1
    %s89 = scalar_select %p86, %s87, %s88
    %p92 = pneg %p86
    %p93 = scmp.eq.s32.totalorder %s9, 1
    %p94 = por %p92, %p93
    %p95 = scmp.ne.s32.totalorder %s87, %s90
    %p96 = scmp.eq.s32.totalorder %s9, 0
    %p97 = por %p95, %p96
    %p98 = scmp.ne.s32.totalorder %s87, %s90
    %p99 = scmp.eq.s32.totalorder %s14, 1
    %p100 = por %p98, %p99
    %p101 = scmp.ne.s32.totalorder %s90, %s91
    %p102 = scmp.eq.s32.totalorder %s14, 0
    %p103 = por %p101, %p102
    %p104 = scmp.ne.s32.totalorder %s90, %s91
    %p105 = scmp.eq.s32.totalorder %s15, 1
    %p106 = por %p104, %p105
    %p108 = scmp.ne.s32.totalorder %s91, %s107
    %p109 = scmp.eq.s32.totalorder %s15, 0
    %p110 = por %p108, %p109
    %p111 = scmp.le.s32.totalorder 1, %s9
    %p112 = scmp.lt.s32.totalorder %s9, 3
    %p113 = pnand %p111, %p112
    %p114 = pneg %p113
    // Predicated region
    $region9: #{fno_forward.14} parent=5 // pred_check
      _
    $region10: #{fno_forward.14} parent=5 // pred_check_branch
      %116 = sbr.rel (%p113) target = $region12
    $region11: #{fno_forward.14} parent=5 // pred_region
      %s117 = ssub.s32 %s9, 1
      // Predicated region
      $region13: #{fno_forward.14} parent=11 // pred_check
        %p118 = pneg %p56
      $region14: #{fno_forward.14} parent=11 // pred_check_branch
        %120 = sbr.rel (%p118) target = $region16
      $region15: #{fno_forward.14} parent=11 // pred_region
        _
      $region16: #{fno_forward.14} parent=11 // pred_fallthru
        _
      // Predicated region
      $region17: #{fno_forward.14} parent=11 // pred_check
        %p121 = pneg %p77
      $region18: #{fno_forward.14} parent=11 // pred_check_branch
        %123 = sbr.rel (%p121) target = $region20
      $region19: #{fno_forward.14} parent=11 // pred_region
        _
      $region20: #{fno_forward.14} parent=11 // pred_fallthru
        _
    $region12: #{fno_forward.14} parent=5 // pred_fallthru
      _
    %p124 = scmp.lt.s32.totalorder %s9, 2
    // Predicated region
    $region21: #{fno_forward.14} parent=5 // pred_check
      %p125 = pneg %p124
    $region22: #{fno_forward.14} parent=5 // pred_check_branch
      %127 = sbr.rel (%p125) target = $region24
    $region23: #{fno_forward.14} parent=5 // pred_region
      // Predicated region
      $region25: #{fno_forward.14} parent=23 // pred_check
        %p128 = pneg %p29
      $region26: #{fno_forward.14} parent=23 // pred_check_branch
        %130 = sbr.rel (%p128) target = $region28
      $region27: #{fno_forward.14} parent=23 // pred_region
        %s131 = smul.u32 32, %s9
        %p132 = scmp.lt.s32.totalorder %s131, 63
        %s133 = scalar_select %p132, %s131, 63
        %s134 = smul.addr %s133, 8
        %s135 = scalar_lea.vmem %s0, %s134
        %s136 = smul.u32 32, %s9
      $region28: #{fno_forward.14} parent=23 // pred_fallthru
        _
    $region24: #{fno_forward.14} parent=5 // pred_fallthru
      _
    %p137 = scmp.le.s32.totalorder 1, %s9
    %p138 = scmp.lt.s32.totalorder %s9, 3
    %p139 = pnand %p137, %p138
    %p140 = pneg %p139
    // Predicated region
    $region29: #{fno_forward.14} parent=5 // pred_check
      _
    $region30: #{fno_forward.14} parent=5 // pred_check_branch
      %142 = sbr.rel (%p139) target = $region32
    $region31: #{fno_forward.14} parent=5 // pred_region
      %s143 = ssub.s32 %s9, 1
      %s144 = smul.u32 32, %s14
      %p145 = scmp.lt.s32.totalorder %s144, 63
      %s146 = scalar_select %p145, %s144, 63
      %s147 = smul.addr %s146, 8
      %s148 = scalar_lea.vmem %s0, %s147
      %p149 = pneg %p35
      %p150 = pneg %p32
      %p151 = pneg %p56
      %p152 = pneg %p53
      %p153 = pneg %p77
      %p154 = pneg %p74
      %p155 = pneg %p103
      %p156 = pneg %p100
      %s157 = smul.u32 32, %s14
      %p158 = scmp.lt.s32.totalorder %s157, 63
      %s159 = scalar_select %p158, %s157, 63
      %s160 = smul.addr %s159, 8
      %s161 = scalar_lea.vmem %s3, %s160
      %s162 = smul.u32 32, %s14
      %p163 = scmp.lt.s32.totalorder %s162, 63
      %s164 = scalar_select %p163, %s162, 63
      %s165 = smul.addr %s164, 8
      %s166 = scalar_lea.vmem %s0, %s165
      %s167 = smul.u32 32, %s14
      %s168 = smul.u32 32, %s14
      %p169 = scmp.lt.s32.totalorder %s168, 63
      %s170 = scalar_select %p169, %s168, 63
      %s171 = smul.addr %s170, 8
      %s172 = scalar_lea.vmem %s3, %s171
      %s173 = smul.u32 32, %s14
      %v175 = vld [vmem:[%s166] sm:$0xff]
      %v176 = vld [vmem:[%s166 + $0x8] sm:$0xff]
      %v177 = vld [vmem:[%s166 + $0x10] sm:$0xff]
      %v178 = vld [vmem:[%s166 + $0x18] sm:$0xff]
      %v179 = vld [vmem:[%s166 + $0x20] sm:$0xff]
      %v180 = vld [vmem:[%s166 + $0x28] sm:$0xff]
      %v181 = vld [vmem:[%s166 + $0x30] sm:$0xff]
      %v182 = vld [vmem:[%s166 + $0x38] sm:$0xff]
      %v183 = vld [vmem:[%s166 + $0x40] sm:$0xff]
      %v184 = vld [vmem:[%s166 + $0x48] sm:$0xff]
      %v185 = vld [vmem:[%s166 + $0x50] sm:$0xff]
      %v186 = vld [vmem:[%s166 + $0x58] sm:$0xff]
      %v187 = vld [vmem:[%s166 + $0x60] sm:$0xff]
      %v188 = vld [vmem:[%s166 + $0x68] sm:$0xff]
      %v189 = vld [vmem:[%s166 + $0x70] sm:$0xff]
      %v190 = vld [vmem:[%s166 + $0x78] sm:$0xff]
      %v191 = vld [vmem:[%s166 + $0x80] sm:$0xff]
      %v192 = vld [vmem:[%s166 + $0x88] sm:$0xff]
      %v193 = vld [vmem:[%s166 + $0x90] sm:$0xff]
      %v194 = vld [vmem:[%s166 + $0x98] sm:$0xff]
      %v195 = vld [vmem:[%s166 + $0xa0] sm:$0xff]
      %v196 = vld [vmem:[%s166 + $0xa8] sm:$0xff]
      %v197 = vld [vmem:[%s166 + $0xb0] sm:$0xff]
      %v198 = vld [vmem:[%s166 + $0xb8] sm:$0xff]
      %v199 = vld [vmem:[%s166 + $0xc0] sm:$0xff]
      %v200 = vld [vmem:[%s166 + $0xc8] sm:$0xff]
      %v201 = vld [vmem:[%s166 + $0xd0] sm:$0xff]
      %v202 = vld [vmem:[%s166 + $0xd8] sm:$0xff]
      %v203 = vld [vmem:[%s166 + $0xe0] sm:$0xff]
      %v204 = vld [vmem:[%s166 + $0xe8] sm:$0xff]
      %v205 = vld [vmem:[%s166 + $0xf0] sm:$0xff]
      %v206 = vld [vmem:[%s166 + $0xf8] sm:$0xff]
      %v207 = vpack.c.bf16 %v176, %v175
      %v208 = vpack.c.bf16 %v178, %v177
      %v209 = vpack.c.bf16 %v180, %v179
      %v210 = vpack.c.bf16 %v182, %v181
      %v211 = vpack.c.bf16 %v184, %v183
      %v212 = vpack.c.bf16 %v186, %v185
      %v213 = vpack.c.bf16 %v188, %v187
      %v214 = vpack.c.bf16 %v190, %v189
      %v215 = vpack.c.bf16 %v192, %v191
      %v216 = vpack.c.bf16 %v194, %v193
      %v217 = vpack.c.bf16 %v196, %v195
      %v218 = vpack.c.bf16 %v198, %v197
      %v219 = vpack.c.bf16 %v200, %v199
      %v220 = vpack.c.bf16 %v202, %v201
      %v221 = vpack.c.bf16 %v204, %v203
      %v222 = vpack.c.bf16 %v206, %v205
      %v223 = vld [vmem:[%s1] sm:$0xf]
      %v224 = vld [vmem:[%s1 + $0x4] sm:$0x3]
      %v225 = vld [vmem:[%s2] sm:$0x1]
      %v227 = vlaneseq
      %v228 = vshrl.u32 %v227, 7
      %v229 = vsub.s32 0, %v228
      %v230 = vrot.slane %v225, %v229
      %v234 = vunpack.c.l.b16 %v223
      %v235 = vunpack.c.l.b16 %v224
      %v236 = vpack.c.b16 %v235, %v234
      %vm237 = vcmask 97280
      %v239 = vsel %vm237, %v207, 0
      %v242 = vsel %vm237, %v208, 0
      %v245 = vsel %vm237, %v209, 0
      %v248 = vsel %vm237, %v210, 0
      %v251 = vsel %vm237, %v211, 0
      %v254 = vsel %vm237, %v212, 0
      %v257 = vsel %vm237, %v213, 0
      %v260 = vsel %vm237, %v214, 0
      %v263 = vsel %vm237, %v215, 0
      %v266 = vsel %vm237, %v216, 0
      %v269 = vsel %vm237, %v217, 0
      %v272 = vsel %vm237, %v218, 0
      %v275 = vsel %vm237, %v219, 0
      %v278 = vsel %vm237, %v220, 0
      %v281 = vsel %vm237, %v221, 0
      %v284 = vsel %vm237, %v222, 0
      %vm286 = vcmask 1045504
      %v288 = vsel %vm286, %v236, 0
      %290 = vmatprep.subr.bf16.mxu0 0
      %291 = vmatpush1.bf16.msra.mxu0 0
      %292 = vmatprep.subr.bf16.mxu0 0
      %293 = vmatpush1.bf16.msra.mxu0 0
      %294 = vmatprep.subr.bf16.mxu0 0
      %295 = vmatpush1.bf16.msra.mxu0 0
      %296 = vmatprep.subr.bf16.mxu0 0
      %297 = vmatpush1.bf16.msra.mxu0 0
      %298 = vmatprep.subr.bf16.mxu0 0
      %299 = vmatpush1.bf16.msra.mxu0 0
      %300 = vmatprep.subr.bf16.mxu0 0
      %301 = vmatpush1.bf16.msra.mxu0 0
      %302 = vmatprep.subr.bf16.mxu0 0
      %303 = vmatpush1.bf16.msra.mxu0 0
      %304 = vmatprep.subr.bf16.mxu0 0
      %305 = vmatpush1.bf16.msra.mxu0 %v288
      %306 = vmatprep.subr.bf16.mxu0 0
      %307 = vmatpush2.bf16.msra.mxu0 0
      %308 = vmatprep.subr.bf16.mxu0 0
      %309 = vmatpush2.bf16.msra.mxu0 0
      %310 = vmatprep.subr.bf16.mxu0 0
      %311 = vmatpush2.bf16.msra.mxu0 0
      %312 = vmatprep.subr.bf16.mxu0 0
      %313 = vmatpush2.bf16.msra.mxu0 0
      %314 = vmatprep.subr.bf16.mxu0 0
      %315 = vmatpush2.bf16.msra.mxu0 0
      %316 = vmatprep.subr.bf16.mxu0 0
      %317 = vmatpush2.bf16.msra.mxu0 0
      %318 = vmatprep.subr.bf16.mxu0 0
      %319 = vmatpush2.bf16.msra.mxu0 0
      %320 = vmatprep.subr.bf16.mxu0 0
      %321 = vmatpush2.bf16.msra.mxu0 0
      %322 = vmatprep.mubr.bf16.mxu0 0
      %323 = vmatmul.mubr.bf16.gmra.mxu0 %v239
      %v324 = vpop.f32.mrf.mxu0
      %v325 = vadd.f32 %v230, %v324
      %v326 = vpop.f32.mrf.mxu0
      %v327 = vpop.f32.mrf.mxu0
      %v328 = vadd.f32 %v230, %v327
      %v329 = vpop.f32.mrf.mxu0
      %330 = vmatprep.mubr.bf16.mxu0 0
      %331 = vmatmul.mubr.bf16.gmra.mxu0 %v242
      %v332 = vpop.f32.mrf.mxu0
      %v333 = vadd.f32 %v230, %v332
      %v334 = vpop.f32.mrf.mxu0
      %v335 = vpop.f32.mrf.mxu0
      %v336 = vadd.f32 %v230, %v335
      %v337 = vpop.f32.mrf.mxu0
      %338 = vmatprep.mubr.bf16.mxu0 0
      %339 = vmatmul.mubr.bf16.gmra.mxu0 %v245
      %v340 = vpop.f32.mrf.mxu0
      %v341 = vadd.f32 %v230, %v340
      %v342 = vpop.f32.mrf.mxu0
      %v343 = vpop.f32.mrf.mxu0
      %v344 = vadd.f32 %v230, %v343
      %v345 = vpop.f32.mrf.mxu0
      %346 = vmatprep.mubr.bf16.mxu0 0
      %347 = vmatmul.mubr.bf16.gmra.mxu0 %v248
      %v348 = vpop.f32.mrf.mxu0
      %v349 = vadd.f32 %v230, %v348
      %v350 = vpop.f32.mrf.mxu0
      %v351 = vpop.f32.mrf.mxu0
      %v352 = vadd.f32 %v230, %v351
      %v353 = vpop.f32.mrf.mxu0
      %354 = vmatprep.mubr.bf16.mxu0 0
      %355 = vmatmul.mubr.bf16.gmra.mxu0 %v251
      %v356 = vpop.f32.mrf.mxu0
      %v357 = vadd.f32 %v230, %v356
      %v358 = vpop.f32.mrf.mxu0
      %v359 = vpop.f32.mrf.mxu0
      %v360 = vadd.f32 %v230, %v359
      %v361 = vpop.f32.mrf.mxu0
      %362 = vmatprep.mubr.bf16.mxu0 0
      %363 = vmatmul.mubr.bf16.gmra.mxu0 %v254
      %v364 = vpop.f32.mrf.mxu0
      %v365 = vadd.f32 %v230, %v364
      %v366 = vpop.f32.mrf.mxu0
      %v367 = vpop.f32.mrf.mxu0
      %v368 = vadd.f32 %v230, %v367
      %v369 = vpop.f32.mrf.mxu0
      %370 = vmatprep.mubr.bf16.mxu0 0
      %371 = vmatmul.mubr.bf16.gmra.mxu0 %v257
      %v372 = vpop.f32.mrf.mxu0
      %v373 = vadd.f32 %v230, %v372
      %v374 = vpop.f32.mrf.mxu0
      %v375 = vpop.f32.mrf.mxu0
      %v376 = vadd.f32 %v230, %v375
      %v377 = vpop.f32.mrf.mxu0
      %378 = vmatprep.mubr.bf16.mxu0 0
      %379 = vmatmul.mubr.bf16.gmra.mxu0 %v260
      %v380 = vpop.f32.mrf.mxu0
      %v381 = vadd.f32 %v230, %v380
      %v382 = vpop.f32.mrf.mxu0
      %v383 = vpop.f32.mrf.mxu0
      %v384 = vadd.f32 %v230, %v383
      %v385 = vpop.f32.mrf.mxu0
      %386 = vmatprep.mubr.bf16.mxu0 0
      %387 = vmatmul.mubr.bf16.gmra.mxu0 %v263
      %v388 = vpop.f32.mrf.mxu0
      %v389 = vadd.f32 %v230, %v388
      %v390 = vpop.f32.mrf.mxu0
      %v391 = vpop.f32.mrf.mxu0
      %v392 = vadd.f32 %v230, %v391
      %v393 = vpop.f32.mrf.mxu0
      %394 = vmatprep.mubr.bf16.mxu0 0
      %395 = vmatmul.mubr.bf16.gmra.mxu0 %v266
      %v396 = vpop.f32.mrf.mxu0
      %v397 = vadd.f32 %v230, %v396
      %v398 = vpop.f32.mrf.mxu0
      %v399 = vpop.f32.mrf.mxu0
      %v400 = vadd.f32 %v230, %v399
      %v401 = vpop.f32.mrf.mxu0
      %402 = vmatprep.mubr.bf16.mxu0 0
      %403 = vmatmul.mubr.bf16.gmra.mxu0 %v269
      %v404 = vpop.f32.mrf.mxu0
      %v405 = vadd.f32 %v230, %v404
      %v406 = vpop.f32.mrf.mxu0
      %v407 = vpop.f32.mrf.mxu0
      %v408 = vadd.f32 %v230, %v407
      %v409 = vpop.f32.mrf.mxu0
      %410 = vmatprep.mubr.bf16.mxu0 0
      %411 = vmatmul.mubr.bf16.gmra.mxu0 %v272
      %v412 = vpop.f32.mrf.mxu0
      %v413 = vadd.f32 %v230, %v412
      %v414 = vpop.f32.mrf.mxu0
      %v415 = vpop.f32.mrf.mxu0
      %v416 = vadd.f32 %v230, %v415
      %v417 = vpop.f32.mrf.mxu0
      %418 = vmatprep.mubr.bf16.mxu0 0
      %419 = vmatmul.mubr.bf16.gmra.mxu0 %v275
      %v420 = vpop.f32.mrf.mxu0
      %v421 = vadd.f32 %v230, %v420
      %v422 = vpop.f32.mrf.mxu0
      %v423 = vpop.f32.mrf.mxu0
      %v424 = vadd.f32 %v230, %v423
      %v425 = vpop.f32.mrf.mxu0
      %426 = vmatprep.mubr.bf16.mxu0 0
      %427 = vmatmul.mubr.bf16.gmra.mxu0 %v278
      %v428 = vpop.f32.mrf.mxu0
      %v429 = vadd.f32 %v230, %v428
      %v430 = vpop.f32.mrf.mxu0
      %v431 = vpop.f32.mrf.mxu0
      %v432 = vadd.f32 %v230, %v431
      %v433 = vpop.f32.mrf.mxu0
      %434 = vmatprep.mubr.bf16.mxu0 0
      %435 = vmatmul.mubr.bf16.gmra.mxu0 %v281
      %v436 = vpop.f32.mrf.mxu0
      %v437 = vadd.f32 %v230, %v436
      %v438 = vpop.f32.mrf.mxu0
      %v439 = vpop.f32.mrf.mxu0
      %v440 = vadd.f32 %v230, %v439
      %v441 = vpop.f32.mrf.mxu0
      %442 = vmatprep.mubr.bf16.mxu0 0
      %443 = vmatmul.mubr.bf16.gmra.mxu0 %v284
      %v444 = vpop.f32.mrf.mxu0
      %v445 = vadd.f32 %v230, %v444
      %v446 = vpop.f32.mrf.mxu0
      %v447 = vpop.f32.mrf.mxu0
      %v448 = vadd.f32 %v230, %v447
      %v449 = vpop.f32.mrf.mxu0
      %450 = vdwg.mxu0
      %vm451 = vcmask 261120
      %452 = vst.msk [vmem:[%s172] sm:$0xff] %vm451, %v325
      %453 = vst.msk [vmem:[%s172 + $0x8] sm:$0xff] %vm451, %v328
      %454 = vst.msk [vmem:[%s172 + $0x10] sm:$0xff] %vm451, %v333
      %455 = vst.msk [vmem:[%s172 + $0x18] sm:$0xff] %vm451, %v336
      %456 = vst.msk [vmem:[%s172 + $0x20] sm:$0xff] %vm451, %v341
      %457 = vst.msk [vmem:[%s172 + $0x28] sm:$0xff] %vm451, %v344
      %458 = vst.msk [vmem:[%s172 + $0x30] sm:$0xff] %vm451, %v349
      %459 = vst.msk [vmem:[%s172 + $0x38] sm:$0xff] %vm451, %v352
      %460 = vst.msk [vmem:[%s172 + $0x40] sm:$0xff] %vm451, %v357
      %461 = vst.msk [vmem:[%s172 + $0x48] sm:$0xff] %vm451, %v360
      %462 = vst.msk [vmem:[%s172 + $0x50] sm:$0xff] %vm451, %v365
      %463 = vst.msk [vmem:[%s172 + $0x58] sm:$0xff] %vm451, %v368
      %464 = vst.msk [vmem:[%s172 + $0x60] sm:$0xff] %vm451, %v373
      %465 = vst.msk [vmem:[%s172 + $0x68] sm:$0xff] %vm451, %v376
      %466 = vst.msk [vmem:[%s172 + $0x70] sm:$0xff] %vm451, %v381
      %467 = vst.msk [vmem:[%s172 + $0x78] sm:$0xff] %vm451, %v384
      %468 = vst.msk [vmem:[%s172 + $0x80] sm:$0xff] %vm451, %v389
      %469 = vst.msk [vmem:[%s172 + $0x88] sm:$0xff] %vm451, %v392
      %470 = vst.msk [vmem:[%s172 + $0x90] sm:$0xff] %vm451, %v397
      %471 = vst.msk [vmem:[%s172 + $0x98] sm:$0xff] %vm451, %v400
      %472 = vst.msk [vmem:[%s172 + $0xa0] sm:$0xff] %vm451, %v405
      %473 = vst.msk [vmem:[%s172 + $0xa8] sm:$0xff] %vm451, %v408
      %474 = vst.msk [vmem:[%s172 + $0xb0] sm:$0xff] %vm451, %v413
      %475 = vst.msk [vmem:[%s172 + $0xb8] sm:$0xff] %vm451, %v416
      %476 = vst.msk [vmem:[%s172 + $0xc0] sm:$0xff] %vm451, %v421
      %477 = vst.msk [vmem:[%s172 + $0xc8] sm:$0xff] %vm451, %v424
      %478 = vst.msk [vmem:[%s172 + $0xd0] sm:$0xff] %vm451, %v429
      %479 = vst.msk [vmem:[%s172 + $0xd8] sm:$0xff] %vm451, %v432
      %480 = vst.msk [vmem:[%s172 + $0xe0] sm:$0xff] %vm451, %v437
      %481 = vst.msk [vmem:[%s172 + $0xe8] sm:$0xff] %vm451, %v440
      %482 = vst.msk [vmem:[%s172 + $0xf0] sm:$0xff] %vm451, %v445
      %483 = vst.msk [vmem:[%s172 + $0xf8] sm:$0xff] %vm451, %v448
      %s484 = smul.u32 32, %s14
      %p485 = scmp.lt.s32.totalorder %s484, 63
      %s486 = scalar_select %p485, %s484, 63
      %s487 = smul.addr %s486, 8
      %s488 = scalar_lea.vmem %s3, %s487
      // Predicated region
      $region33: #{fno_forward.14} parent=31 // pred_check
        %p489 = pneg %p100
      $region34: #{fno_forward.14} parent=31 // pred_check_branch
        %491 = sbr.rel (%p489) target = $region36
      $region35: #{fno_forward.14} parent=31 // pred_region
        %s492 = smul.u32 32, %s14
      $region36: #{fno_forward.14} parent=31 // pred_fallthru
        _
    $region32: #{fno_forward.14} parent=5 // pred_fallthru
      _
    %p493 = scmp.le.s32.totalorder 2, %s9
    // Predicated region
    $region37: #{fno_forward.14} parent=5 // pred_check
      %p494 = pneg %p493
    $region38: #{fno_forward.14} parent=5 // pred_check_branch
      %496 = sbr.rel (%p494) target = $region40
    $region39: #{fno_forward.14} parent=5 // pred_region
      %s497 = ssub.s32 %s9, 2
      // Predicated region
      $region41: #{fno_forward.14} parent=39 // pred_check
        %p498 = pneg %p106
      $region42: #{fno_forward.14} parent=39 // pred_check_branch
        %500 = sbr.rel (%p498) target = $region44
      $region43: #{fno_forward.14} parent=39 // pred_region
        %s501 = smul.u32 32, %s15
        %p502 = scmp.lt.s32.totalorder %s501, 63
        %s503 = scalar_select %p502, %s501, 63
        %s504 = smul.addr %s503, 8
        %s505 = scalar_lea.vmem %s3, %s504
      $region44: #{fno_forward.14} parent=39 // pred_fallthru
        _
    $region40: #{fno_forward.14} parent=5 // pred_fallthru
      _
  $region6: #{fno_forward.14} parent=0 // loop_footer
    %s13 = sadd.s32 1, %s9
  $region7: #{fno_forward.14} parent=0 // loop_footer_branch
    %8 = sbr.rel target = $region3
  $region8: #{fno_forward.14} parent=0 // loop_exit
    _

// kernel: reverse.19
$region0: #{reverse.19}
  %s0 = inlined_call_operand.vmem [shape: f32[2,32,16,7], index: 0, kind: input, shape index: {}]
  %s1 = inlined_call_operand.vmem [shape: f32[2,32,16,7], index: 1, kind: output, shape index: {}]
  $region1: #{reverse.19} parent=0
    #allocation0 [shape = 'u8[262144]{0}', space=vmem, size = 0x40000, scoped, tag = 'operand span for operand 0']
    #allocation1 [shape = 'u8[131072]{0}', space=vmem, size = 0x20000, scoped, tag = 'operand span for operand 1']
    %s2 = scalar_lea.vmem [#allocation0], 8
    // Predicated region
    $region2: #{reverse.19} parent=1 // pred_check
      _
    $region3: #{reverse.19} parent=1 // pred_check_branch
      %4 = sbr.rel (0) target = $region5
    $region4: #{reverse.19} parent=1 // pred_region
      // Predicated region
      $region6: #{reverse.19} parent=4 // pred_check
        _
      $region7: #{reverse.19} parent=4 // pred_check_branch
        %6 = sbr.rel (0) target = $region9
      $region8: #{reverse.19} parent=4 // pred_region
        // Predicated region
        $region21: #{reverse.19} parent=8 // pred_check
          _
        $region22: #{reverse.19} parent=8 // pred_check_branch
          %84 = sbr.rel (0) target = $region24
        $region23: #{reverse.19} parent=8 // pred_region
          loop: start=0, step=1, limit=1
          $region25: #{reverse.19} parent=23 // loop_pre_header
            _
          $region26: #{reverse.19} parent=23 // loop_header
            %s86 = sphi 0, %s90
            %p87 = scmp.ge.s32.totalorder %s86, 1
            %s91 = sphi %s0, %s0
            %s92 = sphi %s2, %s2
          $region27: #{reverse.19} parent=23 // loop_header_branch
            %89 = sbr.rel (%p87) target = $region31
          $region28: #{reverse.19} parent=23 // loop_body
            %v93 = vld [vmem:[%s91] sm:$0xff]
            %94 = vst [vmem:[%s92] sm:$0xff] %v93
            %v95 = vld [vmem:[%s91 + $0x8] sm:$0xff]
            %96 = vst [vmem:[%s92 + $0x10] sm:$0xff] %v95
            %v97 = vld [vmem:[%s91 + $0x10] sm:$0xff]
            %98 = vst [vmem:[%s92 + $0x20] sm:$0xff] %v97
            %v99 = vld [vmem:[%s91 + $0x18] sm:$0xff]
            %100 = vst [vmem:[%s92 + $0x30] sm:$0xff] %v99
            %v101 = vld [vmem:[%s91 + $0x20] sm:$0xff]
            %102 = vst [vmem:[%s92 + $0x40] sm:$0xff] %v101
            %v103 = vld [vmem:[%s91 + $0x28] sm:$0xff]
            %104 = vst [vmem:[%s92 + $0x50] sm:$0xff] %v103
            %v105 = vld [vmem:[%s91 + $0x30] sm:$0xff]
            %106 = vst [vmem:[%s92 + $0x60] sm:$0xff] %v105
            %v107 = vld [vmem:[%s91 + $0x38] sm:$0xff]
            %108 = vst [vmem:[%s92 + $0x70] sm:$0xff] %v107
            %v109 = vld [vmem:[%s91 + $0x40] sm:$0xff]
            %110 = vst [vmem:[%s92 + $0x80] sm:$0xff] %v109
            %v111 = vld [vmem:[%s91 + $0x48] sm:$0xff]
            %112 = vst [vmem:[%s92 + $0x90] sm:$0xff] %v111
            %v113 = vld [vmem:[%s91 + $0x50] sm:$0xff]
            %114 = vst [vmem:[%s92 + $0xa0] sm:$0xff] %v113
            %v115 = vld [vmem:[%s91 + $0x58] sm:$0xff]
            %116 = vst [vmem:[%s92 + $0xb0] sm:$0xff] %v115
            %v117 = vld [vmem:[%s91 + $0x60] sm:$0xff]
            %118 = vst [vmem:[%s92 + $0xc0] sm:$0xff] %v117
            %v119 = vld [vmem:[%s91 + $0x68] sm:$0xff]
            %120 = vst [vmem:[%s92 + $0xd0] sm:$0xff] %v119
            %v121 = vld [vmem:[%s91 + $0x70] sm:$0xff]
            %122 = vst [vmem:[%s92 + $0xe0] sm:$0xff] %v121
            %v123 = vld [vmem:[%s91 + $0x78] sm:$0xff]
            %124 = vst [vmem:[%s92 + $0xf0] sm:$0xff] %v123
            %v125 = vld [vmem:[%s91 + $0x80] sm:$0xff]
            %126 = vst [vmem:[%s92 + $0x100] sm:$0xff] %v125
            %v127 = vld [vmem:[%s91 + $0x88] sm:$0xff]
            %128 = vst [vmem:[%s92 + $0x110] sm:$0xff] %v127
            %v129 = vld [vmem:[%s91 + $0x90] sm:$0xff]
            %130 = vst [vmem:[%s92 + $0x120] sm:$0xff] %v129
            %v131 = vld [vmem:[%s91 + $0x98] sm:$0xff]
            %132 = vst [vmem:[%s92 + $0x130] sm:$0xff] %v131
            %v133 = vld [vmem:[%s91 + $0xa0] sm:$0xff]
            %134 = vst [vmem:[%s92 + $0x140] sm:$0xff] %v133
            %v135 = vld [vmem:[%s91 + $0xa8] sm:$0xff]
            %136 = vst [vmem:[%s92 + $0x150] sm:$0xff] %v135
            %v137 = vld [vmem:[%s91 + $0xb0] sm:$0xff]
            %138 = vst [vmem:[%s92 + $0x160] sm:$0xff] %v137
            %v139 = vld [vmem:[%s91 + $0xb8] sm:$0xff]
            %140 = vst [vmem:[%s92 + $0x170] sm:$0xff] %v139
            %v141 = vld [vmem:[%s91 + $0xc0] sm:$0xff]
            %142 = vst [vmem:[%s92 + $0x180] sm:$0xff] %v141
            %v143 = vld [vmem:[%s91 + $0xc8] sm:$0xff]
            %144 = vst [vmem:[%s92 + $0x190] sm:$0xff] %v143
            %v145 = vld [vmem:[%s91 + $0xd0] sm:$0xff]
            %146 = vst [vmem:[%s92 + $0x1a0] sm:$0xff] %v145
            %v147 = vld [vmem:[%s91 + $0xd8] sm:$0xff]
            %148 = vst [vmem:[%s92 + $0x1b0] sm:$0xff] %v147
            %v149 = vld [vmem:[%s91 + $0xe0] sm:$0xff]
            %150 = vst [vmem:[%s92 + $0x1c0] sm:$0xff] %v149
            %v151 = vld [vmem:[%s91 + $0xe8] sm:$0xff]
            %152 = vst [vmem:[%s92 + $0x1d0] sm:$0xff] %v151
            %v153 = vld [vmem:[%s91 + $0xf0] sm:$0xff]
            %154 = vst [vmem:[%s92 + $0x1e0] sm:$0xff] %v153
            %v155 = vld [vmem:[%s91 + $0xf8] sm:$0xff]
            %156 = vst [vmem:[%s92 + $0x1f0] sm:$0xff] %v155
          $region29: #{reverse.19} parent=23 // loop_footer
            %s90 = sadd.s32 1, %s86
          $region30: #{reverse.19} parent=23 // loop_footer_branch
            %85 = sbr.rel target = $region26
          $region31: #{reverse.19} parent=23 // loop_exit
            _
        $region24: #{reverse.19} parent=8 // pred_fallthru
          _
        // Predicated region
        $region32: #{reverse.19} parent=8 // pred_check
          _
        $region33: #{reverse.19} parent=8 // pred_check_branch
          %158 = sbr.rel target = $region35
        $region34: #{reverse.19} parent=8 // pred_region
          _
        $region35: #{reverse.19} parent=8 // pred_fallthru
          _
      $region9: #{reverse.19} parent=4 // pred_fallthru
        _
      // Predicated region
      $region10: #{reverse.19} parent=4 // pred_check
        _
      $region11: #{reverse.19} parent=4 // pred_check_branch
        %8 = sbr.rel target = $region13
      $region12: #{reverse.19} parent=4 // pred_region
        %s10 = ssub.s32 256, 1
        loop: start=0, step=1, limit=1
        $region14: #{reverse.19} parent=12 // loop_pre_header
          _
        $region15: #{reverse.19} parent=12 // loop_header
          %s12 = sphi 0, %s16
          %p13 = scmp.ge.s32.totalorder %s12, 1
          %s17 = sphi %s0, %s0
          %s18 = sphi %s2, %s2
        $region16: #{reverse.19} parent=12 // loop_header_branch
          %15 = sbr.rel (%p13) target = $region20
        $region17: #{reverse.19} parent=12 // loop_body
          %v19 = vld [vmem:[%s17] sm:%s10]
          %20 = vst [vmem:[%s18] sm:%s10] %v19
          %v21 = vld [vmem:[%s17 + $0x8] sm:%s10]
          %22 = vst [vmem:[%s18 + $0x10] sm:%s10] %v21
          %v23 = vld [vmem:[%s17 + $0x10] sm:%s10]
          %24 = vst [vmem:[%s18 + $0x20] sm:%s10] %v23
          %v25 = vld [vmem:[%s17 + $0x18] sm:%s10]
          %26 = vst [vmem:[%s18 + $0x30] sm:%s10] %v25
          %v27 = vld [vmem:[%s17 + $0x20] sm:%s10]
          %28 = vst [vmem:[%s18 + $0x40] sm:%s10] %v27
          %v29 = vld [vmem:[%s17 + $0x28] sm:%s10]
          %30 = vst [vmem:[%s18 + $0x50] sm:%s10] %v29
          %v31 = vld [vmem:[%s17 + $0x30] sm:%s10]
          %32 = vst [vmem:[%s18 + $0x60] sm:%s10] %v31
          %v33 = vld [vmem:[%s17 + $0x38] sm:%s10]
          %34 = vst [vmem:[%s18 + $0x70] sm:%s10] %v33
          %v35 = vld [vmem:[%s17 + $0x40] sm:%s10]
          %36 = vst [vmem:[%s18 + $0x80] sm:%s10] %v35
          %v37 = vld [vmem:[%s17 + $0x48] sm:%s10]
          %38 = vst [vmem:[%s18 + $0x90] sm:%s10] %v37
          %v39 = vld [vmem:[%s17 + $0x50] sm:%s10]
          %40 = vst [vmem:[%s18 + $0xa0] sm:%s10] %v39
          %v41 = vld [vmem:[%s17 + $0x58] sm:%s10]
          %42 = vst [vmem:[%s18 + $0xb0] sm:%s10] %v41
          %v43 = vld [vmem:[%s17 + $0x60] sm:%s10]
          %44 = vst [vmem:[%s18 + $0xc0] sm:%s10] %v43
          %v45 = vld [vmem:[%s17 + $0x68] sm:%s10]
          %46 = vst [vmem:[%s18 + $0xd0] sm:%s10] %v45
          %v47 = vld [vmem:[%s17 + $0x70] sm:%s10]
          %48 = vst [vmem:[%s18 + $0xe0] sm:%s10] %v47
          %v49 = vld [vmem:[%s17 + $0x78] sm:%s10]
          %50 = vst [vmem:[%s18 + $0xf0] sm:%s10] %v49
          %v51 = vld [vmem:[%s17 + $0x80] sm:%s10]
          %52 = vst [vmem:[%s18 + $0x100] sm:%s10] %v51
          %v53 = vld [vmem:[%s17 + $0x88] sm:%s10]
          %54 = vst [vmem:[%s18 + $0x110] sm:%s10] %v53
          %v55 = vld [vmem:[%s17 + $0x90] sm:%s10]
          %56 = vst [vmem:[%s18 + $0x120] sm:%s10] %v55
          %v57 = vld [vmem:[%s17 + $0x98] sm:%s10]
          %58 = vst [vmem:[%s18 + $0x130] sm:%s10] %v57
          %v59 = vld [vmem:[%s17 + $0xa0] sm:%s10]
          %60 = vst [vmem:[%s18 + $0x140] sm:%s10] %v59
          %v61 = vld [vmem:[%s17 + $0xa8] sm:%s10]
          %62 = vst [vmem:[%s18 + $0x150] sm:%s10] %v61
          %v63 = vld [vmem:[%s17 + $0xb0] sm:%s10]
          %64 = vst [vmem:[%s18 + $0x160] sm:%s10] %v63
          %v65 = vld [vmem:[%s17 + $0xb8] sm:%s10]
          %66 = vst [vmem:[%s18 + $0x170] sm:%s10] %v65
          %v67 = vld [vmem:[%s17 + $0xc0] sm:%s10]
          %68 = vst [vmem:[%s18 + $0x180] sm:%s10] %v67
          %v69 = vld [vmem:[%s17 + $0xc8] sm:%s10]
          %70 = vst [vmem:[%s18 + $0x190] sm:%s10] %v69
          %v71 = vld [vmem:[%s17 + $0xd0] sm:%s10]
          %72 = vst [vmem:[%s18 + $0x1a0] sm:%s10] %v71
          %v73 = vld [vmem:[%s17 + $0xd8] sm:%s10]
          %74 = vst [vmem:[%s18 + $0x1b0] sm:%s10] %v73
          %v75 = vld [vmem:[%s17 + $0xe0] sm:%s10]
          %76 = vst [vmem:[%s18 + $0x1c0] sm:%s10] %v75
          %v77 = vld [vmem:[%s17 + $0xe8] sm:%s10]
          %78 = vst [vmem:[%s18 + $0x1d0] sm:%s10] %v77
          %v79 = vld [vmem:[%s17 + $0xf0] sm:%s10]
          %80 = vst [vmem:[%s18 + $0x1e0] sm:%s10] %v79
          %v81 = vld [vmem:[%s17 + $0xf8] sm:%s10]
          %82 = vst [vmem:[%s18 + $0x1f0] sm:%s10] %v81
        $region18: #{reverse.19} parent=12 // loop_footer
          %s16 = sadd.s32 1, %s12
        $region19: #{reverse.19} parent=12 // loop_footer_branch
          %11 = sbr.rel target = $region15
        $region20: #{reverse.19} parent=12 // loop_exit
          _
      $region13: #{reverse.19} parent=4 // pred_fallthru
        _
    $region5: #{reverse.19} parent=1 // pred_fallthru
      _
    %159 = vnop
    %s160 = scalar_lea.vmem [#allocation0], 7
    %v161 = vld [vmem:[%s160] ss:$-1 sm:$0xff]
    %v162 = vrot.slane %v161, 1
    %163 = vst [vmem:[#allocation1] sm:$0xff] %v162
    %s164 = scalar_lea.vmem [#allocation0], 8
    %s165 = scalar_lea.vmem %s164, 7 [#allocation0]
    %v166 = vld [vmem:[%s165] ss:$-1 sm:$0xff]
    %v167 = vrot.slane %v166, 1
    %v168 = vlaneseq
    %v169 = vshrl.u32 %v168, 7
    %vm170 = vcmp.lt.s32.totalorder %v169, 7
    %171 = vst.msk [vmem:[#allocation1] sm:$0xff] %vm170, %v167
    %s172 = scalar_lea.vmem [#allocation1], 8
    %s173 = scalar_lea.vmem [#allocation0], 16
    %s174 = scalar_lea.vmem %s173, 7 [#allocation0]
    %v175 = vld [vmem:[%s174] ss:$-1 sm:$0xff]
    %v176 = vrot.slane %v175, 1
    %177 = vst [vmem:[%s172] sm:$0xff] %v176
    %s178 = scalar_lea.vmem %s173, 8 [#allocation0]
    %s179 = scalar_lea.vmem %s178, 7 [#allocation0]
    %v180 = vld [vmem:[%s179] ss:$-1 sm:$0xff]
    %v181 = vrot.slane %v180, 1
    %v182 = vlaneseq
    %v183 = vshrl.u32 %v182, 7
    %vm184 = vcmp.lt.s32.totalorder %v183, 7
    %185 = vst.msk [vmem:[%s172] sm:$0xff] %vm184, %v181
    %s186 = scalar_lea.vmem [#allocation1], 16
    %s187 = scalar_lea.vmem [#allocation0], 32
    %s188 = scalar_lea.vmem %s187, 7 [#allocation0]
    %v189 = vld [vmem:[%s188] ss:$-1 sm:$0xff]
    %v190 = vrot.slane %v189, 1
    %191 = vst [vmem:[%s186] sm:$0xff] %v190
    %s192 = scalar_lea.vmem %s187, 8 [#allocation0]
    %s193 = scalar_lea.vmem %s192, 7 [#allocation0]
    %v194 = vld [vmem:[%s193] ss:$-1 sm:$0xff]
    %v195 = vrot.slane %v194, 1
    %v196 = vlaneseq
    %v197 = vshrl.u32 %v196, 7
    %vm198 = vcmp.lt.s32.totalorder %v197, 7
    %199 = vst.msk [vmem:[%s186] sm:$0xff] %vm198, %v195
    %s200 = scalar_lea.vmem [#allocation1], 24
    %s201 = scalar_lea.vmem [#allocation0], 48
    %s202 = scalar_lea.vmem %s201, 7 [#allocation0]
    %v203 = vld [vmem:[%s202] ss:$-1 sm:$0xff]
    %v204 = vrot.slane %v203, 1
    %205 = vst [vmem:[%s200] sm:$0xff] %v204
    %s206 = scalar_lea.vmem %s201, 8 [#allocation0]
    %s207 = scalar_lea.vmem %s206, 7 [#allocation0]
    %v208 = vld [vmem:[%s207] ss:$-1 sm:$0xff]
    %v209 = vrot.slane %v208, 1
    %v210 = vlaneseq
    %v211 = vshrl.u32 %v210, 7
    %vm212 = vcmp.lt.s32.totalorder %v211, 7
    %213 = vst.msk [vmem:[%s200] sm:$0xff] %vm212, %v209
    %s214 = scalar_lea.vmem [#allocation1], 32
    %s215 = scalar_lea.vmem [#allocation0], 64
    %s216 = scalar_lea.vmem %s215, 7 [#allocation0]
    %v217 = vld [vmem:[%s216] ss:$-1 sm:$0xff]
    %v218 = vrot.slane %v217, 1
    %219 = vst [vmem:[%s214] sm:$0xff] %v218
    %s220 = scalar_lea.vmem %s215, 8 [#allocation0]
    %s221 = scalar_lea.vmem %s220, 7 [#allocation0]
    %v222 = vld [vmem:[%s221] ss:$-1 sm:$0xff]
    %v223 = vrot.slane %v222, 1
    %v224 = vlaneseq
    %v225 = vshrl.u32 %v224, 7
    %vm226 = vcmp.lt.s32.totalorder %v225, 7
    %227 = vst.msk [vmem:[%s214] sm:$0xff] %vm226, %v223
    %s228 = scalar_lea.vmem [#allocation1], 40
    %s229 = scalar_lea.vmem [#allocation0], 80
    %s230 = scalar_lea.vmem %s229, 7 [#allocation0]
    %v231 = vld [vmem:[%s230] ss:$-1 sm:$0xff]
    %v232 = vrot.slane %v231, 1
    %233 = vst [vmem:[%s228] sm:$0xff] %v232
    %s234 = scalar_lea.vmem %s229, 8 [#allocation0]
    %s235 = scalar_lea.vmem %s234, 7 [#allocation0]
    %v236 = vld [vmem:[%s235] ss:$-1 sm:$0xff]
    %v237 = vrot.slane %v236, 1
    %v238 = vlaneseq
    %v239 = vshrl.u32 %v238, 7
    %vm240 = vcmp.lt.s32.totalorder %v239, 7
    %241 = vst.msk [vmem:[%s228] sm:$0xff] %vm240, %v237
    %s242 = scalar_lea.vmem [#allocation1], 48
    %s243 = scalar_lea.vmem [#allocation0], 96
    %s244 = scalar_lea.vmem %s243, 7 [#allocation0]
    %v245 = vld [vmem:[%s244] ss:$-1 sm:$0xff]
    %v246 = vrot.slane %v245, 1
    %247 = vst [vmem:[%s242] sm:$0xff] %v246
    %s248 = scalar_lea.vmem %s243, 8 [#allocation0]
    %s249 = scalar_lea.vmem %s248, 7 [#allocation0]
    %v250 = vld [vmem:[%s249] ss:$-1 sm:$0xff]
    %v251 = vrot.slane %v250, 1
    %v252 = vlaneseq
    %v253 = vshrl.u32 %v252, 7
    %vm254 = vcmp.lt.s32.totalorder %v253, 7
    %255 = vst.msk [vmem:[%s242] sm:$0xff] %vm254, %v251
    %s256 = scalar_lea.vmem [#allocation1], 56
    %s257 = scalar_lea.vmem [#allocation0], 112
    %s258 = scalar_lea.vmem %s257, 7 [#allocation0]
    %v259 = vld [vmem:[%s258] ss:$-1 sm:$0xff]
    %v260 = vrot.slane %v259, 1
    %261 = vst [vmem:[%s256] sm:$0xff] %v260
    %s262 = scalar_lea.vmem %s257, 8 [#allocation0]
    %s263 = scalar_lea.vmem %s262, 7 [#allocation0]
    %v264 = vld [vmem:[%s263] ss:$-1 sm:$0xff]
    %v265 = vrot.slane %v264, 1
    %v266 = vlaneseq
    %v267 = vshrl.u32 %v266, 7
    %vm268 = vcmp.lt.s32.totalorder %v267, 7
    %269 = vst.msk [vmem:[%s256] sm:$0xff] %vm268, %v265
    %s270 = scalar_lea.vmem [#allocation1], 64
    %s271 = scalar_lea.vmem [#allocation0], 128
    %s272 = scalar_lea.vmem %s271, 7 [#allocation0]
    %v273 = vld [vmem:[%s272] ss:$-1 sm:$0xff]
    %v274 = vrot.slane %v273, 1
    %275 = vst [vmem:[%s270] sm:$0xff] %v274
    %s276 = scalar_lea.vmem %s271, 8 [#allocation0]
    %s277 = scalar_lea.vmem %s276, 7 [#allocation0]
    %v278 = vld [vmem:[%s277] ss:$-1 sm:$0xff]
    %v279 = vrot.slane %v278, 1
    %v280 = vlaneseq
    %v281 = vshrl.u32 %v280, 7
    %vm282 = vcmp.lt.s32.totalorder %v281, 7
    %283 = vst.msk [vmem:[%s270] sm:$0xff] %vm282, %v279
    %s284 = scalar_lea.vmem [#allocation1], 72
    %s285 = scalar_lea.vmem [#allocation0], 144
    %s286 = scalar_lea.vmem %s285, 7 [#allocation0]
    %v287 = vld [vmem:[%s286] ss:$-1 sm:$0xff]
    %v288 = vrot.slane %v287, 1
    %289 = vst [vmem:[%s284] sm:$0xff] %v288
    %s290 = scalar_lea.vmem %s285, 8 [#allocation0]
    %s291 = scalar_lea.vmem %s290, 7 [#allocation0]
    %v292 = vld [vmem:[%s291] ss:$-1 sm:$0xff]
    %v293 = vrot.slane %v292, 1
    %v294 = vlaneseq
    %v295 = vshrl.u32 %v294, 7
    %vm296 = vcmp.lt.s32.totalorder %v295, 7
    %297 = vst.msk [vmem:[%s284] sm:$0xff] %vm296, %v293
    %s298 = scalar_lea.vmem [#allocation1], 80
    %s299 = scalar_lea.vmem [#allocation0], 160
    %s300 = scalar_lea.vmem %s299, 7 [#allocation0]
    %v301 = vld [vmem:[%s300] ss:$-1 sm:$0xff]
    %v302 = vrot.slane %v301, 1
    %303 = vst [vmem:[%s298] sm:$0xff] %v302
    %s304 = scalar_lea.vmem %s299, 8 [#allocation0]
    %s305 = scalar_lea.vmem %s304, 7 [#allocation0]
    %v306 = vld [vmem:[%s305] ss:$-1 sm:$0xff]
    %v307 = vrot.slane %v306, 1
    %v308 = vlaneseq
    %v309 = vshrl.u32 %v308, 7
    %vm310 = vcmp.lt.s32.totalorder %v309, 7
    %311 = vst.msk [vmem:[%s298] sm:$0xff] %vm310, %v307
    %s312 = scalar_lea.vmem [#allocation1], 88
    %s313 = scalar_lea.vmem [#allocation0], 176
    %s314 = scalar_lea.vmem %s313, 7 [#allocation0]
    %v315 = vld [vmem:[%s314] ss:$-1 sm:$0xff]
    %v316 = vrot.slane %v315, 1
    %317 = vst [vmem:[%s312] sm:$0xff] %v316
    %s318 = scalar_lea.vmem %s313, 8 [#allocation0]
    %s319 = scalar_lea.vmem %s318, 7 [#allocation0]
    %v320 = vld [vmem:[%s319] ss:$-1 sm:$0xff]
    %v321 = vrot.slane %v320, 1
    %v322 = vlaneseq
    %v323 = vshrl.u32 %v322, 7
    %vm324 = vcmp.lt.s32.totalorder %v323, 7
    %325 = vst.msk [vmem:[%s312] sm:$0xff] %vm324, %v321
    %s326 = scalar_lea.vmem [#allocation1], 96
    %s327 = scalar_lea.vmem [#allocation0], 192
    %s328 = scalar_lea.vmem %s327, 7 [#allocation0]
    %v329 = vld [vmem:[%s328] ss:$-1 sm:$0xff]
    %v330 = vrot.slane %v329, 1
    %331 = vst [vmem:[%s326] sm:$0xff] %v330
    %s332 = scalar_lea.vmem %s327, 8 [#allocation0]
    %s333 = scalar_lea.vmem %s332, 7 [#allocation0]
    %v334 = vld [vmem:[%s333] ss:$-1 sm:$0xff]
    %v335 = vrot.slane %v334, 1
    %v336 = vlaneseq
    %v337 = vshrl.u32 %v336, 7
    %vm338 = vcmp.lt.s32.totalorder %v337, 7
    %339 = vst.msk [vmem:[%s326] sm:$0xff] %vm338, %v335
    %s340 = scalar_lea.vmem [#allocation1], 104
    %s341 = scalar_lea.vmem [#allocation0], 208
    %s342 = scalar_lea.vmem %s341, 7 [#allocation0]
    %v343 = vld [vmem:[%s342] ss:$-1 sm:$0xff]
    %v344 = vrot.slane %v343, 1
    %345 = vst [vmem:[%s340] sm:$0xff] %v344
    %s346 = scalar_lea.vmem %s341, 8 [#allocation0]
    %s347 = scalar_lea.vmem %s346, 7 [#allocation0]
    %v348 = vld [vmem:[%s347] ss:$-1 sm:$0xff]
    %v349 = vrot.slane %v348, 1
    %v350 = vlaneseq
    %v351 = vshrl.u32 %v350, 7
    %vm352 = vcmp.lt.s32.totalorder %v351, 7
    %353 = vst.msk [vmem:[%s340] sm:$0xff] %vm352, %v349
    %s354 = scalar_lea.vmem [#allocation1], 112
    %s355 = scalar_lea.vmem [#allocation0], 224
    %s356 = scalar_lea.vmem %s355, 7 [#allocation0]
    %v357 = vld [vmem:[%s356] ss:$-1 sm:$0xff]
    %v358 = vrot.slane %v357, 1
    %359 = vst [vmem:[%s354] sm:$0xff] %v358
    %s360 = scalar_lea.vmem %s355, 8 [#allocation0]
    %s361 = scalar_lea.vmem %s360, 7 [#allocation0]
    %v362 = vld [vmem:[%s361] ss:$-1 sm:$0xff]
    %v363 = vrot.slane %v362, 1
    %v364 = vlaneseq
    %v365 = vshrl.u32 %v364, 7
    %vm366 = vcmp.lt.s32.totalorder %v365, 7
    %367 = vst.msk [vmem:[%s354] sm:$0xff] %vm366, %v363
    %s368 = scalar_lea.vmem [#allocation1], 120
    %s369 = scalar_lea.vmem [#allocation0], 240
    %s370 = scalar_lea.vmem %s369, 7 [#allocation0]
    %v371 = vld [vmem:[%s370] ss:$-1 sm:$0xff]
    %v372 = vrot.slane %v371, 1
    %373 = vst [vmem:[%s368] sm:$0xff] %v372
    %s374 = scalar_lea.vmem %s369, 8 [#allocation0]
    %s375 = scalar_lea.vmem %s374, 7 [#allocation0]
    %v376 = vld [vmem:[%s375] ss:$-1 sm:$0xff]
    %v377 = vrot.slane %v376, 1
    %v378 = vlaneseq
    %v379 = vshrl.u32 %v378, 7
    %vm380 = vcmp.lt.s32.totalorder %v379, 7
    %381 = vst.msk [vmem:[%s368] sm:$0xff] %vm380, %v377
    %s382 = scalar_lea.vmem [#allocation1], 128
    %s383 = scalar_lea.vmem [#allocation0], 256
    %s384 = scalar_lea.vmem %s383, 7 [#allocation0]
    %v385 = vld [vmem:[%s384] ss:$-1 sm:$0xff]
    %v386 = vrot.slane %v385, 1
    %387 = vst [vmem:[%s382] sm:$0xff] %v386
    %s388 = scalar_lea.vmem %s383, 8 [#allocation0]
    %s389 = scalar_lea.vmem %s388, 7 [#allocation0]
    %v390 = vld [vmem:[%s389] ss:$-1 sm:$0xff]
    %v391 = vrot.slane %v390, 1
    %v392 = vlaneseq
    %v393 = vshrl.u32 %v392, 7
    %vm394 = vcmp.lt.s32.totalorder %v393, 7
    %395 = vst.msk [vmem:[%s382] sm:$0xff] %vm394, %v391
    %s396 = scalar_lea.vmem [#allocation1], 136
    %s397 = scalar_lea.vmem [#allocation0], 272
    %s398 = scalar_lea.vmem %s397, 7 [#allocation0]
    %v399 = vld [vmem:[%s398] ss:$-1 sm:$0xff]
    %v400 = vrot.slane %v399, 1
    %401 = vst [vmem:[%s396] sm:$0xff] %v400
    %s402 = scalar_lea.vmem %s397, 8 [#allocation0]
    %s403 = scalar_lea.vmem %s402, 7 [#allocation0]
    %v404 = vld [vmem:[%s403] ss:$-1 sm:$0xff]
    %v405 = vrot.slane %v404, 1
    %v406 = vlaneseq
    %v407 = vshrl.u32 %v406, 7
    %vm408 = vcmp.lt.s32.totalorder %v407, 7
    %409 = vst.msk [vmem:[%s396] sm:$0xff] %vm408, %v405
    %s410 = scalar_lea.vmem [#allocation1], 144
    %s411 = scalar_lea.vmem [#allocation0], 288
    %s412 = scalar_lea.vmem %s411, 7 [#allocation0]
    %v413 = vld [vmem:[%s412] ss:$-1 sm:$0xff]
    %v414 = vrot.slane %v413, 1
    %415 = vst [vmem:[%s410] sm:$0xff] %v414
    %s416 = scalar_lea.vmem %s411, 8 [#allocation0]
    %s417 = scalar_lea.vmem %s416, 7 [#allocation0]
    %v418 = vld [vmem:[%s417] ss:$-1 sm:$0xff]
    %v419 = vrot.slane %v418, 1
    %v420 = vlaneseq
    %v421 = vshrl.u32 %v420, 7
    %vm422 = vcmp.lt.s32.totalorder %v421, 7
    %423 = vst.msk [vmem:[%s410] sm:$0xff] %vm422, %v419
    %s424 = scalar_lea.vmem [#allocation1], 152
    %s425 = scalar_lea.vmem [#allocation0], 304
    %s426 = scalar_lea.vmem %s425, 7 [#allocation0]
    %v427 = vld [vmem:[%s426] ss:$-1 sm:$0xff]
    %v428 = vrot.slane %v427, 1
    %429 = vst [vmem:[%s424] sm:$0xff] %v428
    %s430 = scalar_lea.vmem %s425, 8 [#allocation0]
    %s431 = scalar_lea.vmem %s430, 7 [#allocation0]
    %v432 = vld [vmem:[%s431] ss:$-1 sm:$0xff]
    %v433 = vrot.slane %v432, 1
    %v434 = vlaneseq
    %v435 = vshrl.u32 %v434, 7
    %vm436 = vcmp.lt.s32.totalorder %v435, 7
    %437 = vst.msk [vmem:[%s424] sm:$0xff] %vm436, %v433
    %s438 = scalar_lea.vmem [#allocation1], 160
    %s439 = scalar_lea.vmem [#allocation0], 320
    %s440 = scalar_lea.vmem %s439, 7 [#allocation0]
    %v441 = vld [vmem:[%s440] ss:$-1 sm:$0xff]
    %v442 = vrot.slane %v441, 1
    %443 = vst [vmem:[%s438] sm:$0xff] %v442
    %s444 = scalar_lea.vmem %s439, 8 [#allocation0]
    %s445 = scalar_lea.vmem %s444, 7 [#allocation0]
    %v446 = vld [vmem:[%s445] ss:$-1 sm:$0xff]
    %v447 = vrot.slane %v446, 1
    %v448 = vlaneseq
    %v449 = vshrl.u32 %v448, 7
    %vm450 = vcmp.lt.s32.totalorder %v449, 7
    %451 = vst.msk [vmem:[%s438] sm:$0xff] %vm450, %v447
    %s452 = scalar_lea.vmem [#allocation1], 168
    %s453 = scalar_lea.vmem [#allocation0], 336
    %s454 = scalar_lea.vmem %s453, 7 [#allocation0]
    %v455 = vld [vmem:[%s454] ss:$-1 sm:$0xff]
    %v456 = vrot.slane %v455, 1
    %457 = vst [vmem:[%s452] sm:$0xff] %v456
    %s458 = scalar_lea.vmem %s453, 8 [#allocation0]
    %s459 = scalar_lea.vmem %s458, 7 [#allocation0]
    %v460 = vld [vmem:[%s459] ss:$-1 sm:$0xff]
    %v461 = vrot.slane %v460, 1
    %v462 = vlaneseq
    %v463 = vshrl.u32 %v462, 7
    %vm464 = vcmp.lt.s32.totalorder %v463, 7
    %465 = vst.msk [vmem:[%s452] sm:$0xff] %vm464, %v461
    %s466 = scalar_lea.vmem [#allocation1], 176
    %s467 = scalar_lea.vmem [#allocation0], 352
    %s468 = scalar_lea.vmem %s467, 7 [#allocation0]
    %v469 = vld [vmem:[%s468] ss:$-1 sm:$0xff]
    %v470 = vrot.slane %v469, 1
    %471 = vst [vmem:[%s466] sm:$0xff] %v470
    %s472 = scalar_lea.vmem %s467, 8 [#allocation0]
    %s473 = scalar_lea.vmem %s472, 7 [#allocation0]
    %v474 = vld [vmem:[%s473] ss:$-1 sm:$0xff]
    %v475 = vrot.slane %v474, 1
    %v476 = vlaneseq
    %v477 = vshrl.u32 %v476, 7
    %vm478 = vcmp.lt.s32.totalorder %v477, 7
    %479 = vst.msk [vmem:[%s466] sm:$0xff] %vm478, %v475
    %s480 = scalar_lea.vmem [#allocation1], 184
    %s481 = scalar_lea.vmem [#allocation0], 368
    %s482 = scalar_lea.vmem %s481, 7 [#allocation0]
    %v483 = vld [vmem:[%s482] ss:$-1 sm:$0xff]
    %v484 = vrot.slane %v483, 1
    %485 = vst [vmem:[%s480] sm:$0xff] %v484
    %s486 = scalar_lea.vmem %s481, 8 [#allocation0]
    %s487 = scalar_lea.vmem %s486, 7 [#allocation0]
    %v488 = vld [vmem:[%s487] ss:$-1 sm:$0xff]
    %v489 = vrot.slane %v488, 1
    %v490 = vlaneseq
    %v491 = vshrl.u32 %v490, 7
    %vm492 = vcmp.lt.s32.totalorder %v491, 7
    %493 = vst.msk [vmem:[%s480] sm:$0xff] %vm492, %v489
    %s494 = scalar_lea.vmem [#allocation1], 192
    %s495 = scalar_lea.vmem [#allocation0], 384
    %s496 = scalar_lea.vmem %s495, 7 [#allocation0]
    %v497 = vld [vmem:[%s496] ss:$-1 sm:$0xff]
    %v498 = vrot.slane %v497, 1
    %499 = vst [vmem:[%s494] sm:$0xff] %v498
    %s500 = scalar_lea.vmem %s495, 8 [#allocation0]
    %s501 = scalar_lea.vmem %s500, 7 [#allocation0]
    %v502 = vld [vmem:[%s501] ss:$-1 sm:$0xff]
    %v503 = vrot.slane %v502, 1
    %v504 = vlaneseq
    %v505 = vshrl.u32 %v504, 7
    %vm506 = vcmp.lt.s32.totalorder %v505, 7
    %507 = vst.msk [vmem:[%s494] sm:$0xff] %vm506, %v503
    %s508 = scalar_lea.vmem [#allocation1], 200
    %s509 = scalar_lea.vmem [#allocation0], 400
    %s510 = scalar_lea.vmem %s509, 7 [#allocation0]
    %v511 = vld [vmem:[%s510] ss:$-1 sm:$0xff]
    %v512 = vrot.slane %v511, 1
    %513 = vst [vmem:[%s508] sm:$0xff] %v512
    %s514 = scalar_lea.vmem %s509, 8 [#allocation0]
    %s515 = scalar_lea.vmem %s514, 7 [#allocation0]
    %v516 = vld [vmem:[%s515] ss:$-1 sm:$0xff]
    %v517 = vrot.slane %v516, 1
    %v518 = vlaneseq
    %v519 = vshrl.u32 %v518, 7
    %vm520 = vcmp.lt.s32.totalorder %v519, 7
    %521 = vst.msk [vmem:[%s508] sm:$0xff] %vm520, %v517
    %s522 = scalar_lea.vmem [#allocation1], 208
    %s523 = scalar_lea.vmem [#allocation0], 416
    %s524 = scalar_lea.vmem %s523, 7 [#allocation0]
    %v525 = vld [vmem:[%s524] ss:$-1 sm:$0xff]
    %v526 = vrot.slane %v525, 1
    %527 = vst [vmem:[%s522] sm:$0xff] %v526
    %s528 = scalar_lea.vmem %s523, 8 [#allocation0]
    %s529 = scalar_lea.vmem %s528, 7 [#allocation0]
    %v530 = vld [vmem:[%s529] ss:$-1 sm:$0xff]
    %v531 = vrot.slane %v530, 1
    %v532 = vlaneseq
    %v533 = vshrl.u32 %v532, 7
    %vm534 = vcmp.lt.s32.totalorder %v533, 7
    %535 = vst.msk [vmem:[%s522] sm:$0xff] %vm534, %v531
    %s536 = scalar_lea.vmem [#allocation1], 216
    %s537 = scalar_lea.vmem [#allocation0], 432
    %s538 = scalar_lea.vmem %s537, 7 [#allocation0]
    %v539 = vld [vmem:[%s538] ss:$-1 sm:$0xff]
    %v540 = vrot.slane %v539, 1
    %541 = vst [vmem:[%s536] sm:$0xff] %v540
    %s542 = scalar_lea.vmem %s537, 8 [#allocation0]
    %s543 = scalar_lea.vmem %s542, 7 [#allocation0]
    %v544 = vld [vmem:[%s543] ss:$-1 sm:$0xff]
    %v545 = vrot.slane %v544, 1
    %v546 = vlaneseq
    %v547 = vshrl.u32 %v546, 7
    %vm548 = vcmp.lt.s32.totalorder %v547, 7
    %549 = vst.msk [vmem:[%s536] sm:$0xff] %vm548, %v545
    %s550 = scalar_lea.vmem [#allocation1], 224
    %s551 = scalar_lea.vmem [#allocation0], 448
    %s552 = scalar_lea.vmem %s551, 7 [#allocation0]
    %v553 = vld [vmem:[%s552] ss:$-1 sm:$0xff]
    %v554 = vrot.slane %v553, 1
    %555 = vst [vmem:[%s550] sm:$0xff] %v554
    %s556 = scalar_lea.vmem %s551, 8 [#allocation0]
    %s557 = scalar_lea.vmem %s556, 7 [#allocation0]
    %v558 = vld [vmem:[%s557] ss:$-1 sm:$0xff]
    %v559 = vrot.slane %v558, 1
    %v560 = vlaneseq
    %v561 = vshrl.u32 %v560, 7
    %vm562 = vcmp.lt.s32.totalorder %v561, 7
    %563 = vst.msk [vmem:[%s550] sm:$0xff] %vm562, %v559
    %s564 = scalar_lea.vmem [#allocation1], 232
    %s565 = scalar_lea.vmem [#allocation0], 464
    %s566 = scalar_lea.vmem %s565, 7 [#allocation0]
    %v567 = vld [vmem:[%s566] ss:$-1 sm:$0xff]
    %v568 = vrot.slane %v567, 1
    %569 = vst [vmem:[%s564] sm:$0xff] %v568
    %s570 = scalar_lea.vmem %s565, 8 [#allocation0]
    %s571 = scalar_lea.vmem %s570, 7 [#allocation0]
    %v572 = vld [vmem:[%s571] ss:$-1 sm:$0xff]
    %v573 = vrot.slane %v572, 1
    %v574 = vlaneseq
    %v575 = vshrl.u32 %v574, 7
    %vm576 = vcmp.lt.s32.totalorder %v575, 7
    %577 = vst.msk [vmem:[%s564] sm:$0xff] %vm576, %v573
    %s578 = scalar_lea.vmem [#allocation1], 240
    %s579 = scalar_lea.vmem [#allocation0], 480
    %s580 = scalar_lea.vmem %s579, 7 [#allocation0]
    %v581 = vld [vmem:[%s580] ss:$-1 sm:$0xff]
    %v582 = vrot.slane %v581, 1
    %583 = vst [vmem:[%s578] sm:$0xff] %v582
    %s584 = scalar_lea.vmem %s579, 8 [#allocation0]
    %s585 = scalar_lea.vmem %s584, 7 [#allocation0]
    %v586 = vld [vmem:[%s585] ss:$-1 sm:$0xff]
    %v587 = vrot.slane %v586, 1
    %v588 = vlaneseq
    %v589 = vshrl.u32 %v588, 7
    %vm590 = vcmp.lt.s32.totalorder %v589, 7
    %591 = vst.msk [vmem:[%s578] sm:$0xff] %vm590, %v587
    %s592 = scalar_lea.vmem [#allocation1], 248
    %s593 = scalar_lea.vmem [#allocation0], 496
    %s594 = scalar_lea.vmem %s593, 7 [#allocation0]
    %v595 = vld [vmem:[%s594] ss:$-1 sm:$0xff]
    %v596 = vrot.slane %v595, 1
    %597 = vst [vmem:[%s592] sm:$0xff] %v596
    %s598 = scalar_lea.vmem %s593, 8 [#allocation0]
    %s599 = scalar_lea.vmem %s598, 7 [#allocation0]
    %v600 = vld [vmem:[%s599] ss:$-1 sm:$0xff]
    %v601 = vrot.slane %v600, 1
    %v602 = vlaneseq
    %v603 = vshrl.u32 %v602, 7
    %vm604 = vcmp.lt.s32.totalorder %v603, 7
    %605 = vst.msk [vmem:[%s592] sm:$0xff] %vm604, %v601
    // Predicated region
    $region36: #{reverse.19} parent=1 // pred_check
      _
    $region37: #{reverse.19} parent=1 // pred_check_branch
      %607 = sbr.rel (0) target = $region39
    $region38: #{reverse.19} parent=1 // pred_region
      // Predicated region
      $region40: #{reverse.19} parent=38 // pred_check
        _
      $region41: #{reverse.19} parent=38 // pred_check_branch
        %609 = sbr.rel (0) target = $region43
      $region42: #{reverse.19} parent=38 // pred_region
        // Predicated region
        $region55: #{reverse.19} parent=42 // pred_check
          _
        $region56: #{reverse.19} parent=42 // pred_check_branch
          %687 = sbr.rel (0) target = $region58
        $region57: #{reverse.19} parent=42 // pred_region
          loop: start=0, step=1, limit=1
          $region59: #{reverse.19} parent=57 // loop_pre_header
            _
          $region60: #{reverse.19} parent=57 // loop_header
            %s689 = sphi 0, %s693
            %p690 = scmp.ge.s32.totalorder %s689, 1
            %s694 = sphi [#allocation1], [#allocation1]
            %s695 = sphi %s1, %s1
          $region61: #{reverse.19} parent=57 // loop_header_branch
            %692 = sbr.rel (%p690) target = $region65
          $region62: #{reverse.19} parent=57 // loop_body
            %v696 = vld [vmem:[%s694] sm:$0xff]
            %697 = vst [vmem:[%s695] sm:$0xff] %v696
            %v698 = vld [vmem:[%s694 + $0x8] sm:$0xff]
            %699 = vst [vmem:[%s695 + $0x8] sm:$0xff] %v698
            %v700 = vld [vmem:[%s694 + $0x10] sm:$0xff]
            %701 = vst [vmem:[%s695 + $0x10] sm:$0xff] %v700
            %v702 = vld [vmem:[%s694 + $0x18] sm:$0xff]
            %703 = vst [vmem:[%s695 + $0x18] sm:$0xff] %v702
            %v704 = vld [vmem:[%s694 + $0x20] sm:$0xff]
            %705 = vst [vmem:[%s695 + $0x20] sm:$0xff] %v704
            %v706 = vld [vmem:[%s694 + $0x28] sm:$0xff]
            %707 = vst [vmem:[%s695 + $0x28] sm:$0xff] %v706
            %v708 = vld [vmem:[%s694 + $0x30] sm:$0xff]
            %709 = vst [vmem:[%s695 + $0x30] sm:$0xff] %v708
            %v710 = vld [vmem:[%s694 + $0x38] sm:$0xff]
            %711 = vst [vmem:[%s695 + $0x38] sm:$0xff] %v710
            %v712 = vld [vmem:[%s694 + $0x40] sm:$0xff]
            %713 = vst [vmem:[%s695 + $0x40] sm:$0xff] %v712
            %v714 = vld [vmem:[%s694 + $0x48] sm:$0xff]
            %715 = vst [vmem:[%s695 + $0x48] sm:$0xff] %v714
            %v716 = vld [vmem:[%s694 + $0x50] sm:$0xff]
            %717 = vst [vmem:[%s695 + $0x50] sm:$0xff] %v716
            %v718 = vld [vmem:[%s694 + $0x58] sm:$0xff]
            %719 = vst [vmem:[%s695 + $0x58] sm:$0xff] %v718
            %v720 = vld [vmem:[%s694 + $0x60] sm:$0xff]
            %721 = vst [vmem:[%s695 + $0x60] sm:$0xff] %v720
            %v722 = vld [vmem:[%s694 + $0x68] sm:$0xff]
            %723 = vst [vmem:[%s695 + $0x68] sm:$0xff] %v722
            %v724 = vld [vmem:[%s694 + $0x70] sm:$0xff]
            %725 = vst [vmem:[%s695 + $0x70] sm:$0xff] %v724
            %v726 = vld [vmem:[%s694 + $0x78] sm:$0xff]
            %727 = vst [vmem:[%s695 + $0x78] sm:$0xff] %v726
            %v728 = vld [vmem:[%s694 + $0x80] sm:$0xff]
            %729 = vst [vmem:[%s695 + $0x80] sm:$0xff] %v728
            %v730 = vld [vmem:[%s694 + $0x88] sm:$0xff]
            %731 = vst [vmem:[%s695 + $0x88] sm:$0xff] %v730
            %v732 = vld [vmem:[%s694 + $0x90] sm:$0xff]
            %733 = vst [vmem:[%s695 + $0x90] sm:$0xff] %v732
            %v734 = vld [vmem:[%s694 + $0x98] sm:$0xff]
            %735 = vst [vmem:[%s695 + $0x98] sm:$0xff] %v734
            %v736 = vld [vmem:[%s694 + $0xa0] sm:$0xff]
            %737 = vst [vmem:[%s695 + $0xa0] sm:$0xff] %v736
            %v738 = vld [vmem:[%s694 + $0xa8] sm:$0xff]
            %739 = vst [vmem:[%s695 + $0xa8] sm:$0xff] %v738
            %v740 = vld [vmem:[%s694 + $0xb0] sm:$0xff]
            %741 = vst [vmem:[%s695 + $0xb0] sm:$0xff] %v740
            %v742 = vld [vmem:[%s694 + $0xb8] sm:$0xff]
            %743 = vst [vmem:[%s695 + $0xb8] sm:$0xff] %v742
            %v744 = vld [vmem:[%s694 + $0xc0] sm:$0xff]
            %745 = vst [vmem:[%s695 + $0xc0] sm:$0xff] %v744
            %v746 = vld [vmem:[%s694 + $0xc8] sm:$0xff]
            %747 = vst [vmem:[%s695 + $0xc8] sm:$0xff] %v746
            %v748 = vld [vmem:[%s694 + $0xd0] sm:$0xff]
            %749 = vst [vmem:[%s695 + $0xd0] sm:$0xff] %v748
            %v750 = vld [vmem:[%s694 + $0xd8] sm:$0xff]
            %751 = vst [vmem:[%s695 + $0xd8] sm:$0xff] %v750
            %v752 = vld [vmem:[%s694 + $0xe0] sm:$0xff]
            %753 = vst [vmem:[%s695 + $0xe0] sm:$0xff] %v752
            %v754 = vld [vmem:[%s694 + $0xe8] sm:$0xff]
            %755 = vst [vmem:[%s695 + $0xe8] sm:$0xff] %v754
            %v756 = vld [vmem:[%s694 + $0xf0] sm:$0xff]
            %757 = vst [vmem:[%s695 + $0xf0] sm:$0xff] %v756
            %v758 = vld [vmem:[%s694 + $0xf8] sm:$0xff]
            %759 = vst [vmem:[%s695 + $0xf8] sm:$0xff] %v758
          $region63: #{reverse.19} parent=57 // loop_footer
            %s693 = sadd.s32 1, %s689
          $region64: #{reverse.19} parent=57 // loop_footer_branch
            %688 = sbr.rel target = $region60
          $region65: #{reverse.19} parent=57 // loop_exit
            _
        $region58: #{reverse.19} parent=42 // pred_fallthru
          _
        // Predicated region
        $region66: #{reverse.19} parent=42 // pred_check
          _
        $region67: #{reverse.19} parent=42 // pred_check_branch
          %761 = sbr.rel target = $region69
        $region68: #{reverse.19} parent=42 // pred_region
          _
        $region69: #{reverse.19} parent=42 // pred_fallthru
          _
      $region43: #{reverse.19} parent=38 // pred_fallthru
        _
      // Predicated region
      $region44: #{reverse.19} parent=38 // pred_check
        _
      $region45: #{reverse.19} parent=38 // pred_check_branch
        %611 = sbr.rel target = $region47
      $region46: #{reverse.19} parent=38 // pred_region
        %s613 = ssub.s32 256, 1
        loop: start=0, step=1, limit=1
        $region48: #{reverse.19} parent=46 // loop_pre_header
          _
        $region49: #{reverse.19} parent=46 // loop_header
          %s615 = sphi 0, %s619
          %p616 = scmp.ge.s32.totalorder %s615, 1
          %s620 = sphi [#allocation1], [#allocation1]
          %s621 = sphi %s1, %s1
        $region50: #{reverse.19} parent=46 // loop_header_branch
          %618 = sbr.rel (%p616) target = $region54
        $region51: #{reverse.19} parent=46 // loop_body
          %v622 = vld [vmem:[%s620] sm:%s613]
          %623 = vst [vmem:[%s621] sm:%s613] %v622
          %v624 = vld [vmem:[%s620 + $0x8] sm:%s613]
          %625 = vst [vmem:[%s621 + $0x8] sm:%s613] %v624
          %v626 = vld [vmem:[%s620 + $0x10] sm:%s613]
          %627 = vst [vmem:[%s621 + $0x10] sm:%s613] %v626
          %v628 = vld [vmem:[%s620 + $0x18] sm:%s613]
          %629 = vst [vmem:[%s621 + $0x18] sm:%s613] %v628
          %v630 = vld [vmem:[%s620 + $0x20] sm:%s613]
          %631 = vst [vmem:[%s621 + $0x20] sm:%s613] %v630
          %v632 = vld [vmem:[%s620 + $0x28] sm:%s613]
          %633 = vst [vmem:[%s621 + $0x28] sm:%s613] %v632
          %v634 = vld [vmem:[%s620 + $0x30] sm:%s613]
          %635 = vst [vmem:[%s621 + $0x30] sm:%s613] %v634
          %v636 = vld [vmem:[%s620 + $0x38] sm:%s613]
          %637 = vst [vmem:[%s621 + $0x38] sm:%s613] %v636
          %v638 = vld [vmem:[%s620 + $0x40] sm:%s613]
          %639 = vst [vmem:[%s621 + $0x40] sm:%s613] %v638
          %v640 = vld [vmem:[%s620 + $0x48] sm:%s613]
          %641 = vst [vmem:[%s621 + $0x48] sm:%s613] %v640
          %v642 = vld [vmem:[%s620 + $0x50] sm:%s613]
          %643 = vst [vmem:[%s621 + $0x50] sm:%s613] %v642
          %v644 = vld [vmem:[%s620 + $0x58] sm:%s613]
          %645 = vst [vmem:[%s621 + $0x58] sm:%s613] %v644
          %v646 = vld [vmem:[%s620 + $0x60] sm:%s613]
          %647 = vst [vmem:[%s621 + $0x60] sm:%s613] %v646
          %v648 = vld [vmem:[%s620 + $0x68] sm:%s613]
          %649 = vst [vmem:[%s621 + $0x68] sm:%s613] %v648
          %v650 = vld [vmem:[%s620 + $0x70] sm:%s613]
          %651 = vst [vmem:[%s621 + $0x70] sm:%s613] %v650
          %v652 = vld [vmem:[%s620 + $0x78] sm:%s613]
          %653 = vst [vmem:[%s621 + $0x78] sm:%s613] %v652
          %v654 = vld [vmem:[%s620 + $0x80] sm:%s613]
          %655 = vst [vmem:[%s621 + $0x80] sm:%s613] %v654
          %v656 = vld [vmem:[%s620 + $0x88] sm:%s613]
          %657 = vst [vmem:[%s621 + $0x88] sm:%s613] %v656
          %v658 = vld [vmem:[%s620 + $0x90] sm:%s613]
          %659 = vst [vmem:[%s621 + $0x90] sm:%s613] %v658
          %v660 = vld [vmem:[%s620 + $0x98] sm:%s613]
          %661 = vst [vmem:[%s621 + $0x98] sm:%s613] %v660
          %v662 = vld [vmem:[%s620 + $0xa0] sm:%s613]
          %663 = vst [vmem:[%s621 + $0xa0] sm:%s613] %v662
          %v664 = vld [vmem:[%s620 + $0xa8] sm:%s613]
          %665 = vst [vmem:[%s621 + $0xa8] sm:%s613] %v664
          %v666 = vld [vmem:[%s620 + $0xb0] sm:%s613]
          %667 = vst [vmem:[%s621 + $0xb0] sm:%s613] %v666
          %v668 = vld [vmem:[%s620 + $0xb8] sm:%s613]
          %669 = vst [vmem:[%s621 + $0xb8] sm:%s613] %v668
          %v670 = vld [vmem:[%s620 + $0xc0] sm:%s613]
          %671 = vst [vmem:[%s621 + $0xc0] sm:%s613] %v670
          %v672 = vld [vmem:[%s620 + $0xc8] sm:%s613]
          %673 = vst [vmem:[%s621 + $0xc8] sm:%s613] %v672
          %v674 = vld [vmem:[%s620 + $0xd0] sm:%s613]
          %675 = vst [vmem:[%s621 + $0xd0] sm:%s613] %v674
          %v676 = vld [vmem:[%s620 + $0xd8] sm:%s613]
          %677 = vst [vmem:[%s621 + $0xd8] sm:%s613] %v676
          %v678 = vld [vmem:[%s620 + $0xe0] sm:%s613]
          %679 = vst [vmem:[%s621 + $0xe0] sm:%s613] %v678
          %v680 = vld [vmem:[%s620 + $0xe8] sm:%s613]
          %681 = vst [vmem:[%s621 + $0xe8] sm:%s613] %v680
          %v682 = vld [vmem:[%s620 + $0xf0] sm:%s613]
          %683 = vst [vmem:[%s621 + $0xf0] sm:%s613] %v682
          %v684 = vld [vmem:[%s620 + $0xf8] sm:%s613]
          %685 = vst [vmem:[%s621 + $0xf8] sm:%s613] %v684
        $region52: #{reverse.19} parent=46 // loop_footer
          %s619 = sadd.s32 1, %s615
        $region53: #{reverse.19} parent=46 // loop_footer_branch
          %614 = sbr.rel target = $region49
        $region54: #{reverse.19} parent=46 // loop_exit
          _
      $region47: #{reverse.19} parent=38 // pred_fallthru
        _
    $region39: #{reverse.19} parent=1 // pred_fallthru
      _
    %762 = vnop

// kernel: fno_forward.16
$region0: #{fno_forward.16}
  #allocation0 [shape = 'u32[]', space=smem, size = 0x4, offset = 0x4, fixed_abs, tag = 'smem constant byte address 0x4 - core index']
  #allocation1 [shape = 'u32[144,128]{1,0:T(1,128)}', space=vmem, size = 0x12000, scoped, tag = 'internal scratch']
  %s0 = inlined_call_operand.vmem [shape: bf16[8,32,64], index: 0, kind: input, shape index: {}]
  %s1 = inlined_call_operand.vmem [shape: bf16[8,64,64], index: 1, kind: input, shape index: {}]
  %s2 = inlined_call_operand.vmem [shape: f32[8,32,64], index: 2, kind: output, shape index: {}]
  %s3 = sld [smem:[#allocation0]]
  $region18: #{fno_forward.16} parent=0
    _
  %s5 = ssub.s32 1, %s3
  %s6 = scalar_select 0, %s5, %s3
  // Predicated region
  $region2: #{fno_forward.16} parent=0 // pred_check
    _
  $region3: #{fno_forward.16} parent=0 // pred_check_branch
    %8 = sbr.rel (0) target = $region5
  $region4: #{fno_forward.16} parent=0 // pred_region
    _
  $region5: #{fno_forward.16} parent=0 // pred_fallthru
    _
  // Predicated region
  $region6: #{fno_forward.16} parent=0 // pred_check
    _
  $region7: #{fno_forward.16} parent=0 // pred_check_branch
    %10 = sbr.rel (0) target = $region9
  $region8: #{fno_forward.16} parent=0 // pred_region
    _
  $region9: #{fno_forward.16} parent=0 // pred_fallthru
    _
  %v12 = vld [vmem:[%s0] sm:$0xf]
  %v13 = vld [vmem:[%s0 + $0x4] sm:$0xf]
  %v14 = vld [vmem:[%s0 + $0x8] sm:$0xf]
  %v15 = vld [vmem:[%s0 + $0xc] sm:$0xf]
  %v16 = vld [vmem:[%s0 + $0x10] sm:$0xf]
  %v17 = vld [vmem:[%s0 + $0x14] sm:$0xf]
  %v18 = vld [vmem:[%s0 + $0x18] sm:$0xf]
  %v19 = vld [vmem:[%s0 + $0x1c] sm:$0xf]
  %v20 = vld [vmem:[%s0 + $0x20] sm:$0xf]
  %v21 = vld [vmem:[%s0 + $0x24] sm:$0xf]
  %v22 = vld [vmem:[%s0 + $0x28] sm:$0xf]
  %v23 = vld [vmem:[%s0 + $0x2c] sm:$0xf]
  %v24 = vld [vmem:[%s0 + $0x30] sm:$0xf]
  %v25 = vld [vmem:[%s0 + $0x34] sm:$0xf]
  %v26 = vld [vmem:[%s0 + $0x38] sm:$0xf]
  %v27 = vld [vmem:[%s0 + $0x3c] sm:$0xf]
  %v28 = vld [vmem:[%s0 + $0x40] sm:$0xf]
  %v29 = vld [vmem:[%s0 + $0x44] sm:$0xf]
  %v30 = vld [vmem:[%s0 + $0x48] sm:$0xf]
  %v31 = vld [vmem:[%s0 + $0x4c] sm:$0xf]
  %v32 = vld [vmem:[%s0 + $0x50] sm:$0xf]
  %v33 = vld [vmem:[%s0 + $0x54] sm:$0xf]
  %v34 = vld [vmem:[%s0 + $0x58] sm:$0xf]
  %v35 = vld [vmem:[%s0 + $0x5c] sm:$0xf]
  %v36 = vld [vmem:[%s0 + $0x60] sm:$0xf]
  %v37 = vld [vmem:[%s0 + $0x64] sm:$0xf]
  %v38 = vld [vmem:[%s0 + $0x68] sm:$0xf]
  %v39 = vld [vmem:[%s0 + $0x6c] sm:$0xf]
  %v40 = vld [vmem:[%s0 + $0x70] sm:$0xf]
  %v41 = vld [vmem:[%s0 + $0x74] sm:$0xf]
  %v42 = vld [vmem:[%s0 + $0x78] sm:$0xf]
  %v43 = vld [vmem:[%s0 + $0x7c] sm:$0xf]
  %v44 = vld [vmem:[%s1] sm:$0xf]
  %v45 = vld [vmem:[%s1 + $0x4] sm:$0xf]
  %v46 = vld [vmem:[%s1 + $0x8] sm:$0xf]
  %v47 = vld [vmem:[%s1 + $0xc] sm:$0xf]
  %v48 = vld [vmem:[%s1 + $0x10] sm:$0xf]
  %v49 = vld [vmem:[%s1 + $0x14] sm:$0xf]
  %v50 = vld [vmem:[%s1 + $0x18] sm:$0xf]
  %v51 = vld [vmem:[%s1 + $0x1c] sm:$0xf]
  %v52 = vld [vmem:[%s1 + $0x20] sm:$0xf]
  %v53 = vld [vmem:[%s1 + $0x24] sm:$0xf]
  %v54 = vld [vmem:[%s1 + $0x28] sm:$0xf]
  %v55 = vld [vmem:[%s1 + $0x2c] sm:$0xf]
  %v56 = vld [vmem:[%s1 + $0x30] sm:$0xf]
  %v57 = vld [vmem:[%s1 + $0x34] sm:$0xf]
  %v58 = vld [vmem:[%s1 + $0x38] sm:$0xf]
  %v59 = vld [vmem:[%s1 + $0x3c] sm:$0xf]
  %v60 = vld [vmem:[%s1 + $0x40] sm:$0xf]
  %v61 = vld [vmem:[%s1 + $0x44] sm:$0xf]
  %v62 = vld [vmem:[%s1 + $0x48] sm:$0xf]
  %v63 = vld [vmem:[%s1 + $0x4c] sm:$0xf]
  %v64 = vld [vmem:[%s1 + $0x50] sm:$0xf]
  %v65 = vld [vmem:[%s1 + $0x54] sm:$0xf]
  %v66 = vld [vmem:[%s1 + $0x58] sm:$0xf]
  %v67 = vld [vmem:[%s1 + $0x5c] sm:$0xf]
  %v68 = vld [vmem:[%s1 + $0x60] sm:$0xf]
  %v69 = vld [vmem:[%s1 + $0x64] sm:$0xf]
  %v70 = vld [vmem:[%s1 + $0x68] sm:$0xf]
  %v71 = vld [vmem:[%s1 + $0x6c] sm:$0xf]
  %v72 = vld [vmem:[%s1 + $0x70] sm:$0xf]
  %v73 = vld [vmem:[%s1 + $0x74] sm:$0xf]
  %v74 = vld [vmem:[%s1 + $0x78] sm:$0xf]
  %v75 = vld [vmem:[%s1 + $0x7c] sm:$0xf]
  %v76 = vld [vmem:[%s1 + $0x80] sm:$0xf]
  %v77 = vld [vmem:[%s1 + $0x84] sm:$0xf]
  %v78 = vld [vmem:[%s1 + $0x88] sm:$0xf]
  %v79 = vld [vmem:[%s1 + $0x8c] sm:$0xf]
  %v80 = vld [vmem:[%s1 + $0x90] sm:$0xf]
  %v81 = vld [vmem:[%s1 + $0x94] sm:$0xf]
  %v82 = vld [vmem:[%s1 + $0x98] sm:$0xf]
  %v83 = vld [vmem:[%s1 + $0x9c] sm:$0xf]
  %v84 = vld [vmem:[%s1 + $0xa0] sm:$0xf]
  %v85 = vld [vmem:[%s1 + $0xa4] sm:$0xf]
  %v86 = vld [vmem:[%s1 + $0xa8] sm:$0xf]
  %v87 = vld [vmem:[%s1 + $0xac] sm:$0xf]
  %v88 = vld [vmem:[%s1 + $0xb0] sm:$0xf]
  %v89 = vld [vmem:[%s1 + $0xb4] sm:$0xf]
  %v90 = vld [vmem:[%s1 + $0xb8] sm:$0xf]
  %v91 = vld [vmem:[%s1 + $0xbc] sm:$0xf]
  %v92 = vld [vmem:[%s1 + $0xc0] sm:$0xf]
  %v93 = vld [vmem:[%s1 + $0xc4] sm:$0xf]
  %v94 = vld [vmem:[%s1 + $0xc8] sm:$0xf]
  %v95 = vld [vmem:[%s1 + $0xcc] sm:$0xf]
  %v96 = vld [vmem:[%s1 + $0xd0] sm:$0xf]
  %v97 = vld [vmem:[%s1 + $0xd4] sm:$0xf]
  %v98 = vld [vmem:[%s1 + $0xd8] sm:$0xf]
  %v99 = vld [vmem:[%s1 + $0xdc] sm:$0xf]
  %v100 = vld [vmem:[%s1 + $0xe0] sm:$0xf]
  %v101 = vld [vmem:[%s1 + $0xe4] sm:$0xf]
  %v102 = vld [vmem:[%s1 + $0xe8] sm:$0xf]
  %v103 = vld [vmem:[%s1 + $0xec] sm:$0xf]
  %v104 = vld [vmem:[%s1 + $0xf0] sm:$0xf]
  %v105 = vld [vmem:[%s1 + $0xf4] sm:$0xf]
  %v106 = vld [vmem:[%s1 + $0xf8] sm:$0xf]
  %v107 = vld [vmem:[%s1 + $0xfc] sm:$0xf]
  %v112 = vunpack.c.l.b16 %v12
  %v113 = vunpack.c.l.b16 %v13
  %v114 = vunpack.c.l.b16 %v14
  %v115 = vunpack.c.l.b16 %v15
  %v116 = vpack.c.b16 %v113, %v112
  %v117 = vpack.c.b16 %v115, %v114
  %v126 = vunpack.c.l.b16 %v44
  %v127 = vunpack.c.l.b16 %v45
  %v128 = vunpack.c.l.b16 %v46
  %v129 = vunpack.c.l.b16 %v47
  %v130 = vunpack.c.l.b16 %v48
  %v131 = vunpack.c.l.b16 %v49
  %v132 = vunpack.c.l.b16 %v50
  %v133 = vunpack.c.l.b16 %v51
  %v134 = vpack.c.b16 %v127, %v126
  %v135 = vpack.c.b16 %v129, %v128
  %v136 = vpack.c.b16 %v131, %v130
  %v137 = vpack.c.b16 %v133, %v132
  %vm142 = vcmask 523264
  %v144 = vsel %vm142, %v116, 0
  %v147 = vsel %vm142, %v117, 0
  %149 = vmatprep.subr.bf16.mxu0 0
  %150 = vmatpush1.bf16.msra.mxu0 0
  %151 = vmatprep.subr.bf16.mxu0 0
  %152 = vmatpush1.bf16.msra.mxu0 0
  %153 = vmatprep.subr.bf16.mxu0 0
  %154 = vmatpush1.bf16.msra.mxu0 0
  %155 = vmatprep.subr.bf16.mxu0 0
  %156 = vmatpush1.bf16.msra.mxu0 0
  %157 = vmatprep.subr.bf16.mxu0 0
  %158 = vmatpush1.bf16.msra.mxu0 %v137
  %159 = vmatprep.subr.bf16.mxu0 0
  %160 = vmatpush1.bf16.msra.mxu0 %v136
  %161 = vmatprep.subr.bf16.mxu0 0
  %162 = vmatpush1.bf16.msra.mxu0 %v135
  %163 = vmatprep.subr.bf16.mxu0 0
  %164 = vmatpush1.bf16.msra.mxu0 %v134
  %165 = vmatprep.subr.bf16.mxu0 0
  %166 = vmatpush2.bf16.msra.mxu0 0
  %167 = vmatprep.subr.bf16.mxu0 0
  %168 = vmatpush2.bf16.msra.mxu0 0
  %169 = vmatprep.subr.bf16.mxu0 0
  %170 = vmatpush2.bf16.msra.mxu0 0
  %171 = vmatprep.subr.bf16.mxu0 0
  %172 = vmatpush2.bf16.msra.mxu0 0
  %173 = vmatprep.subr.bf16.mxu0 0
  %174 = vmatpush2.bf16.msra.mxu0 0
  %175 = vmatprep.subr.bf16.mxu0 0
  %176 = vmatpush2.bf16.msra.mxu0 0
  %177 = vmatprep.subr.bf16.mxu0 0
  %178 = vmatpush2.bf16.msra.mxu0 0
  %179 = vmatprep.subr.bf16.mxu0 0
  %180 = vmatpush2.bf16.msra.mxu0 0
  %181 = vmatprep.mubr.bf16.mxu0 0
  %182 = vmatmul.mubr.bf16.gmra.mxu0 %v144
  %v183 = vpop.f32.mrf.mxu0
  %v184 = vadd.f32 0.0, %v183
  %v185 = vpop.f32.mrf.mxu0
  %v186 = vpop.f32.mrf.mxu0
  %v187 = vadd.f32 0.0, %v186
  %v188 = vpop.f32.mrf.mxu0
  %189 = vmatprep.mubr.bf16.mxu0 0
  %190 = vmatmul.mubr.bf16.gmra.mxu0 %v147
  %v191 = vpop.f32.mrf.mxu0
  %v192 = vadd.f32 0.0, %v191
  %v193 = vpop.f32.mrf.mxu0
  %v194 = vpop.f32.mrf.mxu0
  %v195 = vadd.f32 0.0, %v194
  %v196 = vpop.f32.mrf.mxu0
  %197 = vdwg.mxu0
  %v202 = vunpack.c.l.b16 %v16
  %v203 = vunpack.c.l.b16 %v17
  %v204 = vunpack.c.l.b16 %v18
  %v205 = vunpack.c.l.b16 %v19
  %v206 = vpack.c.b16 %v203, %v202
  %v207 = vpack.c.b16 %v205, %v204
  %v216 = vunpack.c.l.b16 %v52
  %v217 = vunpack.c.l.b16 %v53
  %v218 = vunpack.c.l.b16 %v54
  %v219 = vunpack.c.l.b16 %v55
  %v220 = vunpack.c.l.b16 %v56
  %v221 = vunpack.c.l.b16 %v57
  %v222 = vunpack.c.l.b16 %v58
  %v223 = vunpack.c.l.b16 %v59
  %v224 = vpack.c.b16 %v217, %v216
  %v225 = vpack.c.b16 %v219, %v218
  %v226 = vpack.c.b16 %v221, %v220
  %v227 = vpack.c.b16 %v223, %v222
  %v233 = vsel %vm142, %v206, 0
  %v236 = vsel %vm142, %v207, 0
  %238 = vmatprep.subr.bf16.mxu0 0
  %239 = vmatpush1.bf16.msra.mxu0 0
  %240 = vmatprep.subr.bf16.mxu0 0
  %241 = vmatpush1.bf16.msra.mxu0 0
  %242 = vmatprep.subr.bf16.mxu0 0
  %243 = vmatpush1.bf16.msra.mxu0 0
  %244 = vmatprep.subr.bf16.mxu0 0
  %245 = vmatpush1.bf16.msra.mxu0 0
  %246 = vmatprep.subr.bf16.mxu0 0
  %247 = vmatpush1.bf16.msra.mxu0 %v227
  %248 = vmatprep.subr.bf16.mxu0 0
  %249 = vmatpush1.bf16.msra.mxu0 %v226
  %250 = vmatprep.subr.bf16.mxu0 0
  %251 = vmatpush1.bf16.msra.mxu0 %v225
  %252 = vmatprep.subr.bf16.mxu0 0
  %253 = vmatpush1.bf16.msra.mxu0 %v224
  %254 = vmatprep.subr.bf16.mxu0 0
  %255 = vmatpush2.bf16.msra.mxu0 0
  %256 = vmatprep.subr.bf16.mxu0 0
  %257 = vmatpush2.bf16.msra.mxu0 0
  %258 = vmatprep.subr.bf16.mxu0 0
  %259 = vmatpush2.bf16.msra.mxu0 0
  %260 = vmatprep.subr.bf16.mxu0 0
  %261 = vmatpush2.bf16.msra.mxu0 0
  %262 = vmatprep.subr.bf16.mxu0 0
  %263 = vmatpush2.bf16.msra.mxu0 0
  %264 = vmatprep.subr.bf16.mxu0 0
  %265 = vmatpush2.bf16.msra.mxu0 0
  %266 = vmatprep.subr.bf16.mxu0 0
  %267 = vmatpush2.bf16.msra.mxu0 0
  %268 = vmatprep.subr.bf16.mxu0 0
  %269 = vmatpush2.bf16.msra.mxu0 0
  %270 = vmatprep.mubr.bf16.mxu0 0
  %271 = vmatmul.mubr.bf16.gmra.mxu0 %v233
  %v272 = vpop.f32.mrf.mxu0
  %v273 = vadd.f32 0.0, %v272
  %v274 = vpop.f32.mrf.mxu0
  %v275 = vpop.f32.mrf.mxu0
  %v276 = vadd.f32 0.0, %v275
  %v277 = vpop.f32.mrf.mxu0
  %278 = vmatprep.mubr.bf16.mxu0 0
  %279 = vmatmul.mubr.bf16.gmra.mxu0 %v236
  %v280 = vpop.f32.mrf.mxu0
  %v281 = vadd.f32 0.0, %v280
  %v282 = vpop.f32.mrf.mxu0
  %v283 = vpop.f32.mrf.mxu0
  %v284 = vadd.f32 0.0, %v283
  %v285 = vpop.f32.mrf.mxu0
  %286 = vdwg.mxu0
  %v291 = vunpack.c.l.b16 %v20
  %v292 = vunpack.c.l.b16 %v21
  %v293 = vunpack.c.l.b16 %v22
  %v294 = vunpack.c.l.b16 %v23
  %v295 = vpack.c.b16 %v292, %v291
  %v296 = vpack.c.b16 %v294, %v293
  %v305 = vunpack.c.l.b16 %v60
  %v306 = vunpack.c.l.b16 %v61
  %v307 = vunpack.c.l.b16 %v62
  %v308 = vunpack.c.l.b16 %v63
  %v309 = vunpack.c.l.b16 %v64
  %v310 = vunpack.c.l.b16 %v65
  %v311 = vunpack.c.l.b16 %v66
  %v312 = vunpack.c.l.b16 %v67
  %v313 = vpack.c.b16 %v306, %v305
  %v314 = vpack.c.b16 %v308, %v307
  %v315 = vpack.c.b16 %v310, %v309
  %v316 = vpack.c.b16 %v312, %v311
  %v322 = vsel %vm142, %v295, 0
  %v325 = vsel %vm142, %v296, 0
  %327 = vmatprep.subr.bf16.mxu0 0
  %328 = vmatpush1.bf16.msra.mxu0 0
  %329 = vmatprep.subr.bf16.mxu0 0
  %330 = vmatpush1.bf16.msra.mxu0 0
  %331 = vmatprep.subr.bf16.mxu0 0
  %332 = vmatpush1.bf16.msra.mxu0 0
  %333 = vmatprep.subr.bf16.mxu0 0
  %334 = vmatpush1.bf16.msra.mxu0 0
  %335 = vmatprep.subr.bf16.mxu0 0
  %336 = vmatpush1.bf16.msra.mxu0 %v316
  %337 = vmatprep.subr.bf16.mxu0 0
  %338 = vmatpush1.bf16.msra.mxu0 %v315
  %339 = vmatprep.subr.bf16.mxu0 0
  %340 = vmatpush1.bf16.msra.mxu0 %v314
  %341 = vmatprep.subr.bf16.mxu0 0
  %342 = vmatpush1.bf16.msra.mxu0 %v313
  %343 = vmatprep.subr.bf16.mxu0 0
  %344 = vmatpush2.bf16.msra.mxu0 0
  %345 = vmatprep.subr.bf16.mxu0 0
  %346 = vmatpush2.bf16.msra.mxu0 0
  %347 = vmatprep.subr.bf16.mxu0 0
  %348 = vmatpush2.bf16.msra.mxu0 0
  %349 = vmatprep.subr.bf16.mxu0 0
  %350 = vmatpush2.bf16.msra.mxu0 0
  %351 = vmatprep.subr.bf16.mxu0 0
  %352 = vmatpush2.bf16.msra.mxu0 0
  %353 = vmatprep.subr.bf16.mxu0 0
  %354 = vmatpush2.bf16.msra.mxu0 0
  %355 = vmatprep.subr.bf16.mxu0 0
  %356 = vmatpush2.bf16.msra.mxu0 0
  %357 = vmatprep.subr.bf16.mxu0 0
  %358 = vmatpush2.bf16.msra.mxu0 0
  %359 = vmatprep.mubr.bf16.mxu0 0
  %360 = vmatmul.mubr.bf16.gmra.mxu0 %v322
  %v361 = vpop.f32.mrf.mxu0
  %v362 = vadd.f32 0.0, %v361
  %v363 = vpop.f32.mrf.mxu0
  %v364 = vpop.f32.mrf.mxu0
  %v365 = vadd.f32 0.0, %v364
  %v366 = vpop.f32.mrf.mxu0
  %367 = vmatprep.mubr.bf16.mxu0 0
  %368 = vmatmul.mubr.bf16.gmra.mxu0 %v325
  %v369 = vpop.f32.mrf.mxu0
  %v370 = vadd.f32 0.0, %v369
  %v371 = vpop.f32.mrf.mxu0
  %v372 = vpop.f32.mrf.mxu0
  %v373 = vadd.f32 0.0, %v372
  %v374 = vpop.f32.mrf.mxu0
  %375 = vdwg.mxu0
  %v380 = vunpack.c.l.b16 %v24
  %v381 = vunpack.c.l.b16 %v25
  %v382 = vunpack.c.l.b16 %v26
  %v383 = vunpack.c.l.b16 %v27
  %v384 = vpack.c.b16 %v381, %v380
  %v385 = vpack.c.b16 %v383, %v382
  %v394 = vunpack.c.l.b16 %v68
  %v395 = vunpack.c.l.b16 %v69
  %v396 = vunpack.c.l.b16 %v70
  %v397 = vunpack.c.l.b16 %v71
  %v398 = vunpack.c.l.b16 %v72
  %v399 = vunpack.c.l.b16 %v73
  %v400 = vunpack.c.l.b16 %v74
  %v401 = vunpack.c.l.b16 %v75
  %v402 = vpack.c.b16 %v395, %v394
  %v403 = vpack.c.b16 %v397, %v396
  %v404 = vpack.c.b16 %v399, %v398
  %v405 = vpack.c.b16 %v401, %v400
  %v411 = vsel %vm142, %v384, 0
  %v414 = vsel %vm142, %v385, 0
  %416 = vmatprep.subr.bf16.mxu0 0
  %417 = vmatpush1.bf16.msra.mxu0 0
  %418 = vmatprep.subr.bf16.mxu0 0
  %419 = vmatpush1.bf16.msra.mxu0 0
  %420 = vmatprep.subr.bf16.mxu0 0
  %421 = vmatpush1.bf16.msra.mxu0 0
  %422 = vmatprep.subr.bf16.mxu0 0
  %423 = vmatpush1.bf16.msra.mxu0 0
  %424 = vmatprep.subr.bf16.mxu0 0
  %425 = vmatpush1.bf16.msra.mxu0 %v405
  %426 = vmatprep.subr.bf16.mxu0 0
  %427 = vmatpush1.bf16.msra.mxu0 %v404
  %428 = vmatprep.subr.bf16.mxu0 0
  %429 = vmatpush1.bf16.msra.mxu0 %v403
  %430 = vmatprep.subr.bf16.mxu0 0
  %431 = vmatpush1.bf16.msra.mxu0 %v402
  %432 = vmatprep.subr.bf16.mxu0 0
  %433 = vmatpush2.bf16.msra.mxu0 0
  %434 = vmatprep.subr.bf16.mxu0 0
  %435 = vmatpush2.bf16.msra.mxu0 0
  %436 = vmatprep.subr.bf16.mxu0 0
  %437 = vmatpush2.bf16.msra.mxu0 0
  %438 = vmatprep.subr.bf16.mxu0 0
  %439 = vmatpush2.bf16.msra.mxu0 0
  %440 = vmatprep.subr.bf16.mxu0 0
  %441 = vmatpush2.bf16.msra.mxu0 0
  %442 = vmatprep.subr.bf16.mxu0 0
  %443 = vmatpush2.bf16.msra.mxu0 0
  %444 = vmatprep.subr.bf16.mxu0 0
  %445 = vmatpush2.bf16.msra.mxu0 0
  %446 = vmatprep.subr.bf16.mxu0 0
  %447 = vmatpush2.bf16.msra.mxu0 0
  %448 = vmatprep.mubr.bf16.mxu0 0
  %449 = vmatmul.mubr.bf16.gmra.mxu0 %v411
  %v450 = vpop.f32.mrf.mxu0
  %v451 = vadd.f32 0.0, %v450
  %v452 = vpop.f32.mrf.mxu0
  %v453 = vpop.f32.mrf.mxu0
  %v454 = vadd.f32 0.0, %v453
  %v455 = vpop.f32.mrf.mxu0
  %456 = vmatprep.mubr.bf16.mxu0 0
  %457 = vmatmul.mubr.bf16.gmra.mxu0 %v414
  %v458 = vpop.f32.mrf.mxu0
  %v459 = vadd.f32 0.0, %v458
  %v460 = vpop.f32.mrf.mxu0
  %v461 = vpop.f32.mrf.mxu0
  %v462 = vadd.f32 0.0, %v461
  %v463 = vpop.f32.mrf.mxu0
  %464 = vdwg.mxu0
  %v469 = vunpack.c.l.b16 %v28
  %v470 = vunpack.c.l.b16 %v29
  %v471 = vunpack.c.l.b16 %v30
  %v472 = vunpack.c.l.b16 %v31
  %v473 = vpack.c.b16 %v470, %v469
  %v474 = vpack.c.b16 %v472, %v471
  %v483 = vunpack.c.l.b16 %v76
  %v484 = vunpack.c.l.b16 %v77
  %v485 = vunpack.c.l.b16 %v78
  %v486 = vunpack.c.l.b16 %v79
  %v487 = vunpack.c.l.b16 %v80
  %v488 = vunpack.c.l.b16 %v81
  %v489 = vunpack.c.l.b16 %v82
  %v490 = vunpack.c.l.b16 %v83
  %v491 = vpack.c.b16 %v484, %v483
  %v492 = vpack.c.b16 %v486, %v485
  %v493 = vpack.c.b16 %v488, %v487
  %v494 = vpack.c.b16 %v490, %v489
  %v500 = vsel %vm142, %v473, 0
  %v503 = vsel %vm142, %v474, 0
  %505 = vmatprep.subr.bf16.mxu0 0
  %506 = vmatpush1.bf16.msra.mxu0 0
  %507 = vmatprep.subr.bf16.mxu0 0
  %508 = vmatpush1.bf16.msra.mxu0 0
  %509 = vmatprep.subr.bf16.mxu0 0
  %510 = vmatpush1.bf16.msra.mxu0 0
  %511 = vmatprep.subr.bf16.mxu0 0
  %512 = vmatpush1.bf16.msra.mxu0 0
  %513 = vmatprep.subr.bf16.mxu0 0
  %514 = vmatpush1.bf16.msra.mxu0 %v494
  %515 = vmatprep.subr.bf16.mxu0 0
  %516 = vmatpush1.bf16.msra.mxu0 %v493
  %517 = vmatprep.subr.bf16.mxu0 0
  %518 = vmatpush1.bf16.msra.mxu0 %v492
  %519 = vmatprep.subr.bf16.mxu0 0
  %520 = vmatpush1.bf16.msra.mxu0 %v491
  %521 = vmatprep.subr.bf16.mxu0 0
  %522 = vmatpush2.bf16.msra.mxu0 0
  %523 = vmatprep.subr.bf16.mxu0 0
  %524 = vmatpush2.bf16.msra.mxu0 0
  %525 = vmatprep.subr.bf16.mxu0 0
  %526 = vmatpush2.bf16.msra.mxu0 0
  %527 = vmatprep.subr.bf16.mxu0 0
  %528 = vmatpush2.bf16.msra.mxu0 0
  %529 = vmatprep.subr.bf16.mxu0 0
  %530 = vmatpush2.bf16.msra.mxu0 0
  %531 = vmatprep.subr.bf16.mxu0 0
  %532 = vmatpush2.bf16.msra.mxu0 0
  %533 = vmatprep.subr.bf16.mxu0 0
  %534 = vmatpush2.bf16.msra.mxu0 0
  %535 = vmatprep.subr.bf16.mxu0 0
  %536 = vmatpush2.bf16.msra.mxu0 0
  %537 = vmatprep.mubr.bf16.mxu0 0
  %538 = vmatmul.mubr.bf16.gmra.mxu0 %v500
  %v539 = vpop.f32.mrf.mxu0
  %v540 = vadd.f32 0.0, %v539
  %v541 = vpop.f32.mrf.mxu0
  %v542 = vpop.f32.mrf.mxu0
  %v543 = vadd.f32 0.0, %v542
  %v544 = vpop.f32.mrf.mxu0
  %545 = vmatprep.mubr.bf16.mxu0 0
  %546 = vmatmul.mubr.bf16.gmra.mxu0 %v503
  %v547 = vpop.f32.mrf.mxu0
  %v548 = vadd.f32 0.0, %v547
  %v549 = vpop.f32.mrf.mxu0
  %v550 = vpop.f32.mrf.mxu0
  %v551 = vadd.f32 0.0, %v550
  %v552 = vpop.f32.mrf.mxu0
  %553 = vdwg.mxu0
  %v558 = vunpack.c.l.b16 %v32
  %v559 = vunpack.c.l.b16 %v33
  %v560 = vunpack.c.l.b16 %v34
  %v561 = vunpack.c.l.b16 %v35
  %v562 = vpack.c.b16 %v559, %v558
  %v563 = vpack.c.b16 %v561, %v560
  %v572 = vunpack.c.l.b16 %v84
  %v573 = vunpack.c.l.b16 %v85
  %v574 = vunpack.c.l.b16 %v86
  %v575 = vunpack.c.l.b16 %v87
  %v576 = vunpack.c.l.b16 %v88
  %v577 = vunpack.c.l.b16 %v89
  %v578 = vunpack.c.l.b16 %v90
  %v579 = vunpack.c.l.b16 %v91
  %v580 = vpack.c.b16 %v573, %v572
  %v581 = vpack.c.b16 %v575, %v574
  %v582 = vpack.c.b16 %v577, %v576
  %v583 = vpack.c.b16 %v579, %v578
  %v589 = vsel %vm142, %v562, 0
  %v592 = vsel %vm142, %v563, 0
  %594 = vmatprep.subr.bf16.mxu0 0
  %595 = vmatpush1.bf16.msra.mxu0 0
  %596 = vmatprep.subr.bf16.mxu0 0
  %597 = vmatpush1.bf16.msra.mxu0 0
  %598 = vmatprep.subr.bf16.mxu0 0
  %599 = vmatpush1.bf16.msra.mxu0 0
  %600 = vmatprep.subr.bf16.mxu0 0
  %601 = vmatpush1.bf16.msra.mxu0 0
  %602 = vmatprep.subr.bf16.mxu0 0
  %603 = vmatpush1.bf16.msra.mxu0 %v583
  %604 = vmatprep.subr.bf16.mxu0 0
  %605 = vmatpush1.bf16.msra.mxu0 %v582
  %606 = vmatprep.subr.bf16.mxu0 0
  %607 = vmatpush1.bf16.msra.mxu0 %v581
  %608 = vmatprep.subr.bf16.mxu0 0
  %609 = vmatpush1.bf16.msra.mxu0 %v580
  %610 = vmatprep.subr.bf16.mxu0 0
  %611 = vmatpush2.bf16.msra.mxu0 0
  %612 = vmatprep.subr.bf16.mxu0 0
  %613 = vmatpush2.bf16.msra.mxu0 0
  %614 = vmatprep.subr.bf16.mxu0 0
  %615 = vmatpush2.bf16.msra.mxu0 0
  %616 = vmatprep.subr.bf16.mxu0 0
  %617 = vmatpush2.bf16.msra.mxu0 0
  %618 = vmatprep.subr.bf16.mxu0 0
  %619 = vmatpush2.bf16.msra.mxu0 0
  %620 = vmatprep.subr.bf16.mxu0 0
  %621 = vmatpush2.bf16.msra.mxu0 0
  %622 = vmatprep.subr.bf16.mxu0 0
  %623 = vmatpush2.bf16.msra.mxu0 0
  %624 = vmatprep.subr.bf16.mxu0 0
  %625 = vmatpush2.bf16.msra.mxu0 0
  %626 = vmatprep.mubr.bf16.mxu0 0
  %627 = vmatmul.mubr.bf16.gmra.mxu0 %v589
  %v628 = vpop.f32.mrf.mxu0
  %v629 = vadd.f32 0.0, %v628
  %v630 = vpop.f32.mrf.mxu0
  %v631 = vpop.f32.mrf.mxu0
  %v632 = vadd.f32 0.0, %v631
  %v633 = vpop.f32.mrf.mxu0
  %634 = vmatprep.mubr.bf16.mxu0 0
  %635 = vmatmul.mubr.bf16.gmra.mxu0 %v592
  %v636 = vpop.f32.mrf.mxu0
  %v637 = vadd.f32 0.0, %v636
  %v638 = vpop.f32.mrf.mxu0
  %v639 = vpop.f32.mrf.mxu0
  %v640 = vadd.f32 0.0, %v639
  %v641 = vpop.f32.mrf.mxu0
  %642 = vdwg.mxu0
  %v647 = vunpack.c.l.b16 %v36
  %v648 = vunpack.c.l.b16 %v37
  %v649 = vunpack.c.l.b16 %v38
  %v650 = vunpack.c.l.b16 %v39
  %v651 = vpack.c.b16 %v648, %v647
  %v652 = vpack.c.b16 %v650, %v649
  %v661 = vunpack.c.l.b16 %v92
  %v662 = vunpack.c.l.b16 %v93
  %v663 = vunpack.c.l.b16 %v94
  %v664 = vunpack.c.l.b16 %v95
  %v665 = vunpack.c.l.b16 %v96
  %v666 = vunpack.c.l.b16 %v97
  %v667 = vunpack.c.l.b16 %v98
  %v668 = vunpack.c.l.b16 %v99
  %v669 = vpack.c.b16 %v662, %v661
  %v670 = vpack.c.b16 %v664, %v663
  %v671 = vpack.c.b16 %v666, %v665
  %v672 = vpack.c.b16 %v668, %v667
  %v678 = vsel %vm142, %v651, 0
  %v681 = vsel %vm142, %v652, 0
  %683 = vmatprep.subr.bf16.mxu0 0
  %684 = vmatpush1.bf16.msra.mxu0 0
  %685 = vmatprep.subr.bf16.mxu0 0
  %686 = vmatpush1.bf16.msra.mxu0 0
  %687 = vmatprep.subr.bf16.mxu0 0
  %688 = vmatpush1.bf16.msra.mxu0 0
  %689 = vmatprep.subr.bf16.mxu0 0
  %690 = vmatpush1.bf16.msra.mxu0 0
  %691 = vmatprep.subr.bf16.mxu0 0
  %692 = vmatpush1.bf16.msra.mxu0 %v672
  %693 = vmatprep.subr.bf16.mxu0 0
  %694 = vmatpush1.bf16.msra.mxu0 %v671
  %695 = vmatprep.subr.bf16.mxu0 0
  %696 = vmatpush1.bf16.msra.mxu0 %v670
  %697 = vmatprep.subr.bf16.mxu0 0
  %698 = vmatpush1.bf16.msra.mxu0 %v669
  %699 = vmatprep.subr.bf16.mxu0 0
  %700 = vmatpush2.bf16.msra.mxu0 0
  %701 = vmatprep.subr.bf16.mxu0 0
  %702 = vmatpush2.bf16.msra.mxu0 0
  %703 = vmatprep.subr.bf16.mxu0 0
  %704 = vmatpush2.bf16.msra.mxu0 0
  %705 = vmatprep.subr.bf16.mxu0 0
  %706 = vmatpush2.bf16.msra.mxu0 0
  %707 = vmatprep.subr.bf16.mxu0 0
  %708 = vmatpush2.bf16.msra.mxu0 0
  %709 = vmatprep.subr.bf16.mxu0 0
  %710 = vmatpush2.bf16.msra.mxu0 0
  %711 = vmatprep.subr.bf16.mxu0 0
  %712 = vmatpush2.bf16.msra.mxu0 0
  %713 = vmatprep.subr.bf16.mxu0 0
  %714 = vmatpush2.bf16.msra.mxu0 0
  %715 = vmatprep.mubr.bf16.mxu0 0
  %716 = vmatmul.mubr.bf16.gmra.mxu0 %v678
  %v717 = vpop.f32.mrf.mxu0
  %v718 = vadd.f32 0.0, %v717
  %v719 = vpop.f32.mrf.mxu0
  %v720 = vpop.f32.mrf.mxu0
  %v721 = vadd.f32 0.0, %v720
  %v722 = vpop.f32.mrf.mxu0
  %723 = vmatprep.mubr.bf16.mxu0 0
  %724 = vmatmul.mubr.bf16.gmra.mxu0 %v681
  %v725 = vpop.f32.mrf.mxu0
  %v726 = vadd.f32 0.0, %v725
  %v727 = vpop.f32.mrf.mxu0
  %v728 = vpop.f32.mrf.mxu0
  %v729 = vadd.f32 0.0, %v728
  %v730 = vpop.f32.mrf.mxu0
  %731 = vdwg.mxu0
  %v736 = vunpack.c.l.b16 %v40
  %v737 = vunpack.c.l.b16 %v41
  %v738 = vunpack.c.l.b16 %v42
  %v739 = vunpack.c.l.b16 %v43
  %v740 = vpack.c.b16 %v737, %v736
  %v741 = vpack.c.b16 %v739, %v738
  %v750 = vunpack.c.l.b16 %v100
  %v751 = vunpack.c.l.b16 %v101
  %v752 = vunpack.c.l.b16 %v102
  %v753 = vunpack.c.l.b16 %v103
  %v754 = vunpack.c.l.b16 %v104
  %v755 = vunpack.c.l.b16 %v105
  %v756 = vunpack.c.l.b16 %v106
  %v757 = vunpack.c.l.b16 %v107
  %v758 = vpack.c.b16 %v751, %v750
  %v759 = vpack.c.b16 %v753, %v752
  %v760 = vpack.c.b16 %v755, %v754
  %v761 = vpack.c.b16 %v757, %v756
  %v767 = vsel %vm142, %v740, 0
  %v770 = vsel %vm142, %v741, 0
  %772 = vmatprep.subr.bf16.mxu0 0
  %773 = vmatpush1.bf16.msra.mxu0 0
  %774 = vmatprep.subr.bf16.mxu0 0
  %775 = vmatpush1.bf16.msra.mxu0 0
  %776 = vmatprep.subr.bf16.mxu0 0
  %777 = vmatpush1.bf16.msra.mxu0 0
  %778 = vmatprep.subr.bf16.mxu0 0
  %779 = vmatpush1.bf16.msra.mxu0 0
  %780 = vmatprep.subr.bf16.mxu0 0
  %781 = vmatpush1.bf16.msra.mxu0 %v761
  %782 = vmatprep.subr.bf16.mxu0 0
  %783 = vmatpush1.bf16.msra.mxu0 %v760
  %784 = vmatprep.subr.bf16.mxu0 0
  %785 = vmatpush1.bf16.msra.mxu0 %v759
  %786 = vmatprep.subr.bf16.mxu0 0
  %787 = vmatpush1.bf16.msra.mxu0 %v758
  %788 = vmatprep.subr.bf16.mxu0 0
  %789 = vmatpush2.bf16.msra.mxu0 0
  %790 = vmatprep.subr.bf16.mxu0 0
  %791 = vmatpush2.bf16.msra.mxu0 0
  %792 = vmatprep.subr.bf16.mxu0 0
  %793 = vmatpush2.bf16.msra.mxu0 0
  %794 = vmatprep.subr.bf16.mxu0 0
  %795 = vmatpush2.bf16.msra.mxu0 0
  %796 = vmatprep.subr.bf16.mxu0 0
  %797 = vmatpush2.bf16.msra.mxu0 0
  %798 = vmatprep.subr.bf16.mxu0 0
  %799 = vmatpush2.bf16.msra.mxu0 0
  %800 = vmatprep.subr.bf16.mxu0 0
  %801 = vmatpush2.bf16.msra.mxu0 0
  %802 = vmatprep.subr.bf16.mxu0 0
  %803 = vmatpush2.bf16.msra.mxu0 0
  %804 = vmatprep.mubr.bf16.mxu0 0
  %805 = vmatmul.mubr.bf16.gmra.mxu0 %v767
  %v806 = vpop.f32.mrf.mxu0
  %v807 = vadd.f32 0.0, %v806
  %v808 = vpop.f32.mrf.mxu0
  %v809 = vpop.f32.mrf.mxu0
  %v810 = vadd.f32 0.0, %v809
  %v811 = vpop.f32.mrf.mxu0
  %812 = vmatprep.mubr.bf16.mxu0 0
  %813 = vmatmul.mubr.bf16.gmra.mxu0 %v770
  %v814 = vpop.f32.mrf.mxu0
  %v815 = vadd.f32 0.0, %v814
  %v816 = vpop.f32.mrf.mxu0
  %v817 = vpop.f32.mrf.mxu0
  %v818 = vadd.f32 0.0, %v817
  %v819 = vpop.f32.mrf.mxu0
  %820 = vdwg.mxu0
  %821 = vst.msk [vmem:[%s2] sm:$0xff] %vm142, %v184
  %822 = vst.msk [vmem:[%s2 + $0x8] sm:$0xff] %vm142, %v187
  %823 = vst.msk [vmem:[%s2 + $0x10] sm:$0xff] %vm142, %v192
  %824 = vst.msk [vmem:[%s2 + $0x18] sm:$0xff] %vm142, %v195
  %825 = vst.msk [vmem:[%s2 + $0x20] sm:$0xff] %vm142, %v273
  %826 = vst.msk [vmem:[%s2 + $0x28] sm:$0xff] %vm142, %v276
  %827 = vst.msk [vmem:[%s2 + $0x30] sm:$0xff] %vm142, %v281
  %828 = vst.msk [vmem:[%s2 + $0x38] sm:$0xff] %vm142, %v284
  %829 = vst.msk [vmem:[%s2 + $0x40] sm:$0xff] %vm142, %v362
  %830 = vst.msk [vmem:[%s2 + $0x48] sm:$0xff] %vm142, %v365
  %831 = vst.msk [vmem:[%s2 + $0x50] sm:$0xff] %vm142, %v370
  %832 = vst.msk [vmem:[%s2 + $0x58] sm:$0xff] %vm142, %v373
  %833 = vst.msk [vmem:[%s2 + $0x60] sm:$0xff] %vm142, %v451
  %834 = vst.msk [vmem:[%s2 + $0x68] sm:$0xff] %vm142, %v454
  %835 = vst.msk [vmem:[%s2 + $0x70] sm:$0xff] %vm142, %v459
  %836 = vst.msk [vmem:[%s2 + $0x78] sm:$0xff] %vm142, %v462
  %837 = vst.msk [vmem:[%s2 + $0x80] sm:$0xff] %vm142, %v540
  %838 = vst.msk [vmem:[%s2 + $0x88] sm:$0xff] %vm142, %v543
  %839 = vst.msk [vmem:[%s2 + $0x90] sm:$0xff] %vm142, %v548
  %840 = vst.msk [vmem:[%s2 + $0x98] sm:$0xff] %vm142, %v551
  %841 = vst.msk [vmem:[%s2 + $0xa0] sm:$0xff] %vm142, %v629
  %842 = vst.msk [vmem:[%s2 + $0xa8] sm:$0xff] %vm142, %v632
  %843 = vst.msk [vmem:[%s2 + $0xb0] sm:$0xff] %vm142, %v637
  %844 = vst.msk [vmem:[%s2 + $0xb8] sm:$0xff] %vm142, %v640
  %845 = vst.msk [vmem:[%s2 + $0xc0] sm:$0xff] %vm142, %v718
  %846 = vst.msk [vmem:[%s2 + $0xc8] sm:$0xff] %vm142, %v721
  %847 = vst.msk [vmem:[%s2 + $0xd0] sm:$0xff] %vm142, %v726
  %848 = vst.msk [vmem:[%s2 + $0xd8] sm:$0xff] %vm142, %v729
  %849 = vst.msk [vmem:[%s2 + $0xe0] sm:$0xff] %vm142, %v807
  %850 = vst.msk [vmem:[%s2 + $0xe8] sm:$0xff] %vm142, %v810
  %851 = vst.msk [vmem:[%s2 + $0xf0] sm:$0xff] %vm142, %v815
  %852 = vst.msk [vmem:[%s2 + $0xf8] sm:$0xff] %vm142, %v818
  // Predicated region
  $region10: #{fno_forward.16} parent=0 // pred_check
    _
  $region11: #{fno_forward.16} parent=0 // pred_check_branch
    %854 = sbr.rel (0) target = $region13
  $region12: #{fno_forward.16} parent=0 // pred_region
    _
  $region13: #{fno_forward.16} parent=0 // pred_fallthru
    _
  // Predicated region
  $region14: #{fno_forward.16} parent=0 // pred_check
    _
  $region15: #{fno_forward.16} parent=0 // pred_check_branch
    %856 = sbr.rel (0) target = $region17
  $region16: #{fno_forward.16} parent=0 // pred_region
    _
  $region17: #{fno_forward.16} parent=0 // pred_fallthru
    _

// kernel: fno_forward.17
$region0: #{fno_forward.17}
  #allocation0 [shape = 'u32[]', space=smem, size = 0x4, offset = 0x4, fixed_abs, tag = 'smem constant byte address 0x4 - core index']
  #allocation1 [shape = 'u32[144,128]{1,0:T(1,128)}', space=vmem, size = 0x12000, scoped, tag = 'internal scratch']
  %s0 = inlined_call_operand.vmem [shape: f32[512,32], index: 0, kind: input, shape index: {}]
  %s1 = inlined_call_operand.vmem [shape: f32[512,32], index: 1, kind: input, shape index: {}]
  %s2 = inlined_call_operand.vmem [shape: bf16[32,64], index: 2, kind: input, shape index: {}]
  %s3 = inlined_call_operand.vmem [shape: f32[1,64], index: 3, kind: input, shape index: {}]
  %s4 = inlined_call_operand.vmem [shape: bf16[64,32], index: 4, kind: input, shape index: {}]
  %s5 = inlined_call_operand.vmem [shape: f32[1,32], index: 5, kind: input, shape index: {}]
  %s6 = inlined_call_operand.vmem [shape: f32[512,32], index: 6, kind: output, shape index: {0}]
  %s7 = inlined_call_operand.hbm [shape: f32[512,32], index: 7, kind: output, shape index: {1}]
  %8 = xla_tuple %s6, %s7
  %s9 = sld [smem:[#allocation0]]
  $region65: #{fno_forward.17} parent=0
    _
  %s11 = ssub.s32 1, %s9
  %s12 = scalar_select 0, %s11, %s9
  $region1: #{fno_forward.17} parent=0
    #allocation2 [shape = 'u8[262144]{0}', space=vmem, size = 0x40000, scoped, tag = 'output window, operand 1']
    #allocation3 [shape = 's32[2]{0}', space=sflag, size = 0x8, scoped, tag = 'scoped memory for fno_forward.17']
    %13 = vsyncpa [#allocation3], 0
    %s14 = scalar_lea.sflag [#allocation3], 1
    %15 = vsyncpa %s14, 0
    loop: start=0, step=1, limit=4
    $region2: #{fno_forward.17} parent=1 // loop_pre_header
      _
    $region3: #{fno_forward.17} parent=1 // loop_header
      %s17 = sphi 0, %s21
      %p18 = scmp.ge.s32.totalorder %s17, 4
      %s27 = sphi 0, %s29
      %s30 = sphi 0, %s27
      %s31 = sphi 0, %s30
      %s47 = sphi 0, %s31
      %s53 = sphi 0, %s55
      %s56 = sphi 0, %s53
      %s57 = sphi 0, %s56
      %s73 = sphi 0, %s57
      %s77 = sphi 0, %s77
      %s79 = sphi 0, %s77
      %s80 = sphi 0, %s79
      %s94 = sphi 0, %s80
      %s98 = sphi 0, %s98
      %s100 = sphi 0, %s98
      %s101 = sphi 0, %s100
      %s115 = sphi 0, %s101
      %s119 = sphi 0, %s119
      %s121 = sphi 0, %s119
      %s122 = sphi 0, %s121
      %s136 = sphi 0, %s122
      %s140 = sphi 0, %s140
      %s142 = sphi 0, %s140
      %s143 = sphi 0, %s142
      %s157 = sphi 0, %s143
      %s163 = sphi 0, %s165
      %s166 = sphi 0, %s163
      %s167 = sphi 0, %s166
      %s183 = sphi 0, %s167
      %s189 = sphi 0, %s191
      %s192 = sphi 0, %s189
      %s193 = sphi 0, %s192
      %s209 = sphi 0, %s193
    $region4: #{fno_forward.17} parent=1 // loop_header_branch
      %20 = sbr.rel (%p18) target = $region8
    $region5: #{fno_forward.17} parent=1 // loop_body
      %s22 = ssub.s32 %s17, 1
      %s23 = ssub.s32 %s17, 2
      %s24 = sadd.s32 %s17, 1
      %s25 = ssub.s32 %s17, %s24
      %p26 = scmp.eq.s32.totalorder %s25, 0
      %s28 = sadd.s32 %s27, 1
      %s29 = scalar_select %p26, %s27, %s28
      %p32 = pneg %p26
      %p33 = scmp.eq.s32.totalorder %s17, 1
      %p34 = por %p32, %p33
      %p35 = scmp.ne.s32.totalorder %s27, %s30
      %p36 = scmp.eq.s32.totalorder %s17, 0
      %p37 = por %p35, %p36
      %p38 = scmp.ne.s32.totalorder %s27, %s30
      %p39 = scmp.eq.s32.totalorder %s22, 1
      %p40 = por %p38, %p39
      %p41 = scmp.ne.s32.totalorder %s30, %s31
      %p42 = scmp.eq.s32.totalorder %s22, 0
      %p43 = por %p41, %p42
      %p44 = scmp.ne.s32.totalorder %s30, %s31
      %p45 = scmp.eq.s32.totalorder %s23, 1
      %p46 = por %p44, %p45
      %p48 = scmp.ne.s32.totalorder %s31, %s47
      %p49 = scmp.eq.s32.totalorder %s23, 0
      %p50 = por %p48, %p49
      %s51 = ssub.s32 %s17, %s24
      %p52 = scmp.eq.s32.totalorder %s51, 0
      %s54 = sadd.s32 %s53, 1
      %s55 = scalar_select %p52, %s53, %s54
      %p58 = pneg %p52
      %p59 = scmp.eq.s32.totalorder %s17, 1
      %p60 = por %p58, %p59
      %p61 = scmp.ne.s32.totalorder %s53, %s56
      %p62 = scmp.eq.s32.totalorder %s17, 0
      %p63 = por %p61, %p62
      %p64 = scmp.ne.s32.totalorder %s53, %s56
      %p65 = scmp.eq.s32.totalorder %s22, 1
      %p66 = por %p64, %p65
      %p67 = scmp.ne.s32.totalorder %s56, %s57
      %p68 = scmp.eq.s32.totalorder %s22, 0
      %p69 = por %p67, %p68
      %p70 = scmp.ne.s32.totalorder %s56, %s57
      %p71 = scmp.eq.s32.totalorder %s23, 1
      %p72 = por %p70, %p71
      %p74 = scmp.ne.s32.totalorder %s57, %s73
      %p75 = scmp.eq.s32.totalorder %s23, 0
      %p76 = por %p74, %p75
      %s78 = sadd.s32 %s77, 1
      %p81 = scmp.eq.s32.totalorder %s17, 1
      %p82 = scmp.ne.s32.totalorder %s77, %s79
      %p83 = scmp.eq.s32.totalorder %s17, 0
      %p84 = por %p82, %p83
      %p85 = scmp.ne.s32.totalorder %s77, %s79
      %p86 = scmp.eq.s32.totalorder %s22, 1
      %p87 = por %p85, %p86
      %p88 = scmp.ne.s32.totalorder %s79, %s80
      %p89 = scmp.eq.s32.totalorder %s22, 0
      %p90 = por %p88, %p89
      %p91 = scmp.ne.s32.totalorder %s79, %s80
      %p92 = scmp.eq.s32.totalorder %s23, 1
      %p93 = por %p91, %p92
      %p95 = scmp.ne.s32.totalorder %s80, %s94
      %p96 = scmp.eq.s32.totalorder %s23, 0
      %p97 = por %p95, %p96
      %s99 = sadd.s32 %s98, 1
      %p102 = scmp.eq.s32.totalorder %s17, 1
      %p103 = scmp.ne.s32.totalorder %s98, %s100
      %p104 = scmp.eq.s32.totalorder %s17, 0
      %p105 = por %p103, %p104
      %p106 = scmp.ne.s32.totalorder %s98, %s100
      %p107 = scmp.eq.s32.totalorder %s22, 1
      %p108 = por %p106, %p107
      %p109 = scmp.ne.s32.totalorder %s100, %s101
      %p110 = scmp.eq.s32.totalorder %s22, 0
      %p111 = por %p109, %p110
      %p112 = scmp.ne.s32.totalorder %s100, %s101
      %p113 = scmp.eq.s32.totalorder %s23, 1
      %p114 = por %p112, %p113
      %p116 = scmp.ne.s32.totalorder %s101, %s115
      %p117 = scmp.eq.s32.totalorder %s23, 0
      %p118 = por %p116, %p117
      %s120 = sadd.s32 %s119, 1
      %p123 = scmp.eq.s32.totalorder %s17, 1
      %p124 = scmp.ne.s32.totalorder %s119, %s121
      %p125 = scmp.eq.s32.totalorder %s17, 0
      %p126 = por %p124, %p125
      %p127 = scmp.ne.s32.totalorder %s119, %s121
      %p128 = scmp.eq.s32.totalorder %s22, 1
      %p129 = por %p127, %p128
      %p130 = scmp.ne.s32.totalorder %s121, %s122
      %p131 = scmp.eq.s32.totalorder %s22, 0
      %p132 = por %p130, %p131
      %p133 = scmp.ne.s32.totalorder %s121, %s122
      %p134 = scmp.eq.s32.totalorder %s23, 1
      %p135 = por %p133, %p134
      %p137 = scmp.ne.s32.totalorder %s122, %s136
      %p138 = scmp.eq.s32.totalorder %s23, 0
      %p139 = por %p137, %p138
      %s141 = sadd.s32 %s140, 1
      %p144 = scmp.eq.s32.totalorder %s17, 1
      %p145 = scmp.ne.s32.totalorder %s140, %s142
      %p146 = scmp.eq.s32.totalorder %s17, 0
      %p147 = por %p145, %p146
      %p148 = scmp.ne.s32.totalorder %s140, %s142
      %p149 = scmp.eq.s32.totalorder %s22, 1
      %p150 = por %p148, %p149
      %p151 = scmp.ne.s32.totalorder %s142, %s143
      %p152 = scmp.eq.s32.totalorder %s22, 0
      %p153 = por %p151, %p152
      %p154 = scmp.ne.s32.totalorder %s142, %s143
      %p155 = scmp.eq.s32.totalorder %s23, 1
      %p156 = por %p154, %p155
      %p158 = scmp.ne.s32.totalorder %s143, %s157
      %p159 = scmp.eq.s32.totalorder %s23, 0
      %p160 = por %p158, %p159
      %s161 = ssub.s32 %s17, %s24
      %p162 = scmp.eq.s32.totalorder %s161, 0
      %s164 = sadd.s32 %s163, 1
      %s165 = scalar_select %p162, %s163, %s164
      %p168 = pneg %p162
      %p169 = scmp.eq.s32.totalorder %s17, 1
      %p170 = por %p168, %p169
      %p171 = scmp.ne.s32.totalorder %s163, %s166
      %p172 = scmp.eq.s32.totalorder %s17, 0
      %p173 = por %p171, %p172
      %p174 = scmp.ne.s32.totalorder %s163, %s166
      %p175 = scmp.eq.s32.totalorder %s22, 1
      %p176 = por %p174, %p175
      %p177 = scmp.ne.s32.totalorder %s166, %s167
      %p178 = scmp.eq.s32.totalorder %s22, 0
      %p179 = por %p177, %p178
      %p180 = scmp.ne.s32.totalorder %s166, %s167
      %p181 = scmp.eq.s32.totalorder %s23, 1
      %p182 = por %p180, %p181
      %p184 = scmp.ne.s32.totalorder %s167, %s183
      %p185 = scmp.eq.s32.totalorder %s23, 0
      %p186 = por %p184, %p185
      %s187 = ssub.s32 %s17, %s24
      %p188 = scmp.eq.s32.totalorder %s187, 0
      %s190 = sadd.s32 %s189, 1
      %s191 = scalar_select %p188, %s189, %s190
      %p194 = pneg %p188
      %p195 = scmp.eq.s32.totalorder %s17, 1
      %p196 = por %p194, %p195
      %p197 = scmp.ne.s32.totalorder %s189, %s192
      %p198 = scmp.eq.s32.totalorder %s17, 0
      %p199 = por %p197, %p198
      %p200 = scmp.ne.s32.totalorder %s189, %s192
      %p201 = scmp.eq.s32.totalorder %s22, 1
      %p202 = por %p200, %p201
      %p203 = scmp.ne.s32.totalorder %s192, %s193
      %p204 = scmp.eq.s32.totalorder %s22, 0
      %p205 = por %p203, %p204
      %p206 = scmp.ne.s32.totalorder %s192, %s193
      %p207 = scmp.eq.s32.totalorder %s23, 1
      %p208 = por %p206, %p207
      %p210 = scmp.ne.s32.totalorder %s193, %s209
      %p211 = scmp.eq.s32.totalorder %s23, 0
      %p212 = por %p210, %p211
      %p213 = scmp.le.s32.totalorder 1, %s17
      %p214 = scmp.lt.s32.totalorder %s17, 3
      %p215 = pnand %p213, %p214
      %p216 = pneg %p215
      // Predicated region
      $region9: #{fno_forward.17} parent=5 // pred_check
        _
      $region10: #{fno_forward.17} parent=5 // pred_check_branch
        %218 = sbr.rel (%p215) target = $region12
      $region11: #{fno_forward.17} parent=5 // pred_region
        %s219 = ssub.s32 %s17, 1
        // Predicated region
        $region13: #{fno_forward.17} parent=11 // pred_check
          %p220 = pneg %p90
        $region14: #{fno_forward.17} parent=11 // pred_check_branch
          %222 = sbr.rel (%p220) target = $region16
        $region15: #{fno_forward.17} parent=11 // pred_region
          _
        $region16: #{fno_forward.17} parent=11 // pred_fallthru
          _
        // Predicated region
        $region17: #{fno_forward.17} parent=11 // pred_check
          %p223 = pneg %p111
        $region18: #{fno_forward.17} parent=11 // pred_check_branch
          %225 = sbr.rel (%p223) target = $region20
        $region19: #{fno_forward.17} parent=11 // pred_region
          _
        $region20: #{fno_forward.17} parent=11 // pred_fallthru
          _
        // Predicated region
        $region21: #{fno_forward.17} parent=11 // pred_check
          %p226 = pneg %p132
        $region22: #{fno_forward.17} parent=11 // pred_check_branch
          %228 = sbr.rel (%p226) target = $region24
        $region23: #{fno_forward.17} parent=11 // pred_region
          _
        $region24: #{fno_forward.17} parent=11 // pred_fallthru
          _
        // Predicated region
        $region25: #{fno_forward.17} parent=11 // pred_check
          %p229 = pneg %p153
        $region26: #{fno_forward.17} parent=11 // pred_check_branch
          %231 = sbr.rel (%p229) target = $region28
        $region27: #{fno_forward.17} parent=11 // pred_region
          _
        $region28: #{fno_forward.17} parent=11 // pred_fallthru
          _
      $region12: #{fno_forward.17} parent=5 // pred_fallthru
        _
      %p232 = scmp.lt.s32.totalorder %s17, 2
      // Predicated region
      $region29: #{fno_forward.17} parent=5 // pred_check
        %p233 = pneg %p232
      $region30: #{fno_forward.17} parent=5 // pred_check_branch
        %235 = sbr.rel (%p233) target = $region32
      $region31: #{fno_forward.17} parent=5 // pred_region
        // Predicated region
        $region33: #{fno_forward.17} parent=31 // pred_check
          %p236 = pneg %p37
        $region34: #{fno_forward.17} parent=31 // pred_check_branch
          %238 = sbr.rel (%p236) target = $region36
        $region35: #{fno_forward.17} parent=31 // pred_region
          %s239 = smul.u32 32, %s17
          %p240 = scmp.lt.s32.totalorder %s239, 63
          %s241 = scalar_select %p240, %s239, 63
          %s242 = smul.addr %s241, 8
          %s243 = scalar_lea.vmem %s0, %s242
          %s244 = smul.u32 32, %s17
        $region36: #{fno_forward.17} parent=31 // pred_fallthru
          _
        // Predicated region
        $region37: #{fno_forward.17} parent=31 // pred_check
          %p245 = pneg %p63
        $region38: #{fno_forward.17} parent=31 // pred_check_branch
          %247 = sbr.rel (%p245) target = $region40
        $region39: #{fno_forward.17} parent=31 // pred_region
          %s248 = smul.u32 32, %s17
          %p249 = scmp.lt.s32.totalorder %s248, 63
          %s250 = scalar_select %p249, %s248, 63
          %s251 = smul.addr %s250, 8
          %s252 = scalar_lea.vmem %s1, %s251
          %s253 = smul.u32 32, %s17
        $region40: #{fno_forward.17} parent=31 // pred_fallthru
          _
      $region32: #{fno_forward.17} parent=5 // pred_fallthru
        _
      %p254 = scmp.le.s32.totalorder 1, %s17
      %p255 = scmp.lt.s32.totalorder %s17, 3
      %p256 = pnand %p254, %p255
      %p257 = pneg %p256
      // Predicated region
      $region41: #{fno_forward.17} parent=5 // pred_check
        _
      $region42: #{fno_forward.17} parent=5 // pred_check_branch
        %259 = sbr.rel (%p256) target = $region44
      $region43: #{fno_forward.17} parent=5 // pred_region
        %s260 = ssub.s32 %s17, 1
        %s261 = smul.u32 32, %s22
        %p262 = scmp.lt.s32.totalorder %s261, 63
        %s263 = scalar_select %p262, %s261, 63
        %s264 = smul.addr %s263, 8
        %s265 = scalar_lea.vmem %s0, %s264
        %p266 = pneg %p43
        %p267 = pneg %p40
        %s268 = smul.u32 32, %s22
        %p269 = scmp.lt.s32.totalorder %s268, 63
        %s270 = scalar_select %p269, %s268, 63
        %s271 = smul.addr %s270, 8
        %s272 = scalar_lea.vmem %s1, %s271
        %p273 = pneg %p69
        %p274 = pneg %p66
        %p275 = pneg %p90
        %p276 = pneg %p87
        %p277 = pneg %p111
        %p278 = pneg %p108
        %p279 = pneg %p132
        %p280 = pneg %p129
        %p281 = pneg %p153
        %p282 = pneg %p150
        %p283 = pneg %p179
        %p284 = pneg %p176
        %s285 = smul.u32 32, %s22
        %p286 = scmp.lt.s32.totalorder %s285, 63
        %s287 = scalar_select %p286, %s285, 63
        %s288 = smul.addr %s287, 8
        %s289 = scalar_lea.vmem %s6, %s288
        %p290 = pneg %p205
        %p291 = pneg %p202
        %s292 = sand.u32 %s192, 1
        %s293 = scalar_lea.sflag [#allocation3], %s292
        %s294 = sand.u32 %s192, 1
        %s295 = smul.addr %s294, 256
        %s296 = scalar_lea.vmem [#allocation2], %s295
        %s297 = smul.u32 32, %s22
        %p298 = scmp.lt.s32.totalorder %s297, 63
        %s299 = scalar_select %p298, %s297, 63
        %s300 = smul.addr %s299, 8
        %s301 = scalar_lea.vmem %s0, %s300
        %s302 = smul.u32 32, %s22
        %s303 = smul.u32 32, %s22
        %p304 = scmp.lt.s32.totalorder %s303, 63
        %s305 = scalar_select %p304, %s303, 63
        %s306 = smul.addr %s305, 8
        %s307 = scalar_lea.vmem %s1, %s306
        %s308 = smul.u32 32, %s22
        %s309 = smul.u32 32, %s22
        %p310 = scmp.lt.s32.totalorder %s309, 63
        %s311 = scalar_select %p310, %s309, 63
        %s312 = smul.addr %s311, 8
        %s313 = scalar_lea.vmem %s6, %s312
        %s314 = smul.u32 32, %s22
        %s315 = smul.u32 32, %s22
        %v317 = vld [vmem:[%s307] sm:$0xff]
        %v318 = vld [vmem:[%s307 + $0x8] sm:$0xff]
        %v319 = vld [vmem:[%s307 + $0x10] sm:$0xff]
        %v320 = vld [vmem:[%s307 + $0x18] sm:$0xff]
        %v321 = vld [vmem:[%s307 + $0x20] sm:$0xff]
        %v322 = vld [vmem:[%s307 + $0x28] sm:$0xff]
        %v323 = vld [vmem:[%s307 + $0x30] sm:$0xff]
        %v324 = vld [vmem:[%s307 + $0x38] sm:$0xff]
        %v325 = vld [vmem:[%s307 + $0x40] sm:$0xff]
        %v326 = vld [vmem:[%s307 + $0x48] sm:$0xff]
        %v327 = vld [vmem:[%s307 + $0x50] sm:$0xff]
        %v328 = vld [vmem:[%s307 + $0x58] sm:$0xff]
        %v329 = vld [vmem:[%s307 + $0x60] sm:$0xff]
        %v330 = vld [vmem:[%s307 + $0x68] sm:$0xff]
        %v331 = vld [vmem:[%s307 + $0x70] sm:$0xff]
        %v332 = vld [vmem:[%s307 + $0x78] sm:$0xff]
        %v333 = vld [vmem:[%s307 + $0x80] sm:$0xff]
        %v334 = vld [vmem:[%s307 + $0x88] sm:$0xff]
        %v335 = vld [vmem:[%s307 + $0x90] sm:$0xff]
        %v336 = vld [vmem:[%s307 + $0x98] sm:$0xff]
        %v337 = vld [vmem:[%s307 + $0xa0] sm:$0xff]
        %v338 = vld [vmem:[%s307 + $0xa8] sm:$0xff]
        %v339 = vld [vmem:[%s307 + $0xb0] sm:$0xff]
        %v340 = vld [vmem:[%s307 + $0xb8] sm:$0xff]
        %v341 = vld [vmem:[%s307 + $0xc0] sm:$0xff]
        %v342 = vld [vmem:[%s307 + $0xc8] sm:$0xff]
        %v343 = vld [vmem:[%s307 + $0xd0] sm:$0xff]
        %v344 = vld [vmem:[%s307 + $0xd8] sm:$0xff]
        %v345 = vld [vmem:[%s307 + $0xe0] sm:$0xff]
        %v346 = vld [vmem:[%s307 + $0xe8] sm:$0xff]
        %v347 = vld [vmem:[%s307 + $0xf0] sm:$0xff]
        %v348 = vld [vmem:[%s307 + $0xf8] sm:$0xff]
        %v349 = vpack.c.bf16 %v318, %v317
        %v350 = vpack.c.bf16 %v320, %v319
        %v351 = vpack.c.bf16 %v322, %v321
        %v352 = vpack.c.bf16 %v324, %v323
        %v353 = vpack.c.bf16 %v326, %v325
        %v354 = vpack.c.bf16 %v328, %v327
        %v355 = vpack.c.bf16 %v330, %v329
        %v356 = vpack.c.bf16 %v332, %v331
        %v357 = vpack.c.bf16 %v334, %v333
        %v358 = vpack.c.bf16 %v336, %v335
        %v359 = vpack.c.bf16 %v338, %v337
        %v360 = vpack.c.bf16 %v340, %v339
        %v361 = vpack.c.bf16 %v342, %v341
        %v362 = vpack.c.bf16 %v344, %v343
        %v363 = vpack.c.bf16 %v346, %v345
        %v364 = vpack.c.bf16 %v348, %v347
        %v365 = vld [vmem:[%s2] sm:$0xf]
        %v366 = vld [vmem:[%s2 + $0x4] sm:$0xf]
        %v367 = vld [vmem:[%s2 + $0x8] sm:$0xf]
        %v368 = vld [vmem:[%s2 + $0xc] sm:$0xf]
        %v369 = vld [vmem:[%s3] sm:$0x1]
        %v371 = vlaneseq
        %v372 = vshrl.u32 %v371, 7
        %v373 = vsub.s32 0, %v372
        %v374 = vrot.slane %v369, %v373
        %v380 = vunpack.c.l.b16 %v365
        %v381 = vunpack.c.l.b16 %v366
        %v382 = vunpack.c.l.b16 %v367
        %v383 = vunpack.c.l.b16 %v368
        %v384 = vpack.c.b16 %v381, %v380
        %v385 = vpack.c.b16 %v383, %v382
        %vm388 = vcmask 261120
        %v390 = vsel %vm388, %v349, 0
        %v393 = vsel %vm388, %v350, 0
        %v396 = vsel %vm388, %v351, 0
        %v399 = vsel %vm388, %v352, 0
        %v402 = vsel %vm388, %v353, 0
        %v405 = vsel %vm388, %v354, 0
        %v408 = vsel %vm388, %v355, 0
        %v411 = vsel %vm388, %v356, 0
        %v414 = vsel %vm388, %v357, 0
        %v417 = vsel %vm388, %v358, 0
        %v420 = vsel %vm388, %v359, 0
        %v423 = vsel %vm388, %v360, 0
        %v426 = vsel %vm388, %v361, 0
        %v429 = vsel %vm388, %v362, 0
        %v432 = vsel %vm388, %v363, 0
        %v435 = vsel %vm388, %v364, 0
        %437 = vmatprep.subr.bf16.mxu0 0
        %438 = vmatpush1.bf16.msra.mxu0 0
        %439 = vmatprep.subr.bf16.mxu0 0
        %440 = vmatpush1.bf16.msra.mxu0 0
        %441 = vmatprep.subr.bf16.mxu0 0
        %442 = vmatpush1.bf16.msra.mxu0 0
        %443 = vmatprep.subr.bf16.mxu0 0
        %444 = vmatpush1.bf16.msra.mxu0 0
        %445 = vmatprep.subr.bf16.mxu0 0
        %446 = vmatpush1.bf16.msra.mxu0 0
        %447 = vmatprep.subr.bf16.mxu0 0
        %448 = vmatpush1.bf16.msra.mxu0 0
        %449 = vmatprep.subr.bf16.mxu0 0
        %450 = vmatpush1.bf16.msra.mxu0 %v385
        %451 = vmatprep.subr.bf16.mxu0 0
        %452 = vmatpush1.bf16.msra.mxu0 %v384
        %453 = vmatprep.subr.bf16.mxu0 0
        %454 = vmatpush2.bf16.msra.mxu0 0
        %455 = vmatprep.subr.bf16.mxu0 0
        %456 = vmatpush2.bf16.msra.mxu0 0
        %457 = vmatprep.subr.bf16.mxu0 0
        %458 = vmatpush2.bf16.msra.mxu0 0
        %459 = vmatprep.subr.bf16.mxu0 0
        %460 = vmatpush2.bf16.msra.mxu0 0
        %461 = vmatprep.subr.bf16.mxu0 0
        %462 = vmatpush2.bf16.msra.mxu0 0
        %463 = vmatprep.subr.bf16.mxu0 0
        %464 = vmatpush2.bf16.msra.mxu0 0
        %465 = vmatprep.subr.bf16.mxu0 0
        %466 = vmatpush2.bf16.msra.mxu0 0
        %467 = vmatprep.subr.bf16.mxu0 0
        %468 = vmatpush2.bf16.msra.mxu0 0
        %469 = vmatprep.mubr.bf16.mxu0 0
        %470 = vmatmul.mubr.bf16.gmra.mxu0 %v390
        %v471 = vpop.f32.mrf.mxu0
        %v472 = vadd.f32 %v374, %v471
        %v473 = vpop.f32.mrf.mxu0
        %v474 = vpop.f32.mrf.mxu0
        %v475 = vadd.f32 %v374, %v474
        %v476 = vpop.f32.mrf.mxu0
        %477 = vmatprep.mubr.bf16.mxu0 0
        %478 = vmatmul.mubr.bf16.gmra.mxu0 %v393
        %v479 = vpop.f32.mrf.mxu0
        %v480 = vadd.f32 %v374, %v479
        %v481 = vpop.f32.mrf.mxu0
        %v482 = vpop.f32.mrf.mxu0
        %v483 = vadd.f32 %v374, %v482
        %v484 = vpop.f32.mrf.mxu0
        %485 = vmatprep.mubr.bf16.mxu0 0
        %486 = vmatmul.mubr.bf16.gmra.mxu0 %v396
        %v487 = vpop.f32.mrf.mxu0
        %v488 = vadd.f32 %v374, %v487
        %v489 = vpop.f32.mrf.mxu0
        %v490 = vpop.f32.mrf.mxu0
        %v491 = vadd.f32 %v374, %v490
        %v492 = vpop.f32.mrf.mxu0
        %493 = vmatprep.mubr.bf16.mxu0 0
        %494 = vmatmul.mubr.bf16.gmra.mxu0 %v399
        %v495 = vpop.f32.mrf.mxu0
        %v496 = vadd.f32 %v374, %v495
        %v497 = vpop.f32.mrf.mxu0
        %v498 = vpop.f32.mrf.mxu0
        %v499 = vadd.f32 %v374, %v498
        %v500 = vpop.f32.mrf.mxu0
        %501 = vmatprep.mubr.bf16.mxu0 0
        %502 = vmatmul.mubr.bf16.gmra.mxu0 %v402
        %v503 = vpop.f32.mrf.mxu0
        %v504 = vadd.f32 %v374, %v503
        %v505 = vpop.f32.mrf.mxu0
        %v506 = vpop.f32.mrf.mxu0
        %v507 = vadd.f32 %v374, %v506
        %v508 = vpop.f32.mrf.mxu0
        %509 = vmatprep.mubr.bf16.mxu0 0
        %510 = vmatmul.mubr.bf16.gmra.mxu0 %v405
        %v511 = vpop.f32.mrf.mxu0
        %v512 = vadd.f32 %v374, %v511
        %v513 = vpop.f32.mrf.mxu0
        %v514 = vpop.f32.mrf.mxu0
        %v515 = vadd.f32 %v374, %v514
        %v516 = vpop.f32.mrf.mxu0
        %517 = vmatprep.mubr.bf16.mxu0 0
        %518 = vmatmul.mubr.bf16.gmra.mxu0 %v408
        %v519 = vpop.f32.mrf.mxu0
        %v520 = vadd.f32 %v374, %v519
        %v521 = vpop.f32.mrf.mxu0
        %v522 = vpop.f32.mrf.mxu0
        %v523 = vadd.f32 %v374, %v522
        %v524 = vpop.f32.mrf.mxu0
        %525 = vmatprep.mubr.bf16.mxu0 0
        %526 = vmatmul.mubr.bf16.gmra.mxu0 %v411
        %v527 = vpop.f32.mrf.mxu0
        %v528 = vadd.f32 %v374, %v527
        %v529 = vpop.f32.mrf.mxu0
        %v530 = vpop.f32.mrf.mxu0
        %v531 = vadd.f32 %v374, %v530
        %v532 = vpop.f32.mrf.mxu0
        %533 = vmatprep.mubr.bf16.mxu0 0
        %534 = vmatmul.mubr.bf16.gmra.mxu0 %v414
        %v535 = vpop.f32.mrf.mxu0
        %v536 = vadd.f32 %v374, %v535
        %v537 = vpop.f32.mrf.mxu0
        %v538 = vpop.f32.mrf.mxu0
        %v539 = vadd.f32 %v374, %v538
        %v540 = vpop.f32.mrf.mxu0
        %541 = vmatprep.mubr.bf16.mxu0 0
        %542 = vmatmul.mubr.bf16.gmra.mxu0 %v417
        %v543 = vpop.f32.mrf.mxu0
        %v544 = vadd.f32 %v374, %v543
        %v545 = vpop.f32.mrf.mxu0
        %v546 = vpop.f32.mrf.mxu0
        %v547 = vadd.f32 %v374, %v546
        %v548 = vpop.f32.mrf.mxu0
        %549 = vmatprep.mubr.bf16.mxu0 0
        %550 = vmatmul.mubr.bf16.gmra.mxu0 %v420
        %v551 = vpop.f32.mrf.mxu0
        %v552 = vadd.f32 %v374, %v551
        %v553 = vpop.f32.mrf.mxu0
        %v554 = vpop.f32.mrf.mxu0
        %v555 = vadd.f32 %v374, %v554
        %v556 = vpop.f32.mrf.mxu0
        %557 = vmatprep.mubr.bf16.mxu0 0
        %558 = vmatmul.mubr.bf16.gmra.mxu0 %v423
        %v559 = vpop.f32.mrf.mxu0
        %v560 = vadd.f32 %v374, %v559
        %v561 = vpop.f32.mrf.mxu0
        %v562 = vpop.f32.mrf.mxu0
        %v563 = vadd.f32 %v374, %v562
        %v564 = vpop.f32.mrf.mxu0
        %565 = vmatprep.mubr.bf16.mxu0 0
        %566 = vmatmul.mubr.bf16.gmra.mxu0 %v426
        %v567 = vpop.f32.mrf.mxu0
        %v568 = vadd.f32 %v374, %v567
        %v569 = vpop.f32.mrf.mxu0
        %v570 = vpop.f32.mrf.mxu0
        %v571 = vadd.f32 %v374, %v570
        %v572 = vpop.f32.mrf.mxu0
        %573 = vmatprep.mubr.bf16.mxu0 0
        %574 = vmatmul.mubr.bf16.gmra.mxu0 %v429
        %v575 = vpop.f32.mrf.mxu0
        %v576 = vadd.f32 %v374, %v575
        %v577 = vpop.f32.mrf.mxu0
        %v578 = vpop.f32.mrf.mxu0
        %v579 = vadd.f32 %v374, %v578
        %v580 = vpop.f32.mrf.mxu0
        %581 = vmatprep.mubr.bf16.mxu0 0
        %582 = vmatmul.mubr.bf16.gmra.mxu0 %v432
        %v583 = vpop.f32.mrf.mxu0
        %v584 = vadd.f32 %v374, %v583
        %v585 = vpop.f32.mrf.mxu0
        %v586 = vpop.f32.mrf.mxu0
        %v587 = vadd.f32 %v374, %v586
        %v588 = vpop.f32.mrf.mxu0
        %589 = vmatprep.mubr.bf16.mxu0 0
        %590 = vmatmul.mubr.bf16.gmra.mxu0 %v435
        %v591 = vpop.f32.mrf.mxu0
        %v592 = vadd.f32 %v374, %v591
        %v593 = vpop.f32.mrf.mxu0
        %v594 = vpop.f32.mrf.mxu0
        %v595 = vadd.f32 %v374, %v594
        %v596 = vpop.f32.mrf.mxu0
        %597 = vdwg.mxu0
        %v598 = vmax.f32 %v472, 0.0
        %v599 = vmax.f32 %v475, 0.0
        %v600 = vmax.f32 %v480, 0.0
        %v601 = vmax.f32 %v483, 0.0
        %v602 = vmax.f32 %v488, 0.0
        %v603 = vmax.f32 %v491, 0.0
        %v604 = vmax.f32 %v496, 0.0
        %v605 = vmax.f32 %v499, 0.0
        %v606 = vmax.f32 %v504, 0.0
        %v607 = vmax.f32 %v507, 0.0
        %v608 = vmax.f32 %v512, 0.0
        %v609 = vmax.f32 %v515, 0.0
        %v610 = vmax.f32 %v520, 0.0
        %v611 = vmax.f32 %v523, 0.0
        %v612 = vmax.f32 %v528, 0.0
        %v613 = vmax.f32 %v531, 0.0
        %v614 = vmax.f32 %v536, 0.0
        %v615 = vmax.f32 %v539, 0.0
        %v616 = vmax.f32 %v544, 0.0
        %v617 = vmax.f32 %v547, 0.0
        %v618 = vmax.f32 %v552, 0.0
        %v619 = vmax.f32 %v555, 0.0
        %v620 = vmax.f32 %v560, 0.0
        %v621 = vmax.f32 %v563, 0.0
        %v622 = vmax.f32 %v568, 0.0
        %v623 = vmax.f32 %v571, 0.0
        %v624 = vmax.f32 %v576, 0.0
        %v625 = vmax.f32 %v579, 0.0
        %v626 = vmax.f32 %v584, 0.0
        %v627 = vmax.f32 %v587, 0.0
        %v628 = vmax.f32 %v592, 0.0
        %v629 = vmax.f32 %v595, 0.0
        %v630 = vpack.c.bf16 %v599, %v598
        %v631 = vpack.c.bf16 %v601, %v600
        %v632 = vpack.c.bf16 %v603, %v602
        %v633 = vpack.c.bf16 %v605, %v604
        %v634 = vpack.c.bf16 %v607, %v606
        %v635 = vpack.c.bf16 %v609, %v608
        %v636 = vpack.c.bf16 %v611, %v610
        %v637 = vpack.c.bf16 %v613, %v612
        %v638 = vpack.c.bf16 %v615, %v614
        %v639 = vpack.c.bf16 %v617, %v616
        %v640 = vpack.c.bf16 %v619, %v618
        %v641 = vpack.c.bf16 %v621, %v620
        %v642 = vpack.c.bf16 %v623, %v622
        %v643 = vpack.c.bf16 %v625, %v624
        %v644 = vpack.c.bf16 %v627, %v626
        %v645 = vpack.c.bf16 %v629, %v628
        %v646 = vld [vmem:[%s4] sm:$0xf]
        %v647 = vld [vmem:[%s4 + $0x4] sm:$0xf]
        %v648 = vld [vmem:[%s4 + $0x8] sm:$0xf]
        %v649 = vld [vmem:[%s4 + $0xc] sm:$0xf]
        %v650 = vld [vmem:[%s4 + $0x10] sm:$0xf]
        %v651 = vld [vmem:[%s4 + $0x14] sm:$0xf]
        %v652 = vld [vmem:[%s4 + $0x18] sm:$0xf]
        %v653 = vld [vmem:[%s4 + $0x1c] sm:$0xf]
        %v654 = vld [vmem:[%s5] sm:$0x1]
        %v656 = vlaneseq
        %v657 = vshrl.u32 %v656, 7
        %v658 = vsub.s32 0, %v657
        %v659 = vrot.slane %v654, %v658
        %v669 = vunpack.c.l.b16 %v646
        %v670 = vunpack.c.l.b16 %v647
        %v671 = vunpack.c.l.b16 %v648
        %v672 = vunpack.c.l.b16 %v649
        %v673 = vunpack.c.l.b16 %v650
        %v674 = vunpack.c.l.b16 %v651
        %v675 = vunpack.c.l.b16 %v652
        %v676 = vunpack.c.l.b16 %v653
        %v677 = vpack.c.b16 %v670, %v669
        %v678 = vpack.c.b16 %v672, %v671
        %v679 = vpack.c.b16 %v674, %v673
        %v680 = vpack.c.b16 %v676, %v675
        %vm685 = vcmask 523264
        %v687 = vsel %vm685, %v630, 0
        %v690 = vsel %vm685, %v631, 0
        %v693 = vsel %vm685, %v632, 0
        %v696 = vsel %vm685, %v633, 0
        %v699 = vsel %vm685, %v634, 0
        %v702 = vsel %vm685, %v635, 0
        %v705 = vsel %vm685, %v636, 0
        %v708 = vsel %vm685, %v637, 0
        %v711 = vsel %vm685, %v638, 0
        %v714 = vsel %vm685, %v639, 0
        %v717 = vsel %vm685, %v640, 0
        %v720 = vsel %vm685, %v641, 0
        %v723 = vsel %vm685, %v642, 0
        %v726 = vsel %vm685, %v643, 0
        %v729 = vsel %vm685, %v644, 0
        %v732 = vsel %vm685, %v645, 0
        %734 = vmatprep.subr.bf16.mxu0 0
        %735 = vmatpush1.bf16.msra.mxu0 0
        %736 = vmatprep.subr.bf16.mxu0 0
        %737 = vmatpush1.bf16.msra.mxu0 0
        %738 = vmatprep.subr.bf16.mxu0 0
        %739 = vmatpush1.bf16.msra.mxu0 0
        %740 = vmatprep.subr.bf16.mxu0 0
        %741 = vmatpush1.bf16.msra.mxu0 0
        %742 = vmatprep.subr.bf16.mxu0 0
        %743 = vmatpush1.bf16.msra.mxu0 %v680
        %744 = vmatprep.subr.bf16.mxu0 0
        %745 = vmatpush1.bf16.msra.mxu0 %v679
        %746 = vmatprep.subr.bf16.mxu0 0
        %747 = vmatpush1.bf16.msra.mxu0 %v678
        %748 = vmatprep.subr.bf16.mxu0 0
        %749 = vmatpush1.bf16.msra.mxu0 %v677
        %750 = vmatprep.subr.bf16.mxu0 0
        %751 = vmatpush2.bf16.msra.mxu0 0
        %752 = vmatprep.subr.bf16.mxu0 0
        %753 = vmatpush2.bf16.msra.mxu0 0
        %754 = vmatprep.subr.bf16.mxu0 0
        %755 = vmatpush2.bf16.msra.mxu0 0
        %756 = vmatprep.subr.bf16.mxu0 0
        %757 = vmatpush2.bf16.msra.mxu0 0
        %758 = vmatprep.subr.bf16.mxu0 0
        %759 = vmatpush2.bf16.msra.mxu0 0
        %760 = vmatprep.subr.bf16.mxu0 0
        %761 = vmatpush2.bf16.msra.mxu0 0
        %762 = vmatprep.subr.bf16.mxu0 0
        %763 = vmatpush2.bf16.msra.mxu0 0
        %764 = vmatprep.subr.bf16.mxu0 0
        %765 = vmatpush2.bf16.msra.mxu0 0
        %766 = vmatprep.mubr.bf16.mxu0 0
        %767 = vmatmul.mubr.bf16.gmra.mxu0 %v687
        %v768 = vpop.f32.mrf.mxu0
        %v769 = vadd.f32 %v659, %v768
        %v770 = vpop.f32.mrf.mxu0
        %v771 = vpop.f32.mrf.mxu0
        %v772 = vadd.f32 %v659, %v771
        %v773 = vpop.f32.mrf.mxu0
        %774 = vmatprep.mubr.bf16.mxu0 0
        %775 = vmatmul.mubr.bf16.gmra.mxu0 %v690
        %v776 = vpop.f32.mrf.mxu0
        %v777 = vadd.f32 %v659, %v776
        %v778 = vpop.f32.mrf.mxu0
        %v779 = vpop.f32.mrf.mxu0
        %v780 = vadd.f32 %v659, %v779
        %v781 = vpop.f32.mrf.mxu0
        %782 = vmatprep.mubr.bf16.mxu0 0
        %783 = vmatmul.mubr.bf16.gmra.mxu0 %v693
        %v784 = vpop.f32.mrf.mxu0
        %v785 = vadd.f32 %v659, %v784
        %v786 = vpop.f32.mrf.mxu0
        %v787 = vpop.f32.mrf.mxu0
        %v788 = vadd.f32 %v659, %v787
        %v789 = vpop.f32.mrf.mxu0
        %790 = vmatprep.mubr.bf16.mxu0 0
        %791 = vmatmul.mubr.bf16.gmra.mxu0 %v696
        %v792 = vpop.f32.mrf.mxu0
        %v793 = vadd.f32 %v659, %v792
        %v794 = vpop.f32.mrf.mxu0
        %v795 = vpop.f32.mrf.mxu0
        %v796 = vadd.f32 %v659, %v795
        %v797 = vpop.f32.mrf.mxu0
        %798 = vmatprep.mubr.bf16.mxu0 0
        %799 = vmatmul.mubr.bf16.gmra.mxu0 %v699
        %v800 = vpop.f32.mrf.mxu0
        %v801 = vadd.f32 %v659, %v800
        %v802 = vpop.f32.mrf.mxu0
        %v803 = vpop.f32.mrf.mxu0
        %v804 = vadd.f32 %v659, %v803
        %v805 = vpop.f32.mrf.mxu0
        %806 = vmatprep.mubr.bf16.mxu0 0
        %807 = vmatmul.mubr.bf16.gmra.mxu0 %v702
        %v808 = vpop.f32.mrf.mxu0
        %v809 = vadd.f32 %v659, %v808
        %v810 = vpop.f32.mrf.mxu0
        %v811 = vpop.f32.mrf.mxu0
        %v812 = vadd.f32 %v659, %v811
        %v813 = vpop.f32.mrf.mxu0
        %814 = vmatprep.mubr.bf16.mxu0 0
        %815 = vmatmul.mubr.bf16.gmra.mxu0 %v705
        %v816 = vpop.f32.mrf.mxu0
        %v817 = vadd.f32 %v659, %v816
        %v818 = vpop.f32.mrf.mxu0
        %v819 = vpop.f32.mrf.mxu0
        %v820 = vadd.f32 %v659, %v819
        %v821 = vpop.f32.mrf.mxu0
        %822 = vmatprep.mubr.bf16.mxu0 0
        %823 = vmatmul.mubr.bf16.gmra.mxu0 %v708
        %v824 = vpop.f32.mrf.mxu0
        %v825 = vadd.f32 %v659, %v824
        %v826 = vpop.f32.mrf.mxu0
        %v827 = vpop.f32.mrf.mxu0
        %v828 = vadd.f32 %v659, %v827
        %v829 = vpop.f32.mrf.mxu0
        %830 = vmatprep.mubr.bf16.mxu0 0
        %831 = vmatmul.mubr.bf16.gmra.mxu0 %v711
        %v832 = vpop.f32.mrf.mxu0
        %v833 = vadd.f32 %v659, %v832
        %v834 = vpop.f32.mrf.mxu0
        %v835 = vpop.f32.mrf.mxu0
        %v836 = vadd.f32 %v659, %v835
        %v837 = vpop.f32.mrf.mxu0
        %838 = vmatprep.mubr.bf16.mxu0 0
        %839 = vmatmul.mubr.bf16.gmra.mxu0 %v714
        %v840 = vpop.f32.mrf.mxu0
        %v841 = vadd.f32 %v659, %v840
        %v842 = vpop.f32.mrf.mxu0
        %v843 = vpop.f32.mrf.mxu0
        %v844 = vadd.f32 %v659, %v843
        %v845 = vpop.f32.mrf.mxu0
        %846 = vmatprep.mubr.bf16.mxu0 0
        %847 = vmatmul.mubr.bf16.gmra.mxu0 %v717
        %v848 = vpop.f32.mrf.mxu0
        %v849 = vadd.f32 %v659, %v848
        %v850 = vpop.f32.mrf.mxu0
        %v851 = vpop.f32.mrf.mxu0
        %v852 = vadd.f32 %v659, %v851
        %v853 = vpop.f32.mrf.mxu0
        %854 = vmatprep.mubr.bf16.mxu0 0
        %855 = vmatmul.mubr.bf16.gmra.mxu0 %v720
        %v856 = vpop.f32.mrf.mxu0
        %v857 = vadd.f32 %v659, %v856
        %v858 = vpop.f32.mrf.mxu0
        %v859 = vpop.f32.mrf.mxu0
        %v860 = vadd.f32 %v659, %v859
        %v861 = vpop.f32.mrf.mxu0
        %862 = vmatprep.mubr.bf16.mxu0 0
        %863 = vmatmul.mubr.bf16.gmra.mxu0 %v723
        %v864 = vpop.f32.mrf.mxu0
        %v865 = vadd.f32 %v659, %v864
        %v866 = vpop.f32.mrf.mxu0
        %v867 = vpop.f32.mrf.mxu0
        %v868 = vadd.f32 %v659, %v867
        %v869 = vpop.f32.mrf.mxu0
        %870 = vmatprep.mubr.bf16.mxu0 0
        %871 = vmatmul.mubr.bf16.gmra.mxu0 %v726
        %v872 = vpop.f32.mrf.mxu0
        %v873 = vadd.f32 %v659, %v872
        %v874 = vpop.f32.mrf.mxu0
        %v875 = vpop.f32.mrf.mxu0
        %v876 = vadd.f32 %v659, %v875
        %v877 = vpop.f32.mrf.mxu0
        %878 = vmatprep.mubr.bf16.mxu0 0
        %879 = vmatmul.mubr.bf16.gmra.mxu0 %v729
        %v880 = vpop.f32.mrf.mxu0
        %v881 = vadd.f32 %v659, %v880
        %v882 = vpop.f32.mrf.mxu0
        %v883 = vpop.f32.mrf.mxu0
        %v884 = vadd.f32 %v659, %v883
        %v885 = vpop.f32.mrf.mxu0
        %886 = vmatprep.mubr.bf16.mxu0 0
        %887 = vmatmul.mubr.bf16.gmra.mxu0 %v732
        %v888 = vpop.f32.mrf.mxu0
        %v889 = vadd.f32 %v659, %v888
        %v890 = vpop.f32.mrf.mxu0
        %v891 = vpop.f32.mrf.mxu0
        %v892 = vadd.f32 %v659, %v891
        %v893 = vpop.f32.mrf.mxu0
        %894 = vdwg.mxu0
        %895 = vst.msk [vmem:[%s296] sm:$0xff] %vm388, %v769
        %896 = vst.msk [vmem:[%s296 + $0x8] sm:$0xff] %vm388, %v772
        %897 = vst.msk [vmem:[%s296 + $0x10] sm:$0xff] %vm388, %v777
        %898 = vst.msk [vmem:[%s296 + $0x18] sm:$0xff] %vm388, %v780
        %899 = vst.msk [vmem:[%s296 + $0x20] sm:$0xff] %vm388, %v785
        %900 = vst.msk [vmem:[%s296 + $0x28] sm:$0xff] %vm388, %v788
        %901 = vst.msk [vmem:[%s296 + $0x30] sm:$0xff] %vm388, %v793
        %902 = vst.msk [vmem:[%s296 + $0x38] sm:$0xff] %vm388, %v796
        %903 = vst.msk [vmem:[%s296 + $0x40] sm:$0xff] %vm388, %v801
        %904 = vst.msk [vmem:[%s296 + $0x48] sm:$0xff] %vm388, %v804
        %905 = vst.msk [vmem:[%s296 + $0x50] sm:$0xff] %vm388, %v809
        %906 = vst.msk [vmem:[%s296 + $0x58] sm:$0xff] %vm388, %v812
        %907 = vst.msk [vmem:[%s296 + $0x60] sm:$0xff] %vm388, %v817
        %908 = vst.msk [vmem:[%s296 + $0x68] sm:$0xff] %vm388, %v820
        %909 = vst.msk [vmem:[%s296 + $0x70] sm:$0xff] %vm388, %v825
        %910 = vst.msk [vmem:[%s296 + $0x78] sm:$0xff] %vm388, %v828
        %911 = vst.msk [vmem:[%s296 + $0x80] sm:$0xff] %vm388, %v833
        %912 = vst.msk [vmem:[%s296 + $0x88] sm:$0xff] %vm388, %v836
        %913 = vst.msk [vmem:[%s296 + $0x90] sm:$0xff] %vm388, %v841
        %914 = vst.msk [vmem:[%s296 + $0x98] sm:$0xff] %vm388, %v844
        %915 = vst.msk [vmem:[%s296 + $0xa0] sm:$0xff] %vm388, %v849
        %916 = vst.msk [vmem:[%s296 + $0xa8] sm:$0xff] %vm388, %v852
        %917 = vst.msk [vmem:[%s296 + $0xb0] sm:$0xff] %vm388, %v857
        %918 = vst.msk [vmem:[%s296 + $0xb8] sm:$0xff] %vm388, %v860
        %919 = vst.msk [vmem:[%s296 + $0xc0] sm:$0xff] %vm388, %v865
        %920 = vst.msk [vmem:[%s296 + $0xc8] sm:$0xff] %vm388, %v868
        %921 = vst.msk [vmem:[%s296 + $0xd0] sm:$0xff] %vm388, %v873
        %922 = vst.msk [vmem:[%s296 + $0xd8] sm:$0xff] %vm388, %v876
        %923 = vst.msk [vmem:[%s296 + $0xe0] sm:$0xff] %vm388, %v881
        %924 = vst.msk [vmem:[%s296 + $0xe8] sm:$0xff] %vm388, %v884
        %925 = vst.msk [vmem:[%s296 + $0xf0] sm:$0xff] %vm388, %v889
        %926 = vst.msk [vmem:[%s296 + $0xf8] sm:$0xff] %vm388, %v892
        %v927 = vld [vmem:[%s301] sm:$0xff]
        %v928 = vld [vmem:[%s301 + $0x8] sm:$0xff]
        %v929 = vld [vmem:[%s301 + $0x10] sm:$0xff]
        %v930 = vld [vmem:[%s301 + $0x18] sm:$0xff]
        %v931 = vld [vmem:[%s301 + $0x20] sm:$0xff]
        %v932 = vld [vmem:[%s301 + $0x28] sm:$0xff]
        %v933 = vld [vmem:[%s301 + $0x30] sm:$0xff]
        %v934 = vld [vmem:[%s301 + $0x38] sm:$0xff]
        %v935 = vld [vmem:[%s301 + $0x40] sm:$0xff]
        %v936 = vld [vmem:[%s301 + $0x48] sm:$0xff]
        %v937 = vld [vmem:[%s301 + $0x50] sm:$0xff]
        %v938 = vld [vmem:[%s301 + $0x58] sm:$0xff]
        %v939 = vld [vmem:[%s301 + $0x60] sm:$0xff]
        %v940 = vld [vmem:[%s301 + $0x68] sm:$0xff]
        %v941 = vld [vmem:[%s301 + $0x70] sm:$0xff]
        %v942 = vld [vmem:[%s301 + $0x78] sm:$0xff]
        %v943 = vld [vmem:[%s301 + $0x80] sm:$0xff]
        %v944 = vld [vmem:[%s301 + $0x88] sm:$0xff]
        %v945 = vld [vmem:[%s301 + $0x90] sm:$0xff]
        %v946 = vld [vmem:[%s301 + $0x98] sm:$0xff]
        %v947 = vld [vmem:[%s301 + $0xa0] sm:$0xff]
        %v948 = vld [vmem:[%s301 + $0xa8] sm:$0xff]
        %v949 = vld [vmem:[%s301 + $0xb0] sm:$0xff]
        %v950 = vld [vmem:[%s301 + $0xb8] sm:$0xff]
        %v951 = vld [vmem:[%s301 + $0xc0] sm:$0xff]
        %v952 = vld [vmem:[%s301 + $0xc8] sm:$0xff]
        %v953 = vld [vmem:[%s301 + $0xd0] sm:$0xff]
        %v954 = vld [vmem:[%s301 + $0xd8] sm:$0xff]
        %v955 = vld [vmem:[%s301 + $0xe0] sm:$0xff]
        %v956 = vld [vmem:[%s301 + $0xe8] sm:$0xff]
        %v957 = vld [vmem:[%s301 + $0xf0] sm:$0xff]
        %v958 = vld [vmem:[%s301 + $0xf8] sm:$0xff]
        %v959 = vadd.f32 %v927, %v769
        %v960 = vadd.f32 %v928, %v772
        %v961 = vadd.f32 %v929, %v777
        %v962 = vadd.f32 %v930, %v780
        %v963 = vadd.f32 %v931, %v785
        %v964 = vadd.f32 %v932, %v788
        %v965 = vadd.f32 %v933, %v793
        %v966 = vadd.f32 %v934, %v796
        %v967 = vadd.f32 %v935, %v801
        %v968 = vadd.f32 %v936, %v804
        %v969 = vadd.f32 %v937, %v809
        %v970 = vadd.f32 %v938, %v812
        %v971 = vadd.f32 %v939, %v817
        %v972 = vadd.f32 %v940, %v820
        %v973 = vadd.f32 %v941, %v825
        %v974 = vadd.f32 %v942, %v828
        %v975 = vadd.f32 %v943, %v833
        %v976 = vadd.f32 %v944, %v836
        %v977 = vadd.f32 %v945, %v841
        %v978 = vadd.f32 %v946, %v844
        %v979 = vadd.f32 %v947, %v849
        %v980 = vadd.f32 %v948, %v852
        %v981 = vadd.f32 %v949, %v857
        %v982 = vadd.f32 %v950, %v860
        %v983 = vadd.f32 %v951, %v865
        %v984 = vadd.f32 %v952, %v868
        %v985 = vadd.f32 %v953, %v873
        %v986 = vadd.f32 %v954, %v876
        %v987 = vadd.f32 %v955, %v881
        %v988 = vadd.f32 %v956, %v884
        %v989 = vadd.f32 %v957, %v889
        %v990 = vadd.f32 %v958, %v892
        %991 = vst.msk [vmem:[%s313] sm:$0xff] %vm388, %v959
        %992 = vst.msk [vmem:[%s313 + $0x8] sm:$0xff] %vm388, %v960
        %993 = vst.msk [vmem:[%s313 + $0x10] sm:$0xff] %vm388, %v961
        %994 = vst.msk [vmem:[%s313 + $0x18] sm:$0xff] %vm388, %v962
        %995 = vst.msk [vmem:[%s313 + $0x20] sm:$0xff] %vm388, %v963
        %996 = vst.msk [vmem:[%s313 + $0x28] sm:$0xff] %vm388, %v964
        %997 = vst.msk [vmem:[%s313 + $0x30] sm:$0xff] %vm388, %v965
        %998 = vst.msk [vmem:[%s313 + $0x38] sm:$0xff] %vm388, %v966
        %999 = vst.msk [vmem:[%s313 + $0x40] sm:$0xff] %vm388, %v967
        %1000 = vst.msk [vmem:[%s313 + $0x48] sm:$0xff] %vm388, %v968
        %1001 = vst.msk [vmem:[%s313 + $0x50] sm:$0xff] %vm388, %v969
        %1002 = vst.msk [vmem:[%s313 + $0x58] sm:$0xff] %vm388, %v970
        %1003 = vst.msk [vmem:[%s313 + $0x60] sm:$0xff] %vm388, %v971
        %1004 = vst.msk [vmem:[%s313 + $0x68] sm:$0xff] %vm388, %v972
        %1005 = vst.msk [vmem:[%s313 + $0x70] sm:$0xff] %vm388, %v973
        %1006 = vst.msk [vmem:[%s313 + $0x78] sm:$0xff] %vm388, %v974
        %1007 = vst.msk [vmem:[%s313 + $0x80] sm:$0xff] %vm388, %v975
        %1008 = vst.msk [vmem:[%s313 + $0x88] sm:$0xff] %vm388, %v976
        %1009 = vst.msk [vmem:[%s313 + $0x90] sm:$0xff] %vm388, %v977
        %1010 = vst.msk [vmem:[%s313 + $0x98] sm:$0xff] %vm388, %v978
        %1011 = vst.msk [vmem:[%s313 + $0xa0] sm:$0xff] %vm388, %v979
        %1012 = vst.msk [vmem:[%s313 + $0xa8] sm:$0xff] %vm388, %v980
        %1013 = vst.msk [vmem:[%s313 + $0xb0] sm:$0xff] %vm388, %v981
        %1014 = vst.msk [vmem:[%s313 + $0xb8] sm:$0xff] %vm388, %v982
        %1015 = vst.msk [vmem:[%s313 + $0xc0] sm:$0xff] %vm388, %v983
        %1016 = vst.msk [vmem:[%s313 + $0xc8] sm:$0xff] %vm388, %v984
        %1017 = vst.msk [vmem:[%s313 + $0xd0] sm:$0xff] %vm388, %v985
        %1018 = vst.msk [vmem:[%s313 + $0xd8] sm:$0xff] %vm388, %v986
        %1019 = vst.msk [vmem:[%s313 + $0xe0] sm:$0xff] %vm388, %v987
        %1020 = vst.msk [vmem:[%s313 + $0xe8] sm:$0xff] %vm388, %v988
        %1021 = vst.msk [vmem:[%s313 + $0xf0] sm:$0xff] %vm388, %v989
        %1022 = vst.msk [vmem:[%s313 + $0xf8] sm:$0xff] %vm388, %v990
        %s1023 = smul.u32 32, %s22
        %p1024 = scmp.lt.s32.totalorder %s1023, 63
        %s1025 = scalar_select %p1024, %s1023, 63
        %s1026 = smul.addr %s1025, 8
        %s1027 = scalar_lea.vmem %s6, %s1026
        %s1028 = sand.u32 %s192, 1
        %s1029 = scalar_lea.sflag [#allocation3], %s1028
        %s1030 = sand.u32 %s192, 1
        %s1031 = smul.addr %s1030, 256
        %s1032 = scalar_lea.vmem [#allocation2], %s1031
        // Predicated region
        $region45: #{fno_forward.17} parent=43 // pred_check
          %p1033 = pneg %p176
        $region46: #{fno_forward.17} parent=43 // pred_check_branch
          %1035 = sbr.rel (%p1033) target = $region48
        $region47: #{fno_forward.17} parent=43 // pred_region
          %s1036 = smul.u32 32, %s22
        $region48: #{fno_forward.17} parent=43 // pred_fallthru
          _
        // Predicated region
        $region49: #{fno_forward.17} parent=43 // pred_check
          %p1037 = pneg %p202
        $region50: #{fno_forward.17} parent=43 // pred_check_branch
          %1039 = sbr.rel (%p1037) target = $region52
        $region51: #{fno_forward.17} parent=43 // pred_region
          %s1040 = smul.u32 32, %s22
          %s1042 = ssub.s32 4096, 4096
          %1043 = vsyncadd %s1029, %s1042
          %s1044 = smul.addr %s1040, 128
          %s1045 = scalar_lea.hbm %s7, %s1044
          %s1046 = sshll.u32 %s1032, 4
          %s1047 = int_to_ptr.vmem [resolvable:$true] %s1046
          %1052 = dma.vmem_to_hbm [thread:$0]  %s1047, 4096, %s1045, %s1029, 128, 128, 8
        $region52: #{fno_forward.17} parent=43 // pred_fallthru
          _
      $region44: #{fno_forward.17} parent=5 // pred_fallthru
        _
      %p1053 = scmp.le.s32.totalorder 2, %s17
      // Predicated region
      $region53: #{fno_forward.17} parent=5 // pred_check
        %p1054 = pneg %p1053
      $region54: #{fno_forward.17} parent=5 // pred_check_branch
        %1056 = sbr.rel (%p1054) target = $region56
      $region55: #{fno_forward.17} parent=5 // pred_region
        %s1057 = ssub.s32 %s17, 2
        // Predicated region
        $region57: #{fno_forward.17} parent=55 // pred_check
          %p1058 = pneg %p182
        $region58: #{fno_forward.17} parent=55 // pred_check_branch
          %1060 = sbr.rel (%p1058) target = $region60
        $region59: #{fno_forward.17} parent=55 // pred_region
          %s1061 = smul.u32 32, %s23
          %p1062 = scmp.lt.s32.totalorder %s1061, 63
          %s1063 = scalar_select %p1062, %s1061, 63
          %s1064 = smul.addr %s1063, 8
          %s1065 = scalar_lea.vmem %s6, %s1064
        $region60: #{fno_forward.17} parent=55 // pred_fallthru
          _
        // Predicated region
        $region61: #{fno_forward.17} parent=55 // pred_check
          %p1066 = pneg %p208
        $region62: #{fno_forward.17} parent=55 // pred_check_branch
          %1068 = sbr.rel (%p1066) target = $region64
        $region63: #{fno_forward.17} parent=55 // pred_region
          %s1069 = sand.u32 %s193, 1
          %s1070 = scalar_lea.sflag [#allocation3], %s1069
          %s1071 = sand.u32 %s193, 1
          %s1072 = smul.addr %s1071, 256
          %s1073 = scalar_lea.vmem [#allocation2], %s1072
          %1074 = dma.done %s1070, 4096
        $region64: #{fno_forward.17} parent=55 // pred_fallthru
          _
      $region56: #{fno_forward.17} parent=5 // pred_fallthru
        _
    $region6: #{fno_forward.17} parent=1 // loop_footer
      %s21 = sadd.s32 1, %s17
    $region7: #{fno_forward.17} parent=1 // loop_footer_branch
      %16 = sbr.rel target = $region3
    $region8: #{fno_forward.17} parent=1 // loop_exit
      _
    %1075 = vsyncpa [#allocation3], 1
    %s1076 = scalar_lea.sflag [#allocation3], 1
    %1077 = vsyncpa %s1076, 1

// kernel: fno_forward.27
$region0: #{fno_forward.27}
  #allocation0 [shape = 'u32[]', space=smem, size = 0x4, offset = 0x4, fixed_abs, tag = 'smem constant byte address 0x4 - core index']
  #allocation1 [shape = 'u32[144,128]{1,0:T(1,128)}', space=vmem, size = 0x12000, scoped, tag = 'internal scratch']
  #allocation2 [shape = 'f32[1,1]{1,0:T(1,128)S(1)}', space=vmem, size = 0x200, scoped, tag = 'scoped memory for fno_forward.27']
  %s0 = inlined_call_operand.vmem [shape: f32[512,32], index: 0, kind: input, shape index: {}]
  %s1 = inlined_call_operand.vmem [shape: bf16[32,1], index: 1, kind: input, shape index: {}]
  %s2 = inlined_call_operand.<no memory space> [shape: f32[1,1], index: 2, kind: input, shape index: {}]
  %s3 = inlined_call_operand.vmem [shape: f32[512,1], index: 3, kind: output, shape index: {}]
  %s4 = sld [smem:[#allocation0]]
  $region45: #{fno_forward.27} parent=0
    _
  %s6 = ssub.s32 1, %s4
  %s7 = scalar_select 0, %s6, %s4
  %v8 = vstv %s2
  %9 = vst [vmem:[#allocation2] sm:$0x1] %v8
  loop: start=0, step=1, limit=4
  $region2: #{fno_forward.27} parent=0 // loop_pre_header
    _
  $region3: #{fno_forward.27} parent=0 // loop_header
    %s11 = sphi 0, %s15
    %p12 = scmp.ge.s32.totalorder %s11, 4
    %s21 = sphi 0, %s23
    %s24 = sphi 0, %s21
    %s25 = sphi 0, %s24
    %s41 = sphi 0, %s25
    %s45 = sphi 0, %s45
    %s47 = sphi 0, %s45
    %s48 = sphi 0, %s47
    %s62 = sphi 0, %s48
    %s66 = sphi 0, %s66
    %s68 = sphi 0, %s66
    %s69 = sphi 0, %s68
    %s83 = sphi 0, %s69
    %s89 = sphi 0, %s91
    %s92 = sphi 0, %s89
    %s93 = sphi 0, %s92
    %s109 = sphi 0, %s93
  $region4: #{fno_forward.27} parent=0 // loop_header_branch
    %14 = sbr.rel (%p12) target = $region8
  $region5: #{fno_forward.27} parent=0 // loop_body
    %s16 = ssub.s32 %s11, 1
    %s17 = ssub.s32 %s11, 2
    %s18 = sadd.s32 %s11, 1
    %s19 = ssub.s32 %s11, %s18
    %p20 = scmp.eq.s32.totalorder %s19, 0
    %s22 = sadd.s32 %s21, 1
    %s23 = scalar_select %p20, %s21, %s22
    %p26 = pneg %p20
    %p27 = scmp.eq.s32.totalorder %s11, 1
    %p28 = por %p26, %p27
    %p29 = scmp.ne.s32.totalorder %s21, %s24
    %p30 = scmp.eq.s32.totalorder %s11, 0
    %p31 = por %p29, %p30
    %p32 = scmp.ne.s32.totalorder %s21, %s24
    %p33 = scmp.eq.s32.totalorder %s16, 1
    %p34 = por %p32, %p33
    %p35 = scmp.ne.s32.totalorder %s24, %s25
    %p36 = scmp.eq.s32.totalorder %s16, 0
    %p37 = por %p35, %p36
    %p38 = scmp.ne.s32.totalorder %s24, %s25
    %p39 = scmp.eq.s32.totalorder %s17, 1
    %p40 = por %p38, %p39
    %p42 = scmp.ne.s32.totalorder %s25, %s41
    %p43 = scmp.eq.s32.totalorder %s17, 0
    %p44 = por %p42, %p43
    %s46 = sadd.s32 %s45, 1
    %p49 = scmp.eq.s32.totalorder %s11, 1
    %p50 = scmp.ne.s32.totalorder %s45, %s47
    %p51 = scmp.eq.s32.totalorder %s11, 0
    %p52 = por %p50, %p51
    %p53 = scmp.ne.s32.totalorder %s45, %s47
    %p54 = scmp.eq.s32.totalorder %s16, 1
    %p55 = por %p53, %p54
    %p56 = scmp.ne.s32.totalorder %s47, %s48
    %p57 = scmp.eq.s32.totalorder %s16, 0
    %p58 = por %p56, %p57
    %p59 = scmp.ne.s32.totalorder %s47, %s48
    %p60 = scmp.eq.s32.totalorder %s17, 1
    %p61 = por %p59, %p60
    %p63 = scmp.ne.s32.totalorder %s48, %s62
    %p64 = scmp.eq.s32.totalorder %s17, 0
    %p65 = por %p63, %p64
    %s67 = sadd.s32 %s66, 1
    %p70 = scmp.eq.s32.totalorder %s11, 1
    %p71 = scmp.ne.s32.totalorder %s66, %s68
    %p72 = scmp.eq.s32.totalorder %s11, 0
    %p73 = por %p71, %p72
    %p74 = scmp.ne.s32.totalorder %s66, %s68
    %p75 = scmp.eq.s32.totalorder %s16, 1
    %p76 = por %p74, %p75
    %p77 = scmp.ne.s32.totalorder %s68, %s69
    %p78 = scmp.eq.s32.totalorder %s16, 0
    %p79 = por %p77, %p78
    %p80 = scmp.ne.s32.totalorder %s68, %s69
    %p81 = scmp.eq.s32.totalorder %s17, 1
    %p82 = por %p80, %p81
    %p84 = scmp.ne.s32.totalorder %s69, %s83
    %p85 = scmp.eq.s32.totalorder %s17, 0
    %p86 = por %p84, %p85
    %s87 = ssub.s32 %s11, %s18
    %p88 = scmp.eq.s32.totalorder %s87, 0
    %s90 = sadd.s32 %s89, 1
    %s91 = scalar_select %p88, %s89, %s90
    %p94 = pneg %p88
    %p95 = scmp.eq.s32.totalorder %s11, 1
    %p96 = por %p94, %p95
    %p97 = scmp.ne.s32.totalorder %s89, %s92
    %p98 = scmp.eq.s32.totalorder %s11, 0
    %p99 = por %p97, %p98
    %p100 = scmp.ne.s32.totalorder %s89, %s92
    %p101 = scmp.eq.s32.totalorder %s16, 1
    %p102 = por %p100, %p101
    %p103 = scmp.ne.s32.totalorder %s92, %s93
    %p104 = scmp.eq.s32.totalorder %s16, 0
    %p105 = por %p103, %p104
    %p106 = scmp.ne.s32.totalorder %s92, %s93
    %p107 = scmp.eq.s32.totalorder %s17, 1
    %p108 = por %p106, %p107
    %p110 = scmp.ne.s32.totalorder %s93, %s109
    %p111 = scmp.eq.s32.totalorder %s17, 0
    %p112 = por %p110, %p111
    %p113 = scmp.le.s32.totalorder 1, %s11
    %p114 = scmp.lt.s32.totalorder %s11, 3
    %p115 = pnand %p113, %p114
    %p116 = pneg %p115
    // Predicated region
    $region9: #{fno_forward.27} parent=5 // pred_check
      _
    $region10: #{fno_forward.27} parent=5 // pred_check_branch
      %118 = sbr.rel (%p115) target = $region12
    $region11: #{fno_forward.27} parent=5 // pred_region
      %s119 = ssub.s32 %s11, 1
      // Predicated region
      $region13: #{fno_forward.27} parent=11 // pred_check
        %p120 = pneg %p58
      $region14: #{fno_forward.27} parent=11 // pred_check_branch
        %122 = sbr.rel (%p120) target = $region16
      $region15: #{fno_forward.27} parent=11 // pred_region
        _
      $region16: #{fno_forward.27} parent=11 // pred_fallthru
        _
      // Predicated region
      $region17: #{fno_forward.27} parent=11 // pred_check
        %p123 = pneg %p79
      $region18: #{fno_forward.27} parent=11 // pred_check_branch
        %125 = sbr.rel (%p123) target = $region20
      $region19: #{fno_forward.27} parent=11 // pred_region
        _
      $region20: #{fno_forward.27} parent=11 // pred_fallthru
        _
    $region12: #{fno_forward.27} parent=5 // pred_fallthru
      _
    %p126 = scmp.lt.s32.totalorder %s11, 2
    // Predicated region
    $region21: #{fno_forward.27} parent=5 // pred_check
      %p127 = pneg %p126
    $region22: #{fno_forward.27} parent=5 // pred_check_branch
      %129 = sbr.rel (%p127) target = $region24
    $region23: #{fno_forward.27} parent=5 // pred_region
      // Predicated region
      $region25: #{fno_forward.27} parent=23 // pred_check
        %p130 = pneg %p31
      $region26: #{fno_forward.27} parent=23 // pred_check_branch
        %132 = sbr.rel (%p130) target = $region28
      $region27: #{fno_forward.27} parent=23 // pred_region
        %s133 = smul.u32 32, %s11
        %p134 = scmp.lt.s32.totalorder %s133, 63
        %s135 = scalar_select %p134, %s133, 63
        %s136 = smul.addr %s135, 8
        %s137 = scalar_lea.vmem %s0, %s136
        %s138 = smul.u32 32, %s11
      $region28: #{fno_forward.27} parent=23 // pred_fallthru
        _
    $region24: #{fno_forward.27} parent=5 // pred_fallthru
      _
    %p139 = scmp.le.s32.totalorder 1, %s11
    %p140 = scmp.lt.s32.totalorder %s11, 3
    %p141 = pnand %p139, %p140
    %p142 = pneg %p141
    // Predicated region
    $region29: #{fno_forward.27} parent=5 // pred_check
      _
    $region30: #{fno_forward.27} parent=5 // pred_check_branch
      %144 = sbr.rel (%p141) target = $region32
    $region31: #{fno_forward.27} parent=5 // pred_region
      %s145 = ssub.s32 %s11, 1
      %s146 = smul.u32 32, %s16
      %p147 = scmp.lt.s32.totalorder %s146, 63
      %s148 = scalar_select %p147, %s146, 63
      %s149 = smul.addr %s148, 8
      %s150 = scalar_lea.vmem %s0, %s149
      %p151 = pneg %p37
      %p152 = pneg %p34
      %p153 = pneg %p58
      %p154 = pneg %p55
      %p155 = pneg %p79
      %p156 = pneg %p76
      %p157 = pneg %p105
      %p158 = pneg %p102
      %s159 = smul.u32 32, %s16
      %p160 = scmp.lt.s32.totalorder %s159, 63
      %s161 = scalar_select %p160, %s159, 63
      %s162 = smul.addr %s161, 8
      %s163 = scalar_lea.vmem %s3, %s162
      %s164 = smul.u32 32, %s16
      %p165 = scmp.lt.s32.totalorder %s164, 63
      %s166 = scalar_select %p165, %s164, 63
      %s167 = smul.addr %s166, 8
      %s168 = scalar_lea.vmem %s0, %s167
      %s169 = smul.u32 32, %s16
      %s170 = smul.u32 32, %s16
      %p171 = scmp.lt.s32.totalorder %s170, 63
      %s172 = scalar_select %p171, %s170, 63
      %s173 = smul.addr %s172, 8
      %s174 = scalar_lea.vmem %s3, %s173
      %s175 = smul.u32 32, %s16
      %v177 = vld [vmem:[%s168] sm:$0xff]
      %v178 = vld [vmem:[%s168 + $0x8] sm:$0xff]
      %v179 = vld [vmem:[%s168 + $0x10] sm:$0xff]
      %v180 = vld [vmem:[%s168 + $0x18] sm:$0xff]
      %v181 = vld [vmem:[%s168 + $0x20] sm:$0xff]
      %v182 = vld [vmem:[%s168 + $0x28] sm:$0xff]
      %v183 = vld [vmem:[%s168 + $0x30] sm:$0xff]
      %v184 = vld [vmem:[%s168 + $0x38] sm:$0xff]
      %v185 = vld [vmem:[%s168 + $0x40] sm:$0xff]
      %v186 = vld [vmem:[%s168 + $0x48] sm:$0xff]
      %v187 = vld [vmem:[%s168 + $0x50] sm:$0xff]
      %v188 = vld [vmem:[%s168 + $0x58] sm:$0xff]
      %v189 = vld [vmem:[%s168 + $0x60] sm:$0xff]
      %v190 = vld [vmem:[%s168 + $0x68] sm:$0xff]
      %v191 = vld [vmem:[%s168 + $0x70] sm:$0xff]
      %v192 = vld [vmem:[%s168 + $0x78] sm:$0xff]
      %v193 = vld [vmem:[%s168 + $0x80] sm:$0xff]
      %v194 = vld [vmem:[%s168 + $0x88] sm:$0xff]
      %v195 = vld [vmem:[%s168 + $0x90] sm:$0xff]
      %v196 = vld [vmem:[%s168 + $0x98] sm:$0xff]
      %v197 = vld [vmem:[%s168 + $0xa0] sm:$0xff]
      %v198 = vld [vmem:[%s168 + $0xa8] sm:$0xff]
      %v199 = vld [vmem:[%s168 + $0xb0] sm:$0xff]
      %v200 = vld [vmem:[%s168 + $0xb8] sm:$0xff]
      %v201 = vld [vmem:[%s168 + $0xc0] sm:$0xff]
      %v202 = vld [vmem:[%s168 + $0xc8] sm:$0xff]
      %v203 = vld [vmem:[%s168 + $0xd0] sm:$0xff]
      %v204 = vld [vmem:[%s168 + $0xd8] sm:$0xff]
      %v205 = vld [vmem:[%s168 + $0xe0] sm:$0xff]
      %v206 = vld [vmem:[%s168 + $0xe8] sm:$0xff]
      %v207 = vld [vmem:[%s168 + $0xf0] sm:$0xff]
      %v208 = vld [vmem:[%s168 + $0xf8] sm:$0xff]
      %v209 = vpack.c.bf16 %v178, %v177
      %v210 = vpack.c.bf16 %v180, %v179
      %v211 = vpack.c.bf16 %v182, %v181
      %v212 = vpack.c.bf16 %v184, %v183
      %v213 = vpack.c.bf16 %v186, %v185
      %v214 = vpack.c.bf16 %v188, %v187
      %v215 = vpack.c.bf16 %v190, %v189
      %v216 = vpack.c.bf16 %v192, %v191
      %v217 = vpack.c.bf16 %v194, %v193
      %v218 = vpack.c.bf16 %v196, %v195
      %v219 = vpack.c.bf16 %v198, %v197
      %v220 = vpack.c.bf16 %v200, %v199
      %v221 = vpack.c.bf16 %v202, %v201
      %v222 = vpack.c.bf16 %v204, %v203
      %v223 = vpack.c.bf16 %v206, %v205
      %v224 = vpack.c.bf16 %v208, %v207
      %v225 = vld [vmem:[%s1] sm:$0xf]
      %v226 = vld [vmem:[%s1 + $0x4] sm:$0xf]
      %v227 = vld [vmem:[%s1 + $0x8] sm:$0xf]
      %v228 = vld [vmem:[%s1 + $0xc] sm:$0xf]
      %v229 = vld [vmem:[#allocation2] sm:$0x1]
      %v231 = vlaneseq
      %v232 = vshrl.u32 %v231, 7
      %v233 = vsub.s32 0, %v232
      %v234 = vrot.slane %v229, %v233
      %v240 = vunpack.c.l.b16 %v225
      %v241 = vunpack.c.l.b16 %v226
      %v242 = vunpack.c.l.b16 %v227
      %v243 = vunpack.c.l.b16 %v228
      %v244 = vpack.c.b16 %v241, %v240
      %v245 = vpack.c.b16 %v243, %v242
      %vm248 = vcmask 261120
      %v250 = vsel %vm248, %v209, 0
      %v253 = vsel %vm248, %v210, 0
      %v256 = vsel %vm248, %v211, 0
      %v259 = vsel %vm248, %v212, 0
      %v262 = vsel %vm248, %v213, 0
      %v265 = vsel %vm248, %v214, 0
      %v268 = vsel %vm248, %v215, 0
      %v271 = vsel %vm248, %v216, 0
      %v274 = vsel %vm248, %v217, 0
      %v277 = vsel %vm248, %v218, 0
      %v280 = vsel %vm248, %v219, 0
      %v283 = vsel %vm248, %v220, 0
      %v286 = vsel %vm248, %v221, 0
      %v289 = vsel %vm248, %v222, 0
      %v292 = vsel %vm248, %v223, 0
      %v295 = vsel %vm248, %v224, 0
      %297 = vmatprep.subr.bf16.mxu0 0
      %298 = vmatpush1.bf16.msra.mxu0 0
      %299 = vmatprep.subr.bf16.mxu0 0
      %300 = vmatpush1.bf16.msra.mxu0 0
      %301 = vmatprep.subr.bf16.mxu0 0
      %302 = vmatpush1.bf16.msra.mxu0 0
      %303 = vmatprep.subr.bf16.mxu0 0
      %304 = vmatpush1.bf16.msra.mxu0 0
      %305 = vmatprep.subr.bf16.mxu0 0
      %306 = vmatpush1.bf16.msra.mxu0 0
      %307 = vmatprep.subr.bf16.mxu0 0
      %308 = vmatpush1.bf16.msra.mxu0 0
      %309 = vmatprep.subr.bf16.mxu0 0
      %310 = vmatpush1.bf16.msra.mxu0 %v245
      %311 = vmatprep.subr.bf16.mxu0 0
      %312 = vmatpush1.bf16.msra.mxu0 %v244
      %313 = vmatprep.subr.bf16.mxu0 0
      %314 = vmatpush2.bf16.msra.mxu0 0
      %315 = vmatprep.subr.bf16.mxu0 0
      %316 = vmatpush2.bf16.msra.mxu0 0
      %317 = vmatprep.subr.bf16.mxu0 0
      %318 = vmatpush2.bf16.msra.mxu0 0
      %319 = vmatprep.subr.bf16.mxu0 0
      %320 = vmatpush2.bf16.msra.mxu0 0
      %321 = vmatprep.subr.bf16.mxu0 0
      %322 = vmatpush2.bf16.msra.mxu0 0
      %323 = vmatprep.subr.bf16.mxu0 0
      %324 = vmatpush2.bf16.msra.mxu0 0
      %325 = vmatprep.subr.bf16.mxu0 0
      %326 = vmatpush2.bf16.msra.mxu0 0
      %327 = vmatprep.subr.bf16.mxu0 0
      %328 = vmatpush2.bf16.msra.mxu0 0
      %329 = vmatprep.mubr.bf16.mxu0 0
      %330 = vmatmul.mubr.bf16.gmra.mxu0 %v250
      %v331 = vpop.f32.mrf.mxu0
      %v332 = vadd.f32 %v234, %v331
      %v333 = vpop.f32.mrf.mxu0
      %v334 = vpop.f32.mrf.mxu0
      %v335 = vadd.f32 %v234, %v334
      %v336 = vpop.f32.mrf.mxu0
      %337 = vmatprep.mubr.bf16.mxu0 0
      %338 = vmatmul.mubr.bf16.gmra.mxu0 %v253
      %v339 = vpop.f32.mrf.mxu0
      %v340 = vadd.f32 %v234, %v339
      %v341 = vpop.f32.mrf.mxu0
      %v342 = vpop.f32.mrf.mxu0
      %v343 = vadd.f32 %v234, %v342
      %v344 = vpop.f32.mrf.mxu0
      %345 = vmatprep.mubr.bf16.mxu0 0
      %346 = vmatmul.mubr.bf16.gmra.mxu0 %v256
      %v347 = vpop.f32.mrf.mxu0
      %v348 = vadd.f32 %v234, %v347
      %v349 = vpop.f32.mrf.mxu0
      %v350 = vpop.f32.mrf.mxu0
      %v351 = vadd.f32 %v234, %v350
      %v352 = vpop.f32.mrf.mxu0
      %353 = vmatprep.mubr.bf16.mxu0 0
      %354 = vmatmul.mubr.bf16.gmra.mxu0 %v259
      %v355 = vpop.f32.mrf.mxu0
      %v356 = vadd.f32 %v234, %v355
      %v357 = vpop.f32.mrf.mxu0
      %v358 = vpop.f32.mrf.mxu0
      %v359 = vadd.f32 %v234, %v358
      %v360 = vpop.f32.mrf.mxu0
      %361 = vmatprep.mubr.bf16.mxu0 0
      %362 = vmatmul.mubr.bf16.gmra.mxu0 %v262
      %v363 = vpop.f32.mrf.mxu0
      %v364 = vadd.f32 %v234, %v363
      %v365 = vpop.f32.mrf.mxu0
      %v366 = vpop.f32.mrf.mxu0
      %v367 = vadd.f32 %v234, %v366
      %v368 = vpop.f32.mrf.mxu0
      %369 = vmatprep.mubr.bf16.mxu0 0
      %370 = vmatmul.mubr.bf16.gmra.mxu0 %v265
      %v371 = vpop.f32.mrf.mxu0
      %v372 = vadd.f32 %v234, %v371
      %v373 = vpop.f32.mrf.mxu0
      %v374 = vpop.f32.mrf.mxu0
      %v375 = vadd.f32 %v234, %v374
      %v376 = vpop.f32.mrf.mxu0
      %377 = vmatprep.mubr.bf16.mxu0 0
      %378 = vmatmul.mubr.bf16.gmra.mxu0 %v268
      %v379 = vpop.f32.mrf.mxu0
      %v380 = vadd.f32 %v234, %v379
      %v381 = vpop.f32.mrf.mxu0
      %v382 = vpop.f32.mrf.mxu0
      %v383 = vadd.f32 %v234, %v382
      %v384 = vpop.f32.mrf.mxu0
      %385 = vmatprep.mubr.bf16.mxu0 0
      %386 = vmatmul.mubr.bf16.gmra.mxu0 %v271
      %v387 = vpop.f32.mrf.mxu0
      %v388 = vadd.f32 %v234, %v387
      %v389 = vpop.f32.mrf.mxu0
      %v390 = vpop.f32.mrf.mxu0
      %v391 = vadd.f32 %v234, %v390
      %v392 = vpop.f32.mrf.mxu0
      %393 = vmatprep.mubr.bf16.mxu0 0
      %394 = vmatmul.mubr.bf16.gmra.mxu0 %v274
      %v395 = vpop.f32.mrf.mxu0
      %v396 = vadd.f32 %v234, %v395
      %v397 = vpop.f32.mrf.mxu0
      %v398 = vpop.f32.mrf.mxu0
      %v399 = vadd.f32 %v234, %v398
      %v400 = vpop.f32.mrf.mxu0
      %401 = vmatprep.mubr.bf16.mxu0 0
      %402 = vmatmul.mubr.bf16.gmra.mxu0 %v277
      %v403 = vpop.f32.mrf.mxu0
      %v404 = vadd.f32 %v234, %v403
      %v405 = vpop.f32.mrf.mxu0
      %v406 = vpop.f32.mrf.mxu0
      %v407 = vadd.f32 %v234, %v406
      %v408 = vpop.f32.mrf.mxu0
      %409 = vmatprep.mubr.bf16.mxu0 0
      %410 = vmatmul.mubr.bf16.gmra.mxu0 %v280
      %v411 = vpop.f32.mrf.mxu0
      %v412 = vadd.f32 %v234, %v411
      %v413 = vpop.f32.mrf.mxu0
      %v414 = vpop.f32.mrf.mxu0
      %v415 = vadd.f32 %v234, %v414
      %v416 = vpop.f32.mrf.mxu0
      %417 = vmatprep.mubr.bf16.mxu0 0
      %418 = vmatmul.mubr.bf16.gmra.mxu0 %v283
      %v419 = vpop.f32.mrf.mxu0
      %v420 = vadd.f32 %v234, %v419
      %v421 = vpop.f32.mrf.mxu0
      %v422 = vpop.f32.mrf.mxu0
      %v423 = vadd.f32 %v234, %v422
      %v424 = vpop.f32.mrf.mxu0
      %425 = vmatprep.mubr.bf16.mxu0 0
      %426 = vmatmul.mubr.bf16.gmra.mxu0 %v286
      %v427 = vpop.f32.mrf.mxu0
      %v428 = vadd.f32 %v234, %v427
      %v429 = vpop.f32.mrf.mxu0
      %v430 = vpop.f32.mrf.mxu0
      %v431 = vadd.f32 %v234, %v430
      %v432 = vpop.f32.mrf.mxu0
      %433 = vmatprep.mubr.bf16.mxu0 0
      %434 = vmatmul.mubr.bf16.gmra.mxu0 %v289
      %v435 = vpop.f32.mrf.mxu0
      %v436 = vadd.f32 %v234, %v435
      %v437 = vpop.f32.mrf.mxu0
      %v438 = vpop.f32.mrf.mxu0
      %v439 = vadd.f32 %v234, %v438
      %v440 = vpop.f32.mrf.mxu0
      %441 = vmatprep.mubr.bf16.mxu0 0
      %442 = vmatmul.mubr.bf16.gmra.mxu0 %v292
      %v443 = vpop.f32.mrf.mxu0
      %v444 = vadd.f32 %v234, %v443
      %v445 = vpop.f32.mrf.mxu0
      %v446 = vpop.f32.mrf.mxu0
      %v447 = vadd.f32 %v234, %v446
      %v448 = vpop.f32.mrf.mxu0
      %449 = vmatprep.mubr.bf16.mxu0 0
      %450 = vmatmul.mubr.bf16.gmra.mxu0 %v295
      %v451 = vpop.f32.mrf.mxu0
      %v452 = vadd.f32 %v234, %v451
      %v453 = vpop.f32.mrf.mxu0
      %v454 = vpop.f32.mrf.mxu0
      %v455 = vadd.f32 %v234, %v454
      %v456 = vpop.f32.mrf.mxu0
      %457 = vdwg.mxu0
      %vm458 = vcmask 7168
      %459 = vst.msk [vmem:[%s174] sm:$0xff] %vm458, %v332
      %460 = vst.msk [vmem:[%s174 + $0x8] sm:$0xff] %vm458, %v335
      %461 = vst.msk [vmem:[%s174 + $0x10] sm:$0xff] %vm458, %v340
      %462 = vst.msk [vmem:[%s174 + $0x18] sm:$0xff] %vm458, %v343
      %463 = vst.msk [vmem:[%s174 + $0x20] sm:$0xff] %vm458, %v348
      %464 = vst.msk [vmem:[%s174 + $0x28] sm:$0xff] %vm458, %v351
      %465 = vst.msk [vmem:[%s174 + $0x30] sm:$0xff] %vm458, %v356
      %466 = vst.msk [vmem:[%s174 + $0x38] sm:$0xff] %vm458, %v359
      %467 = vst.msk [vmem:[%s174 + $0x40] sm:$0xff] %vm458, %v364
      %468 = vst.msk [vmem:[%s174 + $0x48] sm:$0xff] %vm458, %v367
      %469 = vst.msk [vmem:[%s174 + $0x50] sm:$0xff] %vm458, %v372
      %470 = vst.msk [vmem:[%s174 + $0x58] sm:$0xff] %vm458, %v375
      %471 = vst.msk [vmem:[%s174 + $0x60] sm:$0xff] %vm458, %v380
      %472 = vst.msk [vmem:[%s174 + $0x68] sm:$0xff] %vm458, %v383
      %473 = vst.msk [vmem:[%s174 + $0x70] sm:$0xff] %vm458, %v388
      %474 = vst.msk [vmem:[%s174 + $0x78] sm:$0xff] %vm458, %v391
      %475 = vst.msk [vmem:[%s174 + $0x80] sm:$0xff] %vm458, %v396
      %476 = vst.msk [vmem:[%s174 + $0x88] sm:$0xff] %vm458, %v399
      %477 = vst.msk [vmem:[%s174 + $0x90] sm:$0xff] %vm458, %v404
      %478 = vst.msk [vmem:[%s174 + $0x98] sm:$0xff] %vm458, %v407
      %479 = vst.msk [vmem:[%s174 + $0xa0] sm:$0xff] %vm458, %v412
      %480 = vst.msk [vmem:[%s174 + $0xa8] sm:$0xff] %vm458, %v415
      %481 = vst.msk [vmem:[%s174 + $0xb0] sm:$0xff] %vm458, %v420
      %482 = vst.msk [vmem:[%s174 + $0xb8] sm:$0xff] %vm458, %v423
      %483 = vst.msk [vmem:[%s174 + $0xc0] sm:$0xff] %vm458, %v428
      %484 = vst.msk [vmem:[%s174 + $0xc8] sm:$0xff] %vm458, %v431
      %485 = vst.msk [vmem:[%s174 + $0xd0] sm:$0xff] %vm458, %v436
      %486 = vst.msk [vmem:[%s174 + $0xd8] sm:$0xff] %vm458, %v439
      %487 = vst.msk [vmem:[%s174 + $0xe0] sm:$0xff] %vm458, %v444
      %488 = vst.msk [vmem:[%s174 + $0xe8] sm:$0xff] %vm458, %v447
      %489 = vst.msk [vmem:[%s174 + $0xf0] sm:$0xff] %vm458, %v452
      %490 = vst.msk [vmem:[%s174 + $0xf8] sm:$0xff] %vm458, %v455
      %s491 = smul.u32 32, %s16
      %p492 = scmp.lt.s32.totalorder %s491, 63
      %s493 = scalar_select %p492, %s491, 63
      %s494 = smul.addr %s493, 8
      %s495 = scalar_lea.vmem %s3, %s494
      // Predicated region
      $region33: #{fno_forward.27} parent=31 // pred_check
        %p496 = pneg %p102
      $region34: #{fno_forward.27} parent=31 // pred_check_branch
        %498 = sbr.rel (%p496) target = $region36
      $region35: #{fno_forward.27} parent=31 // pred_region
        %s499 = smul.u32 32, %s16
      $region36: #{fno_forward.27} parent=31 // pred_fallthru
        _
    $region32: #{fno_forward.27} parent=5 // pred_fallthru
      _
    %p500 = scmp.le.s32.totalorder 2, %s11
    // Predicated region
    $region37: #{fno_forward.27} parent=5 // pred_check
      %p501 = pneg %p500
    $region38: #{fno_forward.27} parent=5 // pred_check_branch
      %503 = sbr.rel (%p501) target = $region40
    $region39: #{fno_forward.27} parent=5 // pred_region
      %s504 = ssub.s32 %s11, 2
      // Predicated region
      $region41: #{fno_forward.27} parent=39 // pred_check
        %p505 = pneg %p108
      $region42: #{fno_forward.27} parent=39 // pred_check_branch
        %507 = sbr.rel (%p505) target = $region44
      $region43: #{fno_forward.27} parent=39 // pred_region
        %s508 = smul.u32 32, %s17
        %p509 = scmp.lt.s32.totalorder %s508, 63
        %s510 = scalar_select %p509, %s508, 63
        %s511 = smul.addr %s510, 8
        %s512 = scalar_lea.vmem %s3, %s511
      $region44: #{fno_forward.27} parent=39 // pred_fallthru
        _
    $region40: #{fno_forward.27} parent=5 // pred_fallthru
      _
  $region6: #{fno_forward.27} parent=0 // loop_footer
    %s15 = sadd.s32 1, %s11
  $region7: #{fno_forward.27} parent=0 // loop_footer_branch
    %10 = sbr.rel target = $region3
  $region8: #{fno_forward.27} parent=0 // loop_exit
    _

// kernel: fno_forward.26
$region0: #{fno_forward.26}
  #allocation0 [shape = 'u32[]', space=smem, size = 0x4, offset = 0x4, fixed_abs, tag = 'smem constant byte address 0x4 - core index']
  #allocation1 [shape = 'u32[144,128]{1,0:T(1,128)}', space=vmem, size = 0x12000, scoped, tag = 'internal scratch']
  %s0 = inlined_call_operand.vmem [shape: f32[512,32], index: 0, kind: input, shape index: {}]
  %s1 = inlined_call_operand.vmem [shape: f32[512,32], index: 1, kind: input, shape index: {}]
  %s2 = inlined_call_operand.vmem [shape: bf16[32,64], index: 2, kind: input, shape index: {}]
  %s3 = inlined_call_operand.vmem [shape: f32[1,64], index: 3, kind: input, shape index: {}]
  %s4 = inlined_call_operand.vmem [shape: bf16[64,32], index: 4, kind: input, shape index: {}]
  %s5 = inlined_call_operand.vmem [shape: f32[1,32], index: 5, kind: input, shape index: {}]
  %s6 = inlined_call_operand.hbm [shape: f32[512,32], index: 6, kind: output, shape index: {0}]
  %s7 = inlined_call_operand.vmem [shape: f32[512,32], index: 7, kind: output, shape index: {1}]
  %8 = xla_tuple %s6, %s7
  %s9 = sld [smem:[#allocation0]]
  $region65: #{fno_forward.26} parent=0
    _
  %s11 = ssub.s32 1, %s9
  %s12 = scalar_select 0, %s11, %s9
  $region1: #{fno_forward.26} parent=0
    #allocation2 [shape = 'u8[262144]{0}', space=vmem, size = 0x40000, scoped, tag = 'output window, operand 0']
    #allocation3 [shape = 's32[2]{0}', space=sflag, size = 0x8, scoped, tag = 'scoped memory for fno_forward.26']
    %13 = vsyncpa [#allocation3], 0
    %s14 = scalar_lea.sflag [#allocation3], 1
    %15 = vsyncpa %s14, 0
    loop: start=0, step=1, limit=4
    $region2: #{fno_forward.26} parent=1 // loop_pre_header
      _
    $region3: #{fno_forward.26} parent=1 // loop_header
      %s17 = sphi 0, %s21
      %p18 = scmp.ge.s32.totalorder %s17, 4
      %s27 = sphi 0, %s29
      %s30 = sphi 0, %s27
      %s31 = sphi 0, %s30
      %s47 = sphi 0, %s31
      %s53 = sphi 0, %s55
      %s56 = sphi 0, %s53
      %s57 = sphi 0, %s56
      %s73 = sphi 0, %s57
      %s77 = sphi 0, %s77
      %s79 = sphi 0, %s77
      %s80 = sphi 0, %s79
      %s94 = sphi 0, %s80
      %s98 = sphi 0, %s98
      %s100 = sphi 0, %s98
      %s101 = sphi 0, %s100
      %s115 = sphi 0, %s101
      %s119 = sphi 0, %s119
      %s121 = sphi 0, %s119
      %s122 = sphi 0, %s121
      %s136 = sphi 0, %s122
      %s140 = sphi 0, %s140
      %s142 = sphi 0, %s140
      %s143 = sphi 0, %s142
      %s157 = sphi 0, %s143
      %s163 = sphi 0, %s165
      %s166 = sphi 0, %s163
      %s167 = sphi 0, %s166
      %s183 = sphi 0, %s167
      %s189 = sphi 0, %s191
      %s192 = sphi 0, %s189
      %s193 = sphi 0, %s192
      %s209 = sphi 0, %s193
    $region4: #{fno_forward.26} parent=1 // loop_header_branch
      %20 = sbr.rel (%p18) target = $region8
    $region5: #{fno_forward.26} parent=1 // loop_body
      %s22 = ssub.s32 %s17, 1
      %s23 = ssub.s32 %s17, 2
      %s24 = sadd.s32 %s17, 1
      %s25 = ssub.s32 %s17, %s24
      %p26 = scmp.eq.s32.totalorder %s25, 0
      %s28 = sadd.s32 %s27, 1
      %s29 = scalar_select %p26, %s27, %s28
      %p32 = pneg %p26
      %p33 = scmp.eq.s32.totalorder %s17, 1
      %p34 = por %p32, %p33
      %p35 = scmp.ne.s32.totalorder %s27, %s30
      %p36 = scmp.eq.s32.totalorder %s17, 0
      %p37 = por %p35, %p36
      %p38 = scmp.ne.s32.totalorder %s27, %s30
      %p39 = scmp.eq.s32.totalorder %s22, 1
      %p40 = por %p38, %p39
      %p41 = scmp.ne.s32.totalorder %s30, %s31
      %p42 = scmp.eq.s32.totalorder %s22, 0
      %p43 = por %p41, %p42
      %p44 = scmp.ne.s32.totalorder %s30, %s31
      %p45 = scmp.eq.s32.totalorder %s23, 1
      %p46 = por %p44, %p45
      %p48 = scmp.ne.s32.totalorder %s31, %s47
      %p49 = scmp.eq.s32.totalorder %s23, 0
      %p50 = por %p48, %p49
      %s51 = ssub.s32 %s17, %s24
      %p52 = scmp.eq.s32.totalorder %s51, 0
      %s54 = sadd.s32 %s53, 1
      %s55 = scalar_select %p52, %s53, %s54
      %p58 = pneg %p52
      %p59 = scmp.eq.s32.totalorder %s17, 1
      %p60 = por %p58, %p59
      %p61 = scmp.ne.s32.totalorder %s53, %s56
      %p62 = scmp.eq.s32.totalorder %s17, 0
      %p63 = por %p61, %p62
      %p64 = scmp.ne.s32.totalorder %s53, %s56
      %p65 = scmp.eq.s32.totalorder %s22, 1
      %p66 = por %p64, %p65
      %p67 = scmp.ne.s32.totalorder %s56, %s57
      %p68 = scmp.eq.s32.totalorder %s22, 0
      %p69 = por %p67, %p68
      %p70 = scmp.ne.s32.totalorder %s56, %s57
      %p71 = scmp.eq.s32.totalorder %s23, 1
      %p72 = por %p70, %p71
      %p74 = scmp.ne.s32.totalorder %s57, %s73
      %p75 = scmp.eq.s32.totalorder %s23, 0
      %p76 = por %p74, %p75
      %s78 = sadd.s32 %s77, 1
      %p81 = scmp.eq.s32.totalorder %s17, 1
      %p82 = scmp.ne.s32.totalorder %s77, %s79
      %p83 = scmp.eq.s32.totalorder %s17, 0
      %p84 = por %p82, %p83
      %p85 = scmp.ne.s32.totalorder %s77, %s79
      %p86 = scmp.eq.s32.totalorder %s22, 1
      %p87 = por %p85, %p86
      %p88 = scmp.ne.s32.totalorder %s79, %s80
      %p89 = scmp.eq.s32.totalorder %s22, 0
      %p90 = por %p88, %p89
      %p91 = scmp.ne.s32.totalorder %s79, %s80
      %p92 = scmp.eq.s32.totalorder %s23, 1
      %p93 = por %p91, %p92
      %p95 = scmp.ne.s32.totalorder %s80, %s94
      %p96 = scmp.eq.s32.totalorder %s23, 0
      %p97 = por %p95, %p96
      %s99 = sadd.s32 %s98, 1
      %p102 = scmp.eq.s32.totalorder %s17, 1
      %p103 = scmp.ne.s32.totalorder %s98, %s100
      %p104 = scmp.eq.s32.totalorder %s17, 0
      %p105 = por %p103, %p104
      %p106 = scmp.ne.s32.totalorder %s98, %s100
      %p107 = scmp.eq.s32.totalorder %s22, 1
      %p108 = por %p106, %p107
      %p109 = scmp.ne.s32.totalorder %s100, %s101
      %p110 = scmp.eq.s32.totalorder %s22, 0
      %p111 = por %p109, %p110
      %p112 = scmp.ne.s32.totalorder %s100, %s101
      %p113 = scmp.eq.s32.totalorder %s23, 1
      %p114 = por %p112, %p113
      %p116 = scmp.ne.s32.totalorder %s101, %s115
      %p117 = scmp.eq.s32.totalorder %s23, 0
      %p118 = por %p116, %p117
      %s120 = sadd.s32 %s119, 1
      %p123 = scmp.eq.s32.totalorder %s17, 1
      %p124 = scmp.ne.s32.totalorder %s119, %s121
      %p125 = scmp.eq.s32.totalorder %s17, 0
      %p126 = por %p124, %p125
      %p127 = scmp.ne.s32.totalorder %s119, %s121
      %p128 = scmp.eq.s32.totalorder %s22, 1
      %p129 = por %p127, %p128
      %p130 = scmp.ne.s32.totalorder %s121, %s122
      %p131 = scmp.eq.s32.totalorder %s22, 0
      %p132 = por %p130, %p131
      %p133 = scmp.ne.s32.totalorder %s121, %s122
      %p134 = scmp.eq.s32.totalorder %s23, 1
      %p135 = por %p133, %p134
      %p137 = scmp.ne.s32.totalorder %s122, %s136
      %p138 = scmp.eq.s32.totalorder %s23, 0
      %p139 = por %p137, %p138
      %s141 = sadd.s32 %s140, 1
      %p144 = scmp.eq.s32.totalorder %s17, 1
      %p145 = scmp.ne.s32.totalorder %s140, %s142
      %p146 = scmp.eq.s32.totalorder %s17, 0
      %p147 = por %p145, %p146
      %p148 = scmp.ne.s32.totalorder %s140, %s142
      %p149 = scmp.eq.s32.totalorder %s22, 1
      %p150 = por %p148, %p149
      %p151 = scmp.ne.s32.totalorder %s142, %s143
      %p152 = scmp.eq.s32.totalorder %s22, 0
      %p153 = por %p151, %p152
      %p154 = scmp.ne.s32.totalorder %s142, %s143
      %p155 = scmp.eq.s32.totalorder %s23, 1
      %p156 = por %p154, %p155
      %p158 = scmp.ne.s32.totalorder %s143, %s157
      %p159 = scmp.eq.s32.totalorder %s23, 0
      %p160 = por %p158, %p159
      %s161 = ssub.s32 %s17, %s24
      %p162 = scmp.eq.s32.totalorder %s161, 0
      %s164 = sadd.s32 %s163, 1
      %s165 = scalar_select %p162, %s163, %s164
      %p168 = pneg %p162
      %p169 = scmp.eq.s32.totalorder %s17, 1
      %p170 = por %p168, %p169
      %p171 = scmp.ne.s32.totalorder %s163, %s166
      %p172 = scmp.eq.s32.totalorder %s17, 0
      %p173 = por %p171, %p172
      %p174 = scmp.ne.s32.totalorder %s163, %s166
      %p175 = scmp.eq.s32.totalorder %s22, 1
      %p176 = por %p174, %p175
      %p177 = scmp.ne.s32.totalorder %s166, %s167
      %p178 = scmp.eq.s32.totalorder %s22, 0
      %p179 = por %p177, %p178
      %p180 = scmp.ne.s32.totalorder %s166, %s167
      %p181 = scmp.eq.s32.totalorder %s23, 1
      %p182 = por %p180, %p181
      %p184 = scmp.ne.s32.totalorder %s167, %s183
      %p185 = scmp.eq.s32.totalorder %s23, 0
      %p186 = por %p184, %p185
      %s187 = ssub.s32 %s17, %s24
      %p188 = scmp.eq.s32.totalorder %s187, 0
      %s190 = sadd.s32 %s189, 1
      %s191 = scalar_select %p188, %s189, %s190
      %p194 = pneg %p188
      %p195 = scmp.eq.s32.totalorder %s17, 1
      %p196 = por %p194, %p195
      %p197 = scmp.ne.s32.totalorder %s189, %s192
      %p198 = scmp.eq.s32.totalorder %s17, 0
      %p199 = por %p197, %p198
      %p200 = scmp.ne.s32.totalorder %s189, %s192
      %p201 = scmp.eq.s32.totalorder %s22, 1
      %p202 = por %p200, %p201
      %p203 = scmp.ne.s32.totalorder %s192, %s193
      %p204 = scmp.eq.s32.totalorder %s22, 0
      %p205 = por %p203, %p204
      %p206 = scmp.ne.s32.totalorder %s192, %s193
      %p207 = scmp.eq.s32.totalorder %s23, 1
      %p208 = por %p206, %p207
      %p210 = scmp.ne.s32.totalorder %s193, %s209
      %p211 = scmp.eq.s32.totalorder %s23, 0
      %p212 = por %p210, %p211
      %p213 = scmp.le.s32.totalorder 1, %s17
      %p214 = scmp.lt.s32.totalorder %s17, 3
      %p215 = pnand %p213, %p214
      %p216 = pneg %p215
      // Predicated region
      $region9: #{fno_forward.26} parent=5 // pred_check
        _
      $region10: #{fno_forward.26} parent=5 // pred_check_branch
        %218 = sbr.rel (%p215) target = $region12
      $region11: #{fno_forward.26} parent=5 // pred_region
        %s219 = ssub.s32 %s17, 1
        // Predicated region
        $region13: #{fno_forward.26} parent=11 // pred_check
          %p220 = pneg %p90
        $region14: #{fno_forward.26} parent=11 // pred_check_branch
          %222 = sbr.rel (%p220) target = $region16
        $region15: #{fno_forward.26} parent=11 // pred_region
          _
        $region16: #{fno_forward.26} parent=11 // pred_fallthru
          _
        // Predicated region
        $region17: #{fno_forward.26} parent=11 // pred_check
          %p223 = pneg %p111
        $region18: #{fno_forward.26} parent=11 // pred_check_branch
          %225 = sbr.rel (%p223) target = $region20
        $region19: #{fno_forward.26} parent=11 // pred_region
          _
        $region20: #{fno_forward.26} parent=11 // pred_fallthru
          _
        // Predicated region
        $region21: #{fno_forward.26} parent=11 // pred_check
          %p226 = pneg %p132
        $region22: #{fno_forward.26} parent=11 // pred_check_branch
          %228 = sbr.rel (%p226) target = $region24
        $region23: #{fno_forward.26} parent=11 // pred_region
          _
        $region24: #{fno_forward.26} parent=11 // pred_fallthru
          _
        // Predicated region
        $region25: #{fno_forward.26} parent=11 // pred_check
          %p229 = pneg %p153
        $region26: #{fno_forward.26} parent=11 // pred_check_branch
          %231 = sbr.rel (%p229) target = $region28
        $region27: #{fno_forward.26} parent=11 // pred_region
          _
        $region28: #{fno_forward.26} parent=11 // pred_fallthru
          _
      $region12: #{fno_forward.26} parent=5 // pred_fallthru
        _
      %p232 = scmp.lt.s32.totalorder %s17, 2
      // Predicated region
      $region29: #{fno_forward.26} parent=5 // pred_check
        %p233 = pneg %p232
      $region30: #{fno_forward.26} parent=5 // pred_check_branch
        %235 = sbr.rel (%p233) target = $region32
      $region31: #{fno_forward.26} parent=5 // pred_region
        // Predicated region
        $region33: #{fno_forward.26} parent=31 // pred_check
          %p236 = pneg %p37
        $region34: #{fno_forward.26} parent=31 // pred_check_branch
          %238 = sbr.rel (%p236) target = $region36
        $region35: #{fno_forward.26} parent=31 // pred_region
          %s239 = smul.u32 32, %s17
          %p240 = scmp.lt.s32.totalorder %s239, 63
          %s241 = scalar_select %p240, %s239, 63
          %s242 = smul.addr %s241, 8
          %s243 = scalar_lea.vmem %s0, %s242
          %s244 = smul.u32 32, %s17
        $region36: #{fno_forward.26} parent=31 // pred_fallthru
          _
        // Predicated region
        $region37: #{fno_forward.26} parent=31 // pred_check
          %p245 = pneg %p63
        $region38: #{fno_forward.26} parent=31 // pred_check_branch
          %247 = sbr.rel (%p245) target = $region40
        $region39: #{fno_forward.26} parent=31 // pred_region
          %s248 = smul.u32 32, %s17
          %p249 = scmp.lt.s32.totalorder %s248, 63
          %s250 = scalar_select %p249, %s248, 63
          %s251 = smul.addr %s250, 8
          %s252 = scalar_lea.vmem %s1, %s251
          %s253 = smul.u32 32, %s17
        $region40: #{fno_forward.26} parent=31 // pred_fallthru
          _
      $region32: #{fno_forward.26} parent=5 // pred_fallthru
        _
      %p254 = scmp.le.s32.totalorder 1, %s17
      %p255 = scmp.lt.s32.totalorder %s17, 3
      %p256 = pnand %p254, %p255
      %p257 = pneg %p256
      // Predicated region
      $region41: #{fno_forward.26} parent=5 // pred_check
        _
      $region42: #{fno_forward.26} parent=5 // pred_check_branch
        %259 = sbr.rel (%p256) target = $region44
      $region43: #{fno_forward.26} parent=5 // pred_region
        %s260 = ssub.s32 %s17, 1
        %s261 = smul.u32 32, %s22
        %p262 = scmp.lt.s32.totalorder %s261, 63
        %s263 = scalar_select %p262, %s261, 63
        %s264 = smul.addr %s263, 8
        %s265 = scalar_lea.vmem %s0, %s264
        %p266 = pneg %p43
        %p267 = pneg %p40
        %s268 = smul.u32 32, %s22
        %p269 = scmp.lt.s32.totalorder %s268, 63
        %s270 = scalar_select %p269, %s268, 63
        %s271 = smul.addr %s270, 8
        %s272 = scalar_lea.vmem %s1, %s271
        %p273 = pneg %p69
        %p274 = pneg %p66
        %p275 = pneg %p90
        %p276 = pneg %p87
        %p277 = pneg %p111
        %p278 = pneg %p108
        %p279 = pneg %p132
        %p280 = pneg %p129
        %p281 = pneg %p153
        %p282 = pneg %p150
        %p283 = pneg %p179
        %p284 = pneg %p176
        %s285 = sand.u32 %s166, 1
        %s286 = scalar_lea.sflag [#allocation3], %s285
        %s287 = sand.u32 %s166, 1
        %s288 = smul.addr %s287, 256
        %s289 = scalar_lea.vmem [#allocation2], %s288
        %p290 = pneg %p205
        %p291 = pneg %p202
        %s292 = smul.u32 32, %s22
        %p293 = scmp.lt.s32.totalorder %s292, 63
        %s294 = scalar_select %p293, %s292, 63
        %s295 = smul.addr %s294, 8
        %s296 = scalar_lea.vmem %s7, %s295
        %s297 = smul.u32 32, %s22
        %p298 = scmp.lt.s32.totalorder %s297, 63
        %s299 = scalar_select %p298, %s297, 63
        %s300 = smul.addr %s299, 8
        %s301 = scalar_lea.vmem %s0, %s300
        %s302 = smul.u32 32, %s22
        %s303 = smul.u32 32, %s22
        %p304 = scmp.lt.s32.totalorder %s303, 63
        %s305 = scalar_select %p304, %s303, 63
        %s306 = smul.addr %s305, 8
        %s307 = scalar_lea.vmem %s1, %s306
        %s308 = smul.u32 32, %s22
        %s309 = smul.u32 32, %s22
        %s310 = smul.u32 32, %s22
        %p311 = scmp.lt.s32.totalorder %s310, 63
        %s312 = scalar_select %p311, %s310, 63
        %s313 = smul.addr %s312, 8
        %s314 = scalar_lea.vmem %s7, %s313
        %s315 = smul.u32 32, %s22
        %v317 = vld [vmem:[%s307] sm:$0xff]
        %v318 = vld [vmem:[%s307 + $0x8] sm:$0xff]
        %v319 = vld [vmem:[%s307 + $0x10] sm:$0xff]
        %v320 = vld [vmem:[%s307 + $0x18] sm:$0xff]
        %v321 = vld [vmem:[%s307 + $0x20] sm:$0xff]
        %v322 = vld [vmem:[%s307 + $0x28] sm:$0xff]
        %v323 = vld [vmem:[%s307 + $0x30] sm:$0xff]
        %v324 = vld [vmem:[%s307 + $0x38] sm:$0xff]
        %v325 = vld [vmem:[%s307 + $0x40] sm:$0xff]
        %v326 = vld [vmem:[%s307 + $0x48] sm:$0xff]
        %v327 = vld [vmem:[%s307 + $0x50] sm:$0xff]
        %v328 = vld [vmem:[%s307 + $0x58] sm:$0xff]
        %v329 = vld [vmem:[%s307 + $0x60] sm:$0xff]
        %v330 = vld [vmem:[%s307 + $0x68] sm:$0xff]
        %v331 = vld [vmem:[%s307 + $0x70] sm:$0xff]
        %v332 = vld [vmem:[%s307 + $0x78] sm:$0xff]
        %v333 = vld [vmem:[%s307 + $0x80] sm:$0xff]
        %v334 = vld [vmem:[%s307 + $0x88] sm:$0xff]
        %v335 = vld [vmem:[%s307 + $0x90] sm:$0xff]
        %v336 = vld [vmem:[%s307 + $0x98] sm:$0xff]
        %v337 = vld [vmem:[%s307 + $0xa0] sm:$0xff]
        %v338 = vld [vmem:[%s307 + $0xa8] sm:$0xff]
        %v339 = vld [vmem:[%s307 + $0xb0] sm:$0xff]
        %v340 = vld [vmem:[%s307 + $0xb8] sm:$0xff]
        %v341 = vld [vmem:[%s307 + $0xc0] sm:$0xff]
        %v342 = vld [vmem:[%s307 + $0xc8] sm:$0xff]
        %v343 = vld [vmem:[%s307 + $0xd0] sm:$0xff]
        %v344 = vld [vmem:[%s307 + $0xd8] sm:$0xff]
        %v345 = vld [vmem:[%s307 + $0xe0] sm:$0xff]
        %v346 = vld [vmem:[%s307 + $0xe8] sm:$0xff]
        %v347 = vld [vmem:[%s307 + $0xf0] sm:$0xff]
        %v348 = vld [vmem:[%s307 + $0xf8] sm:$0xff]
        %v349 = vpack.c.bf16 %v318, %v317
        %v350 = vpack.c.bf16 %v320, %v319
        %v351 = vpack.c.bf16 %v322, %v321
        %v352 = vpack.c.bf16 %v324, %v323
        %v353 = vpack.c.bf16 %v326, %v325
        %v354 = vpack.c.bf16 %v328, %v327
        %v355 = vpack.c.bf16 %v330, %v329
        %v356 = vpack.c.bf16 %v332, %v331
        %v357 = vpack.c.bf16 %v334, %v333
        %v358 = vpack.c.bf16 %v336, %v335
        %v359 = vpack.c.bf16 %v338, %v337
        %v360 = vpack.c.bf16 %v340, %v339
        %v361 = vpack.c.bf16 %v342, %v341
        %v362 = vpack.c.bf16 %v344, %v343
        %v363 = vpack.c.bf16 %v346, %v345
        %v364 = vpack.c.bf16 %v348, %v347
        %v365 = vld [vmem:[%s2] sm:$0xf]
        %v366 = vld [vmem:[%s2 + $0x4] sm:$0xf]
        %v367 = vld [vmem:[%s2 + $0x8] sm:$0xf]
        %v368 = vld [vmem:[%s2 + $0xc] sm:$0xf]
        %v369 = vld [vmem:[%s3] sm:$0x1]
        %v371 = vlaneseq
        %v372 = vshrl.u32 %v371, 7
        %v373 = vsub.s32 0, %v372
        %v374 = vrot.slane %v369, %v373
        %v380 = vunpack.c.l.b16 %v365
        %v381 = vunpack.c.l.b16 %v366
        %v382 = vunpack.c.l.b16 %v367
        %v383 = vunpack.c.l.b16 %v368
        %v384 = vpack.c.b16 %v381, %v380
        %v385 = vpack.c.b16 %v383, %v382
        %vm388 = vcmask 261120
        %v390 = vsel %vm388, %v349, 0
        %v393 = vsel %vm388, %v350, 0
        %v396 = vsel %vm388, %v351, 0
        %v399 = vsel %vm388, %v352, 0
        %v402 = vsel %vm388, %v353, 0
        %v405 = vsel %vm388, %v354, 0
        %v408 = vsel %vm388, %v355, 0
        %v411 = vsel %vm388, %v356, 0
        %v414 = vsel %vm388, %v357, 0
        %v417 = vsel %vm388, %v358, 0
        %v420 = vsel %vm388, %v359, 0
        %v423 = vsel %vm388, %v360, 0
        %v426 = vsel %vm388, %v361, 0
        %v429 = vsel %vm388, %v362, 0
        %v432 = vsel %vm388, %v363, 0
        %v435 = vsel %vm388, %v364, 0
        %437 = vmatprep.subr.bf16.mxu0 0
        %438 = vmatpush1.bf16.msra.mxu0 0
        %439 = vmatprep.subr.bf16.mxu0 0
        %440 = vmatpush1.bf16.msra.mxu0 0
        %441 = vmatprep.subr.bf16.mxu0 0
        %442 = vmatpush1.bf16.msra.mxu0 0
        %443 = vmatprep.subr.bf16.mxu0 0
        %444 = vmatpush1.bf16.msra.mxu0 0
        %445 = vmatprep.subr.bf16.mxu0 0
        %446 = vmatpush1.bf16.msra.mxu0 0
        %447 = vmatprep.subr.bf16.mxu0 0
        %448 = vmatpush1.bf16.msra.mxu0 0
        %449 = vmatprep.subr.bf16.mxu0 0
        %450 = vmatpush1.bf16.msra.mxu0 %v385
        %451 = vmatprep.subr.bf16.mxu0 0
        %452 = vmatpush1.bf16.msra.mxu0 %v384
        %453 = vmatprep.subr.bf16.mxu0 0
        %454 = vmatpush2.bf16.msra.mxu0 0
        %455 = vmatprep.subr.bf16.mxu0 0
        %456 = vmatpush2.bf16.msra.mxu0 0
        %457 = vmatprep.subr.bf16.mxu0 0
        %458 = vmatpush2.bf16.msra.mxu0 0
        %459 = vmatprep.subr.bf16.mxu0 0
        %460 = vmatpush2.bf16.msra.mxu0 0
        %461 = vmatprep.subr.bf16.mxu0 0
        %462 = vmatpush2.bf16.msra.mxu0 0
        %463 = vmatprep.subr.bf16.mxu0 0
        %464 = vmatpush2.bf16.msra.mxu0 0
        %465 = vmatprep.subr.bf16.mxu0 0
        %466 = vmatpush2.bf16.msra.mxu0 0
        %467 = vmatprep.subr.bf16.mxu0 0
        %468 = vmatpush2.bf16.msra.mxu0 0
        %469 = vmatprep.mubr.bf16.mxu0 0
        %470 = vmatmul.mubr.bf16.gmra.mxu0 %v390
        %v471 = vpop.f32.mrf.mxu0
        %v472 = vadd.f32 %v374, %v471
        %v473 = vpop.f32.mrf.mxu0
        %v474 = vpop.f32.mrf.mxu0
        %v475 = vadd.f32 %v374, %v474
        %v476 = vpop.f32.mrf.mxu0
        %477 = vmatprep.mubr.bf16.mxu0 0
        %478 = vmatmul.mubr.bf16.gmra.mxu0 %v393
        %v479 = vpop.f32.mrf.mxu0
        %v480 = vadd.f32 %v374, %v479
        %v481 = vpop.f32.mrf.mxu0
        %v482 = vpop.f32.mrf.mxu0
        %v483 = vadd.f32 %v374, %v482
        %v484 = vpop.f32.mrf.mxu0
        %485 = vmatprep.mubr.bf16.mxu0 0
        %486 = vmatmul.mubr.bf16.gmra.mxu0 %v396
        %v487 = vpop.f32.mrf.mxu0
        %v488 = vadd.f32 %v374, %v487
        %v489 = vpop.f32.mrf.mxu0
        %v490 = vpop.f32.mrf.mxu0
        %v491 = vadd.f32 %v374, %v490
        %v492 = vpop.f32.mrf.mxu0
        %493 = vmatprep.mubr.bf16.mxu0 0
        %494 = vmatmul.mubr.bf16.gmra.mxu0 %v399
        %v495 = vpop.f32.mrf.mxu0
        %v496 = vadd.f32 %v374, %v495
        %v497 = vpop.f32.mrf.mxu0
        %v498 = vpop.f32.mrf.mxu0
        %v499 = vadd.f32 %v374, %v498
        %v500 = vpop.f32.mrf.mxu0
        %501 = vmatprep.mubr.bf16.mxu0 0
        %502 = vmatmul.mubr.bf16.gmra.mxu0 %v402
        %v503 = vpop.f32.mrf.mxu0
        %v504 = vadd.f32 %v374, %v503
        %v505 = vpop.f32.mrf.mxu0
        %v506 = vpop.f32.mrf.mxu0
        %v507 = vadd.f32 %v374, %v506
        %v508 = vpop.f32.mrf.mxu0
        %509 = vmatprep.mubr.bf16.mxu0 0
        %510 = vmatmul.mubr.bf16.gmra.mxu0 %v405
        %v511 = vpop.f32.mrf.mxu0
        %v512 = vadd.f32 %v374, %v511
        %v513 = vpop.f32.mrf.mxu0
        %v514 = vpop.f32.mrf.mxu0
        %v515 = vadd.f32 %v374, %v514
        %v516 = vpop.f32.mrf.mxu0
        %517 = vmatprep.mubr.bf16.mxu0 0
        %518 = vmatmul.mubr.bf16.gmra.mxu0 %v408
        %v519 = vpop.f32.mrf.mxu0
        %v520 = vadd.f32 %v374, %v519
        %v521 = vpop.f32.mrf.mxu0
        %v522 = vpop.f32.mrf.mxu0
        %v523 = vadd.f32 %v374, %v522
        %v524 = vpop.f32.mrf.mxu0
        %525 = vmatprep.mubr.bf16.mxu0 0
        %526 = vmatmul.mubr.bf16.gmra.mxu0 %v411
        %v527 = vpop.f32.mrf.mxu0
        %v528 = vadd.f32 %v374, %v527
        %v529 = vpop.f32.mrf.mxu0
        %v530 = vpop.f32.mrf.mxu0
        %v531 = vadd.f32 %v374, %v530
        %v532 = vpop.f32.mrf.mxu0
        %533 = vmatprep.mubr.bf16.mxu0 0
        %534 = vmatmul.mubr.bf16.gmra.mxu0 %v414
        %v535 = vpop.f32.mrf.mxu0
        %v536 = vadd.f32 %v374, %v535
        %v537 = vpop.f32.mrf.mxu0
        %v538 = vpop.f32.mrf.mxu0
        %v539 = vadd.f32 %v374, %v538
        %v540 = vpop.f32.mrf.mxu0
        %541 = vmatprep.mubr.bf16.mxu0 0
        %542 = vmatmul.mubr.bf16.gmra.mxu0 %v417
        %v543 = vpop.f32.mrf.mxu0
        %v544 = vadd.f32 %v374, %v543
        %v545 = vpop.f32.mrf.mxu0
        %v546 = vpop.f32.mrf.mxu0
        %v547 = vadd.f32 %v374, %v546
        %v548 = vpop.f32.mrf.mxu0
        %549 = vmatprep.mubr.bf16.mxu0 0
        %550 = vmatmul.mubr.bf16.gmra.mxu0 %v420
        %v551 = vpop.f32.mrf.mxu0
        %v552 = vadd.f32 %v374, %v551
        %v553 = vpop.f32.mrf.mxu0
        %v554 = vpop.f32.mrf.mxu0
        %v555 = vadd.f32 %v374, %v554
        %v556 = vpop.f32.mrf.mxu0
        %557 = vmatprep.mubr.bf16.mxu0 0
        %558 = vmatmul.mubr.bf16.gmra.mxu0 %v423
        %v559 = vpop.f32.mrf.mxu0
        %v560 = vadd.f32 %v374, %v559
        %v561 = vpop.f32.mrf.mxu0
        %v562 = vpop.f32.mrf.mxu0
        %v563 = vadd.f32 %v374, %v562
        %v564 = vpop.f32.mrf.mxu0
        %565 = vmatprep.mubr.bf16.mxu0 0
        %566 = vmatmul.mubr.bf16.gmra.mxu0 %v426
        %v567 = vpop.f32.mrf.mxu0
        %v568 = vadd.f32 %v374, %v567
        %v569 = vpop.f32.mrf.mxu0
        %v570 = vpop.f32.mrf.mxu0
        %v571 = vadd.f32 %v374, %v570
        %v572 = vpop.f32.mrf.mxu0
        %573 = vmatprep.mubr.bf16.mxu0 0
        %574 = vmatmul.mubr.bf16.gmra.mxu0 %v429
        %v575 = vpop.f32.mrf.mxu0
        %v576 = vadd.f32 %v374, %v575
        %v577 = vpop.f32.mrf.mxu0
        %v578 = vpop.f32.mrf.mxu0
        %v579 = vadd.f32 %v374, %v578
        %v580 = vpop.f32.mrf.mxu0
        %581 = vmatprep.mubr.bf16.mxu0 0
        %582 = vmatmul.mubr.bf16.gmra.mxu0 %v432
        %v583 = vpop.f32.mrf.mxu0
        %v584 = vadd.f32 %v374, %v583
        %v585 = vpop.f32.mrf.mxu0
        %v586 = vpop.f32.mrf.mxu0
        %v587 = vadd.f32 %v374, %v586
        %v588 = vpop.f32.mrf.mxu0
        %589 = vmatprep.mubr.bf16.mxu0 0
        %590 = vmatmul.mubr.bf16.gmra.mxu0 %v435
        %v591 = vpop.f32.mrf.mxu0
        %v592 = vadd.f32 %v374, %v591
        %v593 = vpop.f32.mrf.mxu0
        %v594 = vpop.f32.mrf.mxu0
        %v595 = vadd.f32 %v374, %v594
        %v596 = vpop.f32.mrf.mxu0
        %597 = vdwg.mxu0
        %v598 = vmax.f32 %v472, 0.0
        %v599 = vmax.f32 %v475, 0.0
        %v600 = vmax.f32 %v480, 0.0
        %v601 = vmax.f32 %v483, 0.0
        %v602 = vmax.f32 %v488, 0.0
        %v603 = vmax.f32 %v491, 0.0
        %v604 = vmax.f32 %v496, 0.0
        %v605 = vmax.f32 %v499, 0.0
        %v606 = vmax.f32 %v504, 0.0
        %v607 = vmax.f32 %v507, 0.0
        %v608 = vmax.f32 %v512, 0.0
        %v609 = vmax.f32 %v515, 0.0
        %v610 = vmax.f32 %v520, 0.0
        %v611 = vmax.f32 %v523, 0.0
        %v612 = vmax.f32 %v528, 0.0
        %v613 = vmax.f32 %v531, 0.0
        %v614 = vmax.f32 %v536, 0.0
        %v615 = vmax.f32 %v539, 0.0
        %v616 = vmax.f32 %v544, 0.0
        %v617 = vmax.f32 %v547, 0.0
        %v618 = vmax.f32 %v552, 0.0
        %v619 = vmax.f32 %v555, 0.0
        %v620 = vmax.f32 %v560, 0.0
        %v621 = vmax.f32 %v563, 0.0
        %v622 = vmax.f32 %v568, 0.0
        %v623 = vmax.f32 %v571, 0.0
        %v624 = vmax.f32 %v576, 0.0
        %v625 = vmax.f32 %v579, 0.0
        %v626 = vmax.f32 %v584, 0.0
        %v627 = vmax.f32 %v587, 0.0
        %v628 = vmax.f32 %v592, 0.0
        %v629 = vmax.f32 %v595, 0.0
        %v630 = vpack.c.bf16 %v599, %v598
        %v631 = vpack.c.bf16 %v601, %v600
        %v632 = vpack.c.bf16 %v603, %v602
        %v633 = vpack.c.bf16 %v605, %v604
        %v634 = vpack.c.bf16 %v607, %v606
        %v635 = vpack.c.bf16 %v609, %v608
        %v636 = vpack.c.bf16 %v611, %v610
        %v637 = vpack.c.bf16 %v613, %v612
        %v638 = vpack.c.bf16 %v615, %v614
        %v639 = vpack.c.bf16 %v617, %v616
        %v640 = vpack.c.bf16 %v619, %v618
        %v641 = vpack.c.bf16 %v621, %v620
        %v642 = vpack.c.bf16 %v623, %v622
        %v643 = vpack.c.bf16 %v625, %v624
        %v644 = vpack.c.bf16 %v627, %v626
        %v645 = vpack.c.bf16 %v629, %v628
        %v646 = vld [vmem:[%s4] sm:$0xf]
        %v647 = vld [vmem:[%s4 + $0x4] sm:$0xf]
        %v648 = vld [vmem:[%s4 + $0x8] sm:$0xf]
        %v649 = vld [vmem:[%s4 + $0xc] sm:$0xf]
        %v650 = vld [vmem:[%s4 + $0x10] sm:$0xf]
        %v651 = vld [vmem:[%s4 + $0x14] sm:$0xf]
        %v652 = vld [vmem:[%s4 + $0x18] sm:$0xf]
        %v653 = vld [vmem:[%s4 + $0x1c] sm:$0xf]
        %v654 = vld [vmem:[%s5] sm:$0x1]
        %v656 = vlaneseq
        %v657 = vshrl.u32 %v656, 7
        %v658 = vsub.s32 0, %v657
        %v659 = vrot.slane %v654, %v658
        %v669 = vunpack.c.l.b16 %v646
        %v670 = vunpack.c.l.b16 %v647
        %v671 = vunpack.c.l.b16 %v648
        %v672 = vunpack.c.l.b16 %v649
        %v673 = vunpack.c.l.b16 %v650
        %v674 = vunpack.c.l.b16 %v651
        %v675 = vunpack.c.l.b16 %v652
        %v676 = vunpack.c.l.b16 %v653
        %v677 = vpack.c.b16 %v670, %v669
        %v678 = vpack.c.b16 %v672, %v671
        %v679 = vpack.c.b16 %v674, %v673
        %v680 = vpack.c.b16 %v676, %v675
        %vm685 = vcmask 523264
        %v687 = vsel %vm685, %v630, 0
        %v690 = vsel %vm685, %v631, 0
        %v693 = vsel %vm685, %v632, 0
        %v696 = vsel %vm685, %v633, 0
        %v699 = vsel %vm685, %v634, 0
        %v702 = vsel %vm685, %v635, 0
        %v705 = vsel %vm685, %v636, 0
        %v708 = vsel %vm685, %v637, 0
        %v711 = vsel %vm685, %v638, 0
        %v714 = vsel %vm685, %v639, 0
        %v717 = vsel %vm685, %v640, 0
        %v720 = vsel %vm685, %v641, 0
        %v723 = vsel %vm685, %v642, 0
        %v726 = vsel %vm685, %v643, 0
        %v729 = vsel %vm685, %v644, 0
        %v732 = vsel %vm685, %v645, 0
        %734 = vmatprep.subr.bf16.mxu0 0
        %735 = vmatpush1.bf16.msra.mxu0 0
        %736 = vmatprep.subr.bf16.mxu0 0
        %737 = vmatpush1.bf16.msra.mxu0 0
        %738 = vmatprep.subr.bf16.mxu0 0
        %739 = vmatpush1.bf16.msra.mxu0 0
        %740 = vmatprep.subr.bf16.mxu0 0
        %741 = vmatpush1.bf16.msra.mxu0 0
        %742 = vmatprep.subr.bf16.mxu0 0
        %743 = vmatpush1.bf16.msra.mxu0 %v680
        %744 = vmatprep.subr.bf16.mxu0 0
        %745 = vmatpush1.bf16.msra.mxu0 %v679
        %746 = vmatprep.subr.bf16.mxu0 0
        %747 = vmatpush1.bf16.msra.mxu0 %v678
        %748 = vmatprep.subr.bf16.mxu0 0
        %749 = vmatpush1.bf16.msra.mxu0 %v677
        %750 = vmatprep.subr.bf16.mxu0 0
        %751 = vmatpush2.bf16.msra.mxu0 0
        %752 = vmatprep.subr.bf16.mxu0 0
        %753 = vmatpush2.bf16.msra.mxu0 0
        %754 = vmatprep.subr.bf16.mxu0 0
        %755 = vmatpush2.bf16.msra.mxu0 0
        %756 = vmatprep.subr.bf16.mxu0 0
        %757 = vmatpush2.bf16.msra.mxu0 0
        %758 = vmatprep.subr.bf16.mxu0 0
        %759 = vmatpush2.bf16.msra.mxu0 0
        %760 = vmatprep.subr.bf16.mxu0 0
        %761 = vmatpush2.bf16.msra.mxu0 0
        %762 = vmatprep.subr.bf16.mxu0 0
        %763 = vmatpush2.bf16.msra.mxu0 0
        %764 = vmatprep.subr.bf16.mxu0 0
        %765 = vmatpush2.bf16.msra.mxu0 0
        %766 = vmatprep.mubr.bf16.mxu0 0
        %767 = vmatmul.mubr.bf16.gmra.mxu0 %v687
        %v768 = vpop.f32.mrf.mxu0
        %v769 = vadd.f32 %v659, %v768
        %v770 = vpop.f32.mrf.mxu0
        %v771 = vpop.f32.mrf.mxu0
        %v772 = vadd.f32 %v659, %v771
        %v773 = vpop.f32.mrf.mxu0
        %774 = vmatprep.mubr.bf16.mxu0 0
        %775 = vmatmul.mubr.bf16.gmra.mxu0 %v690
        %v776 = vpop.f32.mrf.mxu0
        %v777 = vadd.f32 %v659, %v776
        %v778 = vpop.f32.mrf.mxu0
        %v779 = vpop.f32.mrf.mxu0
        %v780 = vadd.f32 %v659, %v779
        %v781 = vpop.f32.mrf.mxu0
        %782 = vmatprep.mubr.bf16.mxu0 0
        %783 = vmatmul.mubr.bf16.gmra.mxu0 %v693
        %v784 = vpop.f32.mrf.mxu0
        %v785 = vadd.f32 %v659, %v784
        %v786 = vpop.f32.mrf.mxu0
        %v787 = vpop.f32.mrf.mxu0
        %v788 = vadd.f32 %v659, %v787
        %v789 = vpop.f32.mrf.mxu0
        %790 = vmatprep.mubr.bf16.mxu0 0
        %791 = vmatmul.mubr.bf16.gmra.mxu0 %v696
        %v792 = vpop.f32.mrf.mxu0
        %v793 = vadd.f32 %v659, %v792
        %v794 = vpop.f32.mrf.mxu0
        %v795 = vpop.f32.mrf.mxu0
        %v796 = vadd.f32 %v659, %v795
        %v797 = vpop.f32.mrf.mxu0
        %798 = vmatprep.mubr.bf16.mxu0 0
        %799 = vmatmul.mubr.bf16.gmra.mxu0 %v699
        %v800 = vpop.f32.mrf.mxu0
        %v801 = vadd.f32 %v659, %v800
        %v802 = vpop.f32.mrf.mxu0
        %v803 = vpop.f32.mrf.mxu0
        %v804 = vadd.f32 %v659, %v803
        %v805 = vpop.f32.mrf.mxu0
        %806 = vmatprep.mubr.bf16.mxu0 0
        %807 = vmatmul.mubr.bf16.gmra.mxu0 %v702
        %v808 = vpop.f32.mrf.mxu0
        %v809 = vadd.f32 %v659, %v808
        %v810 = vpop.f32.mrf.mxu0
        %v811 = vpop.f32.mrf.mxu0
        %v812 = vadd.f32 %v659, %v811
        %v813 = vpop.f32.mrf.mxu0
        %814 = vmatprep.mubr.bf16.mxu0 0
        %815 = vmatmul.mubr.bf16.gmra.mxu0 %v705
        %v816 = vpop.f32.mrf.mxu0
        %v817 = vadd.f32 %v659, %v816
        %v818 = vpop.f32.mrf.mxu0
        %v819 = vpop.f32.mrf.mxu0
        %v820 = vadd.f32 %v659, %v819
        %v821 = vpop.f32.mrf.mxu0
        %822 = vmatprep.mubr.bf16.mxu0 0
        %823 = vmatmul.mubr.bf16.gmra.mxu0 %v708
        %v824 = vpop.f32.mrf.mxu0
        %v825 = vadd.f32 %v659, %v824
        %v826 = vpop.f32.mrf.mxu0
        %v827 = vpop.f32.mrf.mxu0
        %v828 = vadd.f32 %v659, %v827
        %v829 = vpop.f32.mrf.mxu0
        %830 = vmatprep.mubr.bf16.mxu0 0
        %831 = vmatmul.mubr.bf16.gmra.mxu0 %v711
        %v832 = vpop.f32.mrf.mxu0
        %v833 = vadd.f32 %v659, %v832
        %v834 = vpop.f32.mrf.mxu0
        %v835 = vpop.f32.mrf.mxu0
        %v836 = vadd.f32 %v659, %v835
        %v837 = vpop.f32.mrf.mxu0
        %838 = vmatprep.mubr.bf16.mxu0 0
        %839 = vmatmul.mubr.bf16.gmra.mxu0 %v714
        %v840 = vpop.f32.mrf.mxu0
        %v841 = vadd.f32 %v659, %v840
        %v842 = vpop.f32.mrf.mxu0
        %v843 = vpop.f32.mrf.mxu0
        %v844 = vadd.f32 %v659, %v843
        %v845 = vpop.f32.mrf.mxu0
        %846 = vmatprep.mubr.bf16.mxu0 0
        %847 = vmatmul.mubr.bf16.gmra.mxu0 %v717
        %v848 = vpop.f32.mrf.mxu0
        %v849 = vadd.f32 %v659, %v848
        %v850 = vpop.f32.mrf.mxu0
        %v851 = vpop.f32.mrf.mxu0
        %v852 = vadd.f32 %v659, %v851
        %v853 = vpop.f32.mrf.mxu0
        %854 = vmatprep.mubr.bf16.mxu0 0
        %855 = vmatmul.mubr.bf16.gmra.mxu0 %v720
        %v856 = vpop.f32.mrf.mxu0
        %v857 = vadd.f32 %v659, %v856
        %v858 = vpop.f32.mrf.mxu0
        %v859 = vpop.f32.mrf.mxu0
        %v860 = vadd.f32 %v659, %v859
        %v861 = vpop.f32.mrf.mxu0
        %862 = vmatprep.mubr.bf16.mxu0 0
        %863 = vmatmul.mubr.bf16.gmra.mxu0 %v723
        %v864 = vpop.f32.mrf.mxu0
        %v865 = vadd.f32 %v659, %v864
        %v866 = vpop.f32.mrf.mxu0
        %v867 = vpop.f32.mrf.mxu0
        %v868 = vadd.f32 %v659, %v867
        %v869 = vpop.f32.mrf.mxu0
        %870 = vmatprep.mubr.bf16.mxu0 0
        %871 = vmatmul.mubr.bf16.gmra.mxu0 %v726
        %v872 = vpop.f32.mrf.mxu0
        %v873 = vadd.f32 %v659, %v872
        %v874 = vpop.f32.mrf.mxu0
        %v875 = vpop.f32.mrf.mxu0
        %v876 = vadd.f32 %v659, %v875
        %v877 = vpop.f32.mrf.mxu0
        %878 = vmatprep.mubr.bf16.mxu0 0
        %879 = vmatmul.mubr.bf16.gmra.mxu0 %v729
        %v880 = vpop.f32.mrf.mxu0
        %v881 = vadd.f32 %v659, %v880
        %v882 = vpop.f32.mrf.mxu0
        %v883 = vpop.f32.mrf.mxu0
        %v884 = vadd.f32 %v659, %v883
        %v885 = vpop.f32.mrf.mxu0
        %886 = vmatprep.mubr.bf16.mxu0 0
        %887 = vmatmul.mubr.bf16.gmra.mxu0 %v732
        %v888 = vpop.f32.mrf.mxu0
        %v889 = vadd.f32 %v659, %v888
        %v890 = vpop.f32.mrf.mxu0
        %v891 = vpop.f32.mrf.mxu0
        %v892 = vadd.f32 %v659, %v891
        %v893 = vpop.f32.mrf.mxu0
        %894 = vdwg.mxu0
        %895 = vst.msk [vmem:[%s314] sm:$0xff] %vm388, %v769
        %896 = vst.msk [vmem:[%s314 + $0x8] sm:$0xff] %vm388, %v772
        %897 = vst.msk [vmem:[%s314 + $0x10] sm:$0xff] %vm388, %v777
        %898 = vst.msk [vmem:[%s314 + $0x18] sm:$0xff] %vm388, %v780
        %899 = vst.msk [vmem:[%s314 + $0x20] sm:$0xff] %vm388, %v785
        %900 = vst.msk [vmem:[%s314 + $0x28] sm:$0xff] %vm388, %v788
        %901 = vst.msk [vmem:[%s314 + $0x30] sm:$0xff] %vm388, %v793
        %902 = vst.msk [vmem:[%s314 + $0x38] sm:$0xff] %vm388, %v796
        %903 = vst.msk [vmem:[%s314 + $0x40] sm:$0xff] %vm388, %v801
        %904 = vst.msk [vmem:[%s314 + $0x48] sm:$0xff] %vm388, %v804
        %905 = vst.msk [vmem:[%s314 + $0x50] sm:$0xff] %vm388, %v809
        %906 = vst.msk [vmem:[%s314 + $0x58] sm:$0xff] %vm388, %v812
        %907 = vst.msk [vmem:[%s314 + $0x60] sm:$0xff] %vm388, %v817
        %908 = vst.msk [vmem:[%s314 + $0x68] sm:$0xff] %vm388, %v820
        %909 = vst.msk [vmem:[%s314 + $0x70] sm:$0xff] %vm388, %v825
        %910 = vst.msk [vmem:[%s314 + $0x78] sm:$0xff] %vm388, %v828
        %911 = vst.msk [vmem:[%s314 + $0x80] sm:$0xff] %vm388, %v833
        %912 = vst.msk [vmem:[%s314 + $0x88] sm:$0xff] %vm388, %v836
        %913 = vst.msk [vmem:[%s314 + $0x90] sm:$0xff] %vm388, %v841
        %914 = vst.msk [vmem:[%s314 + $0x98] sm:$0xff] %vm388, %v844
        %915 = vst.msk [vmem:[%s314 + $0xa0] sm:$0xff] %vm388, %v849
        %916 = vst.msk [vmem:[%s314 + $0xa8] sm:$0xff] %vm388, %v852
        %917 = vst.msk [vmem:[%s314 + $0xb0] sm:$0xff] %vm388, %v857
        %918 = vst.msk [vmem:[%s314 + $0xb8] sm:$0xff] %vm388, %v860
        %919 = vst.msk [vmem:[%s314 + $0xc0] sm:$0xff] %vm388, %v865
        %920 = vst.msk [vmem:[%s314 + $0xc8] sm:$0xff] %vm388, %v868
        %921 = vst.msk [vmem:[%s314 + $0xd0] sm:$0xff] %vm388, %v873
        %922 = vst.msk [vmem:[%s314 + $0xd8] sm:$0xff] %vm388, %v876
        %923 = vst.msk [vmem:[%s314 + $0xe0] sm:$0xff] %vm388, %v881
        %924 = vst.msk [vmem:[%s314 + $0xe8] sm:$0xff] %vm388, %v884
        %925 = vst.msk [vmem:[%s314 + $0xf0] sm:$0xff] %vm388, %v889
        %926 = vst.msk [vmem:[%s314 + $0xf8] sm:$0xff] %vm388, %v892
        %v927 = vld [vmem:[%s301] sm:$0xff]
        %v928 = vld [vmem:[%s301 + $0x8] sm:$0xff]
        %v929 = vld [vmem:[%s301 + $0x10] sm:$0xff]
        %v930 = vld [vmem:[%s301 + $0x18] sm:$0xff]
        %v931 = vld [vmem:[%s301 + $0x20] sm:$0xff]
        %v932 = vld [vmem:[%s301 + $0x28] sm:$0xff]
        %v933 = vld [vmem:[%s301 + $0x30] sm:$0xff]
        %v934 = vld [vmem:[%s301 + $0x38] sm:$0xff]
        %v935 = vld [vmem:[%s301 + $0x40] sm:$0xff]
        %v936 = vld [vmem:[%s301 + $0x48] sm:$0xff]
        %v937 = vld [vmem:[%s301 + $0x50] sm:$0xff]
        %v938 = vld [vmem:[%s301 + $0x58] sm:$0xff]
        %v939 = vld [vmem:[%s301 + $0x60] sm:$0xff]
        %v940 = vld [vmem:[%s301 + $0x68] sm:$0xff]
        %v941 = vld [vmem:[%s301 + $0x70] sm:$0xff]
        %v942 = vld [vmem:[%s301 + $0x78] sm:$0xff]
        %v943 = vld [vmem:[%s301 + $0x80] sm:$0xff]
        %v944 = vld [vmem:[%s301 + $0x88] sm:$0xff]
        %v945 = vld [vmem:[%s301 + $0x90] sm:$0xff]
        %v946 = vld [vmem:[%s301 + $0x98] sm:$0xff]
        %v947 = vld [vmem:[%s301 + $0xa0] sm:$0xff]
        %v948 = vld [vmem:[%s301 + $0xa8] sm:$0xff]
        %v949 = vld [vmem:[%s301 + $0xb0] sm:$0xff]
        %v950 = vld [vmem:[%s301 + $0xb8] sm:$0xff]
        %v951 = vld [vmem:[%s301 + $0xc0] sm:$0xff]
        %v952 = vld [vmem:[%s301 + $0xc8] sm:$0xff]
        %v953 = vld [vmem:[%s301 + $0xd0] sm:$0xff]
        %v954 = vld [vmem:[%s301 + $0xd8] sm:$0xff]
        %v955 = vld [vmem:[%s301 + $0xe0] sm:$0xff]
        %v956 = vld [vmem:[%s301 + $0xe8] sm:$0xff]
        %v957 = vld [vmem:[%s301 + $0xf0] sm:$0xff]
        %v958 = vld [vmem:[%s301 + $0xf8] sm:$0xff]
        %v959 = vadd.f32 %v927, %v769
        %v960 = vadd.f32 %v928, %v772
        %v961 = vadd.f32 %v929, %v777
        %v962 = vadd.f32 %v930, %v780
        %v963 = vadd.f32 %v931, %v785
        %v964 = vadd.f32 %v932, %v788
        %v965 = vadd.f32 %v933, %v793
        %v966 = vadd.f32 %v934, %v796
        %v967 = vadd.f32 %v935, %v801
        %v968 = vadd.f32 %v936, %v804
        %v969 = vadd.f32 %v937, %v809
        %v970 = vadd.f32 %v938, %v812
        %v971 = vadd.f32 %v939, %v817
        %v972 = vadd.f32 %v940, %v820
        %v973 = vadd.f32 %v941, %v825
        %v974 = vadd.f32 %v942, %v828
        %v975 = vadd.f32 %v943, %v833
        %v976 = vadd.f32 %v944, %v836
        %v977 = vadd.f32 %v945, %v841
        %v978 = vadd.f32 %v946, %v844
        %v979 = vadd.f32 %v947, %v849
        %v980 = vadd.f32 %v948, %v852
        %v981 = vadd.f32 %v949, %v857
        %v982 = vadd.f32 %v950, %v860
        %v983 = vadd.f32 %v951, %v865
        %v984 = vadd.f32 %v952, %v868
        %v985 = vadd.f32 %v953, %v873
        %v986 = vadd.f32 %v954, %v876
        %v987 = vadd.f32 %v955, %v881
        %v988 = vadd.f32 %v956, %v884
        %v989 = vadd.f32 %v957, %v889
        %v990 = vadd.f32 %v958, %v892
        %991 = vst.msk [vmem:[%s289] sm:$0xff] %vm388, %v959
        %992 = vst.msk [vmem:[%s289 + $0x8] sm:$0xff] %vm388, %v960
        %993 = vst.msk [vmem:[%s289 + $0x10] sm:$0xff] %vm388, %v961
        %994 = vst.msk [vmem:[%s289 + $0x18] sm:$0xff] %vm388, %v962
        %995 = vst.msk [vmem:[%s289 + $0x20] sm:$0xff] %vm388, %v963
        %996 = vst.msk [vmem:[%s289 + $0x28] sm:$0xff] %vm388, %v964
        %997 = vst.msk [vmem:[%s289 + $0x30] sm:$0xff] %vm388, %v965
        %998 = vst.msk [vmem:[%s289 + $0x38] sm:$0xff] %vm388, %v966
        %999 = vst.msk [vmem:[%s289 + $0x40] sm:$0xff] %vm388, %v967
        %1000 = vst.msk [vmem:[%s289 + $0x48] sm:$0xff] %vm388, %v968
        %1001 = vst.msk [vmem:[%s289 + $0x50] sm:$0xff] %vm388, %v969
        %1002 = vst.msk [vmem:[%s289 + $0x58] sm:$0xff] %vm388, %v970
        %1003 = vst.msk [vmem:[%s289 + $0x60] sm:$0xff] %vm388, %v971
        %1004 = vst.msk [vmem:[%s289 + $0x68] sm:$0xff] %vm388, %v972
        %1005 = vst.msk [vmem:[%s289 + $0x70] sm:$0xff] %vm388, %v973
        %1006 = vst.msk [vmem:[%s289 + $0x78] sm:$0xff] %vm388, %v974
        %1007 = vst.msk [vmem:[%s289 + $0x80] sm:$0xff] %vm388, %v975
        %1008 = vst.msk [vmem:[%s289 + $0x88] sm:$0xff] %vm388, %v976
        %1009 = vst.msk [vmem:[%s289 + $0x90] sm:$0xff] %vm388, %v977
        %1010 = vst.msk [vmem:[%s289 + $0x98] sm:$0xff] %vm388, %v978
        %1011 = vst.msk [vmem:[%s289 + $0xa0] sm:$0xff] %vm388, %v979
        %1012 = vst.msk [vmem:[%s289 + $0xa8] sm:$0xff] %vm388, %v980
        %1013 = vst.msk [vmem:[%s289 + $0xb0] sm:$0xff] %vm388, %v981
        %1014 = vst.msk [vmem:[%s289 + $0xb8] sm:$0xff] %vm388, %v982
        %1015 = vst.msk [vmem:[%s289 + $0xc0] sm:$0xff] %vm388, %v983
        %1016 = vst.msk [vmem:[%s289 + $0xc8] sm:$0xff] %vm388, %v984
        %1017 = vst.msk [vmem:[%s289 + $0xd0] sm:$0xff] %vm388, %v985
        %1018 = vst.msk [vmem:[%s289 + $0xd8] sm:$0xff] %vm388, %v986
        %1019 = vst.msk [vmem:[%s289 + $0xe0] sm:$0xff] %vm388, %v987
        %1020 = vst.msk [vmem:[%s289 + $0xe8] sm:$0xff] %vm388, %v988
        %1021 = vst.msk [vmem:[%s289 + $0xf0] sm:$0xff] %vm388, %v989
        %1022 = vst.msk [vmem:[%s289 + $0xf8] sm:$0xff] %vm388, %v990
        %s1023 = sand.u32 %s166, 1
        %s1024 = scalar_lea.sflag [#allocation3], %s1023
        %s1025 = sand.u32 %s166, 1
        %s1026 = smul.addr %s1025, 256
        %s1027 = scalar_lea.vmem [#allocation2], %s1026
        %s1028 = smul.u32 32, %s22
        %p1029 = scmp.lt.s32.totalorder %s1028, 63
        %s1030 = scalar_select %p1029, %s1028, 63
        %s1031 = smul.addr %s1030, 8
        %s1032 = scalar_lea.vmem %s7, %s1031
        // Predicated region
        $region45: #{fno_forward.26} parent=43 // pred_check
          %p1033 = pneg %p176
        $region46: #{fno_forward.26} parent=43 // pred_check_branch
          %1035 = sbr.rel (%p1033) target = $region48
        $region47: #{fno_forward.26} parent=43 // pred_region
          %s1036 = smul.u32 32, %s22
          %s1038 = ssub.s32 4096, 4096
          %1039 = vsyncadd %s1024, %s1038
          %s1040 = smul.addr %s1036, 128
          %s1041 = scalar_lea.hbm %s6, %s1040
          %s1042 = sshll.u32 %s1027, 4
          %s1043 = int_to_ptr.vmem [resolvable:$true] %s1042
          %1048 = dma.vmem_to_hbm [thread:$0]  %s1043, 4096, %s1041, %s1024, 128, 128, 8
        $region48: #{fno_forward.26} parent=43 // pred_fallthru
          _
        // Predicated region
        $region49: #{fno_forward.26} parent=43 // pred_check
          %p1049 = pneg %p202
        $region50: #{fno_forward.26} parent=43 // pred_check_branch
          %1051 = sbr.rel (%p1049) target = $region52
        $region51: #{fno_forward.26} parent=43 // pred_region
          %s1052 = smul.u32 32, %s22
        $region52: #{fno_forward.26} parent=43 // pred_fallthru
          _
      $region44: #{fno_forward.26} parent=5 // pred_fallthru
        _
      %p1053 = scmp.le.s32.totalorder 2, %s17
      // Predicated region
      $region53: #{fno_forward.26} parent=5 // pred_check
        %p1054 = pneg %p1053
      $region54: #{fno_forward.26} parent=5 // pred_check_branch
        %1056 = sbr.rel (%p1054) target = $region56
      $region55: #{fno_forward.26} parent=5 // pred_region
        %s1057 = ssub.s32 %s17, 2
        // Predicated region
        $region57: #{fno_forward.26} parent=55 // pred_check
          %p1058 = pneg %p182
        $region58: #{fno_forward.26} parent=55 // pred_check_branch
          %1060 = sbr.rel (%p1058) target = $region60
        $region59: #{fno_forward.26} parent=55 // pred_region
          %s1061 = sand.u32 %s167, 1
          %s1062 = scalar_lea.sflag [#allocation3], %s1061
          %s1063 = sand.u32 %s167, 1
          %s1064 = smul.addr %s1063, 256
          %s1065 = scalar_lea.vmem [#allocation2], %s1064
          %1066 = dma.done %s1062, 4096
        $region60: #{fno_forward.26} parent=55 // pred_fallthru
          _
        // Predicated region
        $region61: #{fno_forward.26} parent=55 // pred_check
          %p1067 = pneg %p208
        $region62: #{fno_forward.26} parent=55 // pred_check_branch
          %1069 = sbr.rel (%p1067) target = $region64
        $region63: #{fno_forward.26} parent=55 // pred_region
          %s1070 = smul.u32 32, %s23
          %p1071 = scmp.lt.s32.totalorder %s1070, 63
          %s1072 = scalar_select %p1071, %s1070, 63
          %s1073 = smul.addr %s1072, 8
          %s1074 = scalar_lea.vmem %s7, %s1073
        $region64: #{fno_forward.26} parent=55 // pred_fallthru
          _
      $region56: #{fno_forward.26} parent=5 // pred_fallthru
        _
    $region6: #{fno_forward.26} parent=1 // loop_footer
      %s21 = sadd.s32 1, %s17
    $region7: #{fno_forward.26} parent=1 // loop_footer_branch
      %16 = sbr.rel target = $region3
    $region8: #{fno_forward.26} parent=1 // loop_exit
      _
    %1075 = vsyncpa [#allocation3], 1
    %s1076 = scalar_lea.sflag [#allocation3], 1
    %1077 = vsyncpa %s1076, 1

</llo_original>
